<compile_context>
chip_gen: v7x
topology: tpu7x:2x2x1
jax: 0.10.0
libtpu: 0.0.40
codegen_flags: <defaults>
</compile_context>

<pallas_src>
import jax
import jax.numpy as jnp
from jax.experimental import pallas as pl
from jax.experimental.pallas import tpu as pltpu


def resblock_kernel(x_ref, w1_ref, b1_ref, w2_ref, b2_ref, o_ref, xpad_s, mid_s):
    # x_ref  : (1, H, W, C)     unpadded NHWC input block (only HBM read of the image)
    # w*_ref : (9*C, C)         conv weights, rows ordered (ky, kx, cin)
    # b*_ref : (1, C)           biases
    # o_ref  : (1, H, W, C)
    # xpad_s : (H+2, W+2, C)    VMEM scratch: zero-bordered staged input
    # mid_s  : (H+2, W+2, C)    VMEM scratch: zero-bordered conv1 activation
    _, H, W, C = x_ref.shape
    f32 = jnp.float32

    # Zero only the 1-pixel border rings; interiors are fully overwritten below,
    # so a full zero-fill would double-write H*W*C elements per buffer per step.
    zrow = jnp.zeros((1, W + 2, C), f32)
    zcol = jnp.zeros((H + 2, 1, C), f32)
    for buf in (xpad_s, mid_s):
        buf[0:1, :, :] = zrow
        buf[H + 1:H + 2, :, :] = zrow
        buf[:, 0:1, :] = zcol
        buf[:, W + 1:W + 2, :] = zcol

    # Stage the input once into the padded scratch (identity branch reuses it).
    xpad_s[1:H + 1, 1:W + 1, :] = x_ref[0].astype(f32)

    def conv3x3(src_pad, w_ref, b_ref):
        # im2col: fold the 9 taps into one wide-K MXU matmul
        #   (H*W, 9*C) @ (9*C, C); column blocks ordered (ky, kx, cin) to match
        #   the wrapper's weight reshape.
        cols = [src_pad[dy:dy + H, dx:dx + W, :].reshape(H * W, C)
                for dy in range(3) for dx in range(3)]
        patches = jnp.concatenate(cols, axis=-1)
        return jnp.dot(patches, w_ref[...],
                       preferred_element_type=f32) + b_ref[...]

    # conv1 + bias + ReLU, written straight into the padded scratch interior.
    h1 = jnp.maximum(conv3x3(xpad_s, w1_ref, b1_ref), 0.0)
    mid_s[1:H + 1, 1:W + 1, :] = h1.reshape(H, W, C)

    # conv2 + bias, fused with the residual add (identity read back from VMEM).
    h2 = conv3x3(mid_s, w2_ref, b2_ref)
    identity = xpad_s[1:H + 1, 1:W + 1, :]
    o_ref[0] = (identity + h2.reshape(H, W, C)).astype(o_ref.dtype)


def residual_block_nobn(x_nchw, w1, b1, w2, b2):
    """x_nchw: (B, C, H, W); w*: (Cout, Cin, 3, 3) (PyTorch layout); b*: (C,)."""
    x = jnp.transpose(x_nchw, (0, 2, 3, 1))                    # NHWC
    B, H, W, C = x.shape

    # (Cout, Cin, 3, 3) -> (ky, kx, Cin, Cout) -> (9*Cin, Cout)
    w1f = jnp.transpose(w1, (2, 3, 1, 0)).reshape(9 * C, C).astype(jnp.float32)
    w2f = jnp.transpose(w2, (2, 3, 1, 0)).reshape(9 * C, C).astype(jnp.float32)
    b1r = b1.reshape(1, C).astype(jnp.float32)
    b2r = b2.reshape(1, C).astype(jnp.float32)

    # Explicit scoped-VMEM budget: double-buffered in/out blocks + weights
    # + the two padded scratch buffers, with 2x headroom (floored at 32 MiB).
    block_bytes = 4 * (2 * 2 * H * W * C
                       + 2 * 2 * (9 * C * C + C)
                       + 2 * (H + 2) * (W + 2) * C)
    vmem_limit = int(min(100 * 2**20, max(32 * 2**20, 2 * block_bytes)))

    out_nhwc = pl.pallas_call(
        resblock_kernel,
        out_shape=jax.ShapeDtypeStruct((B, H, W, C), x.dtype),
        grid_spec=pltpu.PrefetchScalarGridSpec(
            num_scalar_prefetch=0,
            grid=(B,),
            in_specs=[
                pl.BlockSpec((1, H, W, C), lambda b: (b, 0, 0, 0)),
                pl.BlockSpec((9 * C, C), lambda b: (0, 0)),
                pl.BlockSpec((1, C), lambda b: (0, 0)),
                pl.BlockSpec((9 * C, C), lambda b: (0, 0)),
                pl.BlockSpec((1, C), lambda b: (0, 0)),
            ],
            out_specs=pl.BlockSpec((1, H, W, C), lambda b: (b, 0, 0, 0)),
            scratch_shapes=[
                pltpu.VMEM((H + 2, W + 2, C), jnp.float32),
                pltpu.VMEM((H + 2, W + 2, C), jnp.float32),
            ],
        ),
        compiler_params=pltpu.CompilerParams(
            dimension_semantics=("parallel",),
            vmem_limit_bytes=vmem_limit,
        ),
    )(x, w1f, b1r, w2f, b2r)

    return jnp.transpose(out_nhwc, (0, 3, 1, 2))               # back to NCHW


def _reference(x_nchw, w1, b1, w2, b2):
    """Pure-JAX reference (lax conv) mirroring the PyTorch forward."""
    dn = jax.lax.conv_dimension_numbers(x_nchw.shape, w1.shape,
                                        ("NCHW", "OIHW", "NCHW"))
    c1 = jax.lax.conv_general_dilated(x_nchw, w1, (1, 1), ((1, 1), (1, 1)),
                                      dimension_numbers=dn)
    c1 = jax.nn.relu(c1 + b1.reshape(1, -1, 1, 1))
    c2 = jax.lax.conv_general_dilated(c1, w2, (1, 1), ((1, 1), (1, 1)),
                                      dimension_numbers=dn)
    c2 = c2 + b2.reshape(1, -1, 1, 1)
    return x_nchw + c2


def init_params(key, nf):
    """Deterministic kaiming_normal_(fan_in, a=0) * 0.1, zero bias (matches module)."""
    k1, k2 = jax.random.split(key)
    fan_in = nf * 3 * 3
    std = (2.0 / fan_in) ** 0.5
    w1 = jax.random.normal(k1, (nf, nf, 3, 3), jnp.float32) * std * 0.1
    w2 = jax.random.normal(k2, (nf, nf, 3, 3), jnp.float32) * std * 0.1
    b1 = jnp.zeros((nf,), jnp.float32)
    b2 = jnp.zeros((nf,), jnp.float32)
    return w1, b1, w2, b2


if __name__ == "__main__":
    B, nf, H, W = 2, 8, 16, 16
    key = jax.random.PRNGKey(0)
    kx, kp = jax.random.split(key)
    x = jax.random.normal(kx, (B, nf, H, W), jnp.float32)
    w1, b1, w2, b2 = init_params(kp, nf)

    out = jax.block_until_ready(residual_block_nobn(x, w1, b1, w2, b2))

    ref = _reference(x, w1, b1, w2, b2)
    assert out.shape == ref.shape
    assert jnp.allclose(out, ref, atol=1e-4, rtol=1e-4), "mismatch vs reference"
    print("KERNEL_OK")
</pallas_src>

<mosaic_0001>
module attributes {stable_mosaic.version = 11 : i64} {
  func.func @resblock_kernel(%arg0: i32, %arg1: memref<1x16x16x8xf32, #tpu.memory_space<vmem>>, %arg2: memref<72x8xf32, #tpu.memory_space<vmem>>, %arg3: memref<1x8xf32, #tpu.memory_space<vmem>>, %arg4: memref<72x8xf32, #tpu.memory_space<vmem>>, %arg5: memref<1x8xf32, #tpu.memory_space<vmem>>, %arg6: memref<1x16x16x8xf32, #tpu.memory_space<vmem>>, %arg7: memref<18x18x8xf32, #tpu.memory_space<vmem>>, %arg8: memref<18x18x8xf32, #tpu.memory_space<vmem>>) attributes {dimension_semantics = [#tpu.dimension_semantics<parallel>], iteration_bounds = array<i64: 2>, scalar_prefetch = 0 : i64, scratch_operands = 2 : i64, tpu.core_type = #tpu.core_type<tc>, window_params = [{transform_indices = @transform_0, window_bounds = array<i64: 1, 16, 16, 8>}, {pipeline_mode = #tpu.pipeline_mode<synchronous>, transform_indices = @transform_1, window_bounds = array<i64: 72, 8>}, {pipeline_mode = #tpu.pipeline_mode<synchronous>, transform_indices = @transform_2, window_bounds = array<i64: 1, 8>}, {pipeline_mode = #tpu.pipeline_mode<synchronous>, transform_indices = @transform_3, window_bounds = array<i64: 72, 8>}, {pipeline_mode = #tpu.pipeline_mode<synchronous>, transform_indices = @transform_4, window_bounds = array<i64: 1, 8>}, {transform_indices = @transform_5, window_bounds = array<i64: 1, 16, 16, 8>}]} {
    %cst = arith.constant 0.000000e+00 : f32
    %0 = vector.broadcast %cst : f32 to vector<1x18x8xf32>
    %cst_0 = arith.constant 0.000000e+00 : f32
    %1 = vector.broadcast %cst_0 : f32 to vector<18x1x8xf32>
    %c0 = arith.constant 0 : index
    %c0_1 = arith.constant 0 : index
    %c0_2 = arith.constant 0 : index
    %2 = vector.load %arg7[%c0, %c0_1, %c0_2] : memref<18x18x8xf32, #tpu.memory_space<vmem>>, vector<1x18x8xf32>
    tpu.vector_store %arg7[%c0, %c0_1, %c0_2], %0 {strides = array<i32>} : memref<18x18x8xf32, #tpu.memory_space<vmem>>, vector<1x18x8xf32>,
    %c17 = arith.constant 17 : index
    %c0_3 = arith.constant 0 : index
    %c0_4 = arith.constant 0 : index
    %3 = vector.load %arg7[%c17, %c0_3, %c0_4] : memref<18x18x8xf32, #tpu.memory_space<vmem>>, vector<1x18x8xf32>
    tpu.vector_store %arg7[%c17, %c0_3, %c0_4], %0 {strides = array<i32>} : memref<18x18x8xf32, #tpu.memory_space<vmem>>, vector<1x18x8xf32>,
    %c0_5 = arith.constant 0 : index
    %c0_6 = arith.constant 0 : index
    %c0_7 = arith.constant 0 : index
    %4 = vector.load %arg7[%c0_5, %c0_6, %c0_7] : memref<18x18x8xf32, #tpu.memory_space<vmem>>, vector<18x1x8xf32>
    tpu.vector_store %arg7[%c0_5, %c0_6, %c0_7], %1 {strides = array<i32>} : memref<18x18x8xf32, #tpu.memory_space<vmem>>, vector<18x1x8xf32>,
    %c0_8 = arith.constant 0 : index
    %c17_9 = arith.constant 17 : index
    %c0_10 = arith.constant 0 : index
    %5 = vector.load %arg7[%c0_8, %c17_9, %c0_10] : memref<18x18x8xf32, #tpu.memory_space<vmem>>, vector<18x1x8xf32>
    tpu.vector_store %arg7[%c0_8, %c17_9, %c0_10], %1 {strides = array<i32>} : memref<18x18x8xf32, #tpu.memory_space<vmem>>, vector<18x1x8xf32>,
    %c0_11 = arith.constant 0 : index
    %c0_12 = arith.constant 0 : index
    %c0_13 = arith.constant 0 : index
    %6 = vector.load %arg8[%c0_11, %c0_12, %c0_13] : memref<18x18x8xf32, #tpu.memory_space<vmem>>, vector<1x18x8xf32>
    tpu.vector_store %arg8[%c0_11, %c0_12, %c0_13], %0 {strides = array<i32>} : memref<18x18x8xf32, #tpu.memory_space<vmem>>, vector<1x18x8xf32>,
    %c17_14 = arith.constant 17 : index
    %c0_15 = arith.constant 0 : index
    %c0_16 = arith.constant 0 : index
    %7 = vector.load %arg8[%c17_14, %c0_15, %c0_16] : memref<18x18x8xf32, #tpu.memory_space<vmem>>, vector<1x18x8xf32>
    tpu.vector_store %arg8[%c17_14, %c0_15, %c0_16], %0 {strides = array<i32>} : memref<18x18x8xf32, #tpu.memory_space<vmem>>, vector<1x18x8xf32>,
    %c0_17 = arith.constant 0 : index
    %c0_18 = arith.constant 0 : index
    %c0_19 = arith.constant 0 : index
    %8 = vector.load %arg8[%c0_17, %c0_18, %c0_19] : memref<18x18x8xf32, #tpu.memory_space<vmem>>, vector<18x1x8xf32>
    tpu.vector_store %arg8[%c0_17, %c0_18, %c0_19], %1 {strides = array<i32>} : memref<18x18x8xf32, #tpu.memory_space<vmem>>, vector<18x1x8xf32>,
    %c0_20 = arith.constant 0 : index
    %c17_21 = arith.constant 17 : index
    %c0_22 = arith.constant 0 : index
    %9 = vector.load %arg8[%c0_20, %c17_21, %c0_22] : memref<18x18x8xf32, #tpu.memory_space<vmem>>, vector<18x1x8xf32>
    tpu.vector_store %arg8[%c0_20, %c17_21, %c0_22], %1 {strides = array<i32>} : memref<18x18x8xf32, #tpu.memory_space<vmem>>, vector<18x1x8xf32>,
    %c0_23 = arith.constant 0 : index
    %c0_24 = arith.constant 0 : index
    %c0_25 = arith.constant 0 : index
    %c0_26 = arith.constant 0 : index
    %10 = vector.load %arg1[%c0_23, %c0_24, %c0_25, %c0_26] : memref<1x16x16x8xf32, #tpu.memory_space<vmem>>, vector<1x16x16x8xf32>
    %11 = vector.shape_cast %10 : vector<1x16x16x8xf32> to vector<16x16x8xf32>
    %c1 = arith.constant 1 : index
    %c1_27 = arith.constant 1 : index
    %c0_28 = arith.constant 0 : index
    %12 = vector.load %arg7[%c1, %c1_27, %c0_28] : memref<18x18x8xf32, #tpu.memory_space<vmem>>, vector<16x16x8xf32>
    tpu.vector_store %arg7[%c1, %c1_27, %c0_28], %11 {strides = array<i32>} : memref<18x18x8xf32, #tpu.memory_space<vmem>>, vector<16x16x8xf32>,
    %c0_29 = arith.constant 0 : index
    %c0_30 = arith.constant 0 : index
    %c0_31 = arith.constant 0 : index
    %13 = vector.load %arg7[%c0_29, %c0_30, %c0_31] : memref<18x18x8xf32, #tpu.memory_space<vmem>>, vector<16x16x8xf32>
    %14 = vector.shape_cast %13 : vector<16x16x8xf32> to vector<256x8xf32>
    %c0_32 = arith.constant 0 : index
    %c1_33 = arith.constant 1 : index
    %c0_34 = arith.constant 0 : index
    %15 = vector.load %arg7[%c0_32, %c1_33, %c0_34] : memref<18x18x8xf32, #tpu.memory_space<vmem>>, vector<16x16x8xf32>
    %16 = vector.shape_cast %15 : vector<16x16x8xf32> to vector<256x8xf32>
    %c0_35 = arith.constant 0 : index
    %c2 = arith.constant 2 : index
    %c0_36 = arith.constant 0 : index
    %17 = vector.load %arg7[%c0_35, %c2, %c0_36] : memref<18x18x8xf32, #tpu.memory_space<vmem>>, vector<16x16x8xf32>
    %18 = vector.shape_cast %17 : vector<16x16x8xf32> to vector<256x8xf32>
    %c1_37 = arith.constant 1 : index
    %c0_38 = arith.constant 0 : index
    %c0_39 = arith.constant 0 : index
    %19 = vector.load %arg7[%c1_37, %c0_38, %c0_39] : memref<18x18x8xf32, #tpu.memory_space<vmem>>, vector<16x16x8xf32>
    %20 = vector.shape_cast %19 : vector<16x16x8xf32> to vector<256x8xf32>
    %c1_40 = arith.constant 1 : index
    %c1_41 = arith.constant 1 : index
    %c0_42 = arith.constant 0 : index
    %21 = vector.load %arg7[%c1_40, %c1_41, %c0_42] : memref<18x18x8xf32, #tpu.memory_space<vmem>>, vector<16x16x8xf32>
    %22 = vector.shape_cast %21 : vector<16x16x8xf32> to vector<256x8xf32>
    %c1_43 = arith.constant 1 : index
    %c2_44 = arith.constant 2 : index
    %c0_45 = arith.constant 0 : index
    %23 = vector.load %arg7[%c1_43, %c2_44, %c0_45] : memref<18x18x8xf32, #tpu.memory_space<vmem>>, vector<16x16x8xf32>
    %24 = vector.shape_cast %23 : vector<16x16x8xf32> to vector<256x8xf32>
    %c2_46 = arith.constant 2 : index
    %c0_47 = arith.constant 0 : index
    %c0_48 = arith.constant 0 : index
    %25 = vector.load %arg7[%c2_46, %c0_47, %c0_48] : memref<18x18x8xf32, #tpu.memory_space<vmem>>, vector<16x16x8xf32>
    %26 = vector.shape_cast %25 : vector<16x16x8xf32> to vector<256x8xf32>
    %c2_49 = arith.constant 2 : index
    %c1_50 = arith.constant 1 : index
    %c0_51 = arith.constant 0 : index
    %27 = vector.load %arg7[%c2_49, %c1_50, %c0_51] : memref<18x18x8xf32, #tpu.memory_space<vmem>>, vector<16x16x8xf32>
    %28 = vector.shape_cast %27 : vector<16x16x8xf32> to vector<256x8xf32>
    %c2_52 = arith.constant 2 : index
    %c2_53 = arith.constant 2 : index
    %c0_54 = arith.constant 0 : index
    %29 = vector.load %arg7[%c2_52, %c2_53, %c0_54] : memref<18x18x8xf32, #tpu.memory_space<vmem>>, vector<16x16x8xf32>
    %30 = vector.shape_cast %29 : vector<16x16x8xf32> to vector<256x8xf32>
    %31 = tpu.concatenate %14, %16, %18, %20, %22, %24, %26, %28, %30 in 1 : vector<256x8xf32>, vector<256x8xf32>, vector<256x8xf32>, vector<256x8xf32>, vector<256x8xf32>, vector<256x8xf32>, vector<256x8xf32>, vector<256x8xf32>, vector<256x8xf32> -> vector<256x72xf32>
    %c0_55 = arith.constant 0 : index
    %c0_56 = arith.constant 0 : index
    %32 = vector.load %arg2[%c0_55, %c0_56] : memref<72x8xf32, #tpu.memory_space<vmem>>, vector<72x8xf32>
    %cst_57 = arith.constant dense<0.000000e+00> : vector<256x8xf32>
    %33 = tpu.matmul %31, %32, %cst_57 {dimension_numbers = #tpu.dot_dimension_numbers<[1], [0], [0], [1], [0, 0, 1, 1], [], []>} : vector<256x72xf32>, vector<72x8xf32>, vector<256x8xf32> -> vector<256x8xf32>
    %c0_58 = arith.constant 0 : index
    %c0_59 = arith.constant 0 : index
    %34 = vector.load %arg3[%c0_58, %c0_59] : memref<1x8xf32, #tpu.memory_space<vmem>>, vector<1x8xf32>
    %35 = vector.broadcast %34 : vector<1x8xf32> to vector<256x8xf32>
    %36 = arith.addf %33, %35 : vector<256x8xf32>
    %cst_60 = arith.constant 0.000000e+00 : f32
    %37 = vector.broadcast %cst_60 : f32 to vector<256x8xf32>
    %38 = arith.maximumf %36, %37 : vector<256x8xf32>
    %39 = vector.shape_cast %38 : vector<256x8xf32> to vector<16x16x8xf32>
    %c1_61 = arith.constant 1 : index
    %c1_62 = arith.constant 1 : index
    %c0_63 = arith.constant 0 : index
    %40 = vector.load %arg8[%c1_61, %c1_62, %c0_63] : memref<18x18x8xf32, #tpu.memory_space<vmem>>, vector<16x16x8xf32>
    tpu.vector_store %arg8[%c1_61, %c1_62, %c0_63], %39 {strides = array<i32>} : memref<18x18x8xf32, #tpu.memory_space<vmem>>, vector<16x16x8xf32>,
    %c0_64 = arith.constant 0 : index
    %c0_65 = arith.constant 0 : index
    %c0_66 = arith.constant 0 : index
    %41 = vector.load %arg8[%c0_64, %c0_65, %c0_66] : memref<18x18x8xf32, #tpu.memory_space<vmem>>, vector<16x16x8xf32>
    %42 = vector.shape_cast %41 : vector<16x16x8xf32> to vector<256x8xf32>
    %c0_67 = arith.constant 0 : index
    %c1_68 = arith.constant 1 : index
    %c0_69 = arith.constant 0 : index
    %43 = vector.load %arg8[%c0_67, %c1_68, %c0_69] : memref<18x18x8xf32, #tpu.memory_space<vmem>>, vector<16x16x8xf32>
    %44 = vector.shape_cast %43 : vector<16x16x8xf32> to vector<256x8xf32>
    %c0_70 = arith.constant 0 : index
    %c2_71 = arith.constant 2 : index
    %c0_72 = arith.constant 0 : index
    %45 = vector.load %arg8[%c0_70, %c2_71, %c0_72] : memref<18x18x8xf32, #tpu.memory_space<vmem>>, vector<16x16x8xf32>
    %46 = vector.shape_cast %45 : vector<16x16x8xf32> to vector<256x8xf32>
    %c1_73 = arith.constant 1 : index
    %c0_74 = arith.constant 0 : index
    %c0_75 = arith.constant 0 : index
    %47 = vector.load %arg8[%c1_73, %c0_74, %c0_75] : memref<18x18x8xf32, #tpu.memory_space<vmem>>, vector<16x16x8xf32>
    %48 = vector.shape_cast %47 : vector<16x16x8xf32> to vector<256x8xf32>
    %c1_76 = arith.constant 1 : index
    %c1_77 = arith.constant 1 : index
    %c0_78 = arith.constant 0 : index
    %49 = vector.load %arg8[%c1_76, %c1_77, %c0_78] : memref<18x18x8xf32, #tpu.memory_space<vmem>>, vector<16x16x8xf32>
    %50 = vector.shape_cast %49 : vector<16x16x8xf32> to vector<256x8xf32>
    %c1_79 = arith.constant 1 : index
    %c2_80 = arith.constant 2 : index
    %c0_81 = arith.constant 0 : index
    %51 = vector.load %arg8[%c1_79, %c2_80, %c0_81] : memref<18x18x8xf32, #tpu.memory_space<vmem>>, vector<16x16x8xf32>
    %52 = vector.shape_cast %51 : vector<16x16x8xf32> to vector<256x8xf32>
    %c2_82 = arith.constant 2 : index
    %c0_83 = arith.constant 0 : index
    %c0_84 = arith.constant 0 : index
    %53 = vector.load %arg8[%c2_82, %c0_83, %c0_84] : memref<18x18x8xf32, #tpu.memory_space<vmem>>, vector<16x16x8xf32>
    %54 = vector.shape_cast %53 : vector<16x16x8xf32> to vector<256x8xf32>
    %c2_85 = arith.constant 2 : index
    %c1_86 = arith.constant 1 : index
    %c0_87 = arith.constant 0 : index
    %55 = vector.load %arg8[%c2_85, %c1_86, %c0_87] : memref<18x18x8xf32, #tpu.memory_space<vmem>>, vector<16x16x8xf32>
    %56 = vector.shape_cast %55 : vector<16x16x8xf32> to vector<256x8xf32>
    %c2_88 = arith.constant 2 : index
    %c2_89 = arith.constant 2 : index
    %c0_90 = arith.constant 0 : index
    %57 = vector.load %arg8[%c2_88, %c2_89, %c0_90] : memref<18x18x8xf32, #tpu.memory_space<vmem>>, vector<16x16x8xf32>
    %58 = vector.shape_cast %57 : vector<16x16x8xf32> to vector<256x8xf32>
    %59 = tpu.concatenate %42, %44, %46, %48, %50, %52, %54, %56, %58 in 1 : vector<256x8xf32>, vector<256x8xf32>, vector<256x8xf32>, vector<256x8xf32>, vector<256x8xf32>, vector<256x8xf32>, vector<256x8xf32>, vector<256x8xf32>, vector<256x8xf32> -> vector<256x72xf32>
    %c0_91 = arith.constant 0 : index
    %c0_92 = arith.constant 0 : index
    %60 = vector.load %arg4[%c0_91, %c0_92] : memref<72x8xf32, #tpu.memory_space<vmem>>, vector<72x8xf32>
    %cst_93 = arith.constant dense<0.000000e+00> : vector<256x8xf32>
    %61 = tpu.matmul %59, %60, %cst_93 {dimension_numbers = #tpu.dot_dimension_numbers<[1], [0], [0], [1], [0, 0, 1, 1], [], []>} : vector<256x72xf32>, vector<72x8xf32>, vector<256x8xf32> -> vector<256x8xf32>
    %c0_94 = arith.constant 0 : index
    %c0_95 = arith.constant 0 : index
    %62 = vector.load %arg5[%c0_94, %c0_95] : memref<1x8xf32, #tpu.memory_space<vmem>>, vector<1x8xf32>
    %63 = vector.broadcast %62 : vector<1x8xf32> to vector<256x8xf32>
    %64 = arith.addf %61, %63 : vector<256x8xf32>
    %c1_96 = arith.constant 1 : index
    %c1_97 = arith.constant 1 : index
    %c0_98 = arith.constant 0 : index
    %65 = vector.load %arg7[%c1_96, %c1_97, %c0_98] : memref<18x18x8xf32, #tpu.memory_space<vmem>>, vector<16x16x8xf32>
    %66 = vector.shape_cast %64 : vector<256x8xf32> to vector<16x16x8xf32>
    %67 = arith.addf %65, %66 : vector<16x16x8xf32>
    %c0_99 = arith.constant 0 : index
    %c0_100 = arith.constant 0 : index
    %c0_101 = arith.constant 0 : index
    %c0_102 = arith.constant 0 : index
    %68 = vector.load %arg6[%c0_99, %c0_100, %c0_101, %c0_102] : memref<1x16x16x8xf32, #tpu.memory_space<vmem>>, vector<1x16x16x8xf32>
    %69 = vector.shape_cast %68 : vector<1x16x16x8xf32> to vector<16x16x8xf32>
    %70 = vector.shape_cast %67 : vector<16x16x8xf32> to vector<1x16x16x8xf32>
    tpu.vector_store %arg6[%c0_99, %c0_100, %c0_101, %c0_102], %70 {strides = array<i32>} : memref<1x16x16x8xf32, #tpu.memory_space<vmem>>, vector<1x16x16x8xf32>,
    return
  }
  func.func @transform_0(%arg0: i32) -> (i32, i32, i32, i32) {
    %c0_i32 = arith.constant 0 : i32
    %c0_i32_0 = arith.constant 0 : i32
    %c0_i32_1 = arith.constant 0 : i32
    %c0_i32_2 = arith.constant 0 : i32
    return %arg0, %c0_i32, %c0_i32_0, %c0_i32_1 : i32, i32, i32, i32
  }
  func.func @transform_1(%arg0: i32) -> (i32, i32) {
    %c0_i32 = arith.constant 0 : i32
    %c0_i32_0 = arith.constant 0 : i32
    %c0_i32_1 = arith.constant 0 : i32
    return %c0_i32, %c0_i32_0 : i32, i32
  }
  func.func @transform_2(%arg0: i32) -> (i32, i32) {
    %c0_i32 = arith.constant 0 : i32
    %c0_i32_0 = arith.constant 0 : i32
    %c0_i32_1 = arith.constant 0 : i32
    return %c0_i32, %c0_i32_0 : i32, i32
  }
  func.func @transform_3(%arg0: i32) -> (i32, i32) {
    %c0_i32 = arith.constant 0 : i32
    %c0_i32_0 = arith.constant 0 : i32
    %c0_i32_1 = arith.constant 0 : i32
    return %c0_i32, %c0_i32_0 : i32, i32
  }
  func.func @transform_4(%arg0: i32) -> (i32, i32) {
    %c0_i32 = arith.constant 0 : i32
    %c0_i32_0 = arith.constant 0 : i32
    %c0_i32_1 = arith.constant 0 : i32
    return %c0_i32, %c0_i32_0 : i32, i32
  }
  func.func @transform_5(%arg0: i32) -> (i32, i32, i32, i32) {
    %c0_i32 = arith.constant 0 : i32
    %c0_i32_0 = arith.constant 0 : i32
    %c0_i32_1 = arith.constant 0 : i32
    %c0_i32_2 = arith.constant 0 : i32
    return %arg0, %c0_i32, %c0_i32_0, %c0_i32_1 : i32, i32, i32, i32
  }
}

</mosaic_0001>

<llo_original>
// kernel: tpu_custom_call.1
$region0: #{tpu_custom_call.1}
  #allocation0 [shape = 'u32[]', space=smem, size = 0x4, offset = 0x4, fixed_abs, tag = 'smem constant byte address 0x4 - core index']
  #allocation1 [shape = 'u32[144,128]{1,0:T(1,128)}', space=vmem, size = 0x12000, scoped, tag = 'internal scratch']
  #allocation2 [shape = 'f32[18,18,8]{2,1,0:T(8,128)}', space=vmem, size = 0x36000, scoped, tag = 'scratch operand']
  #allocation3 [shape = 'f32[18,18,8]{2,1,0:T(8,128)}', space=vmem, size = 0x36000, scoped, tag = 'scratch operand']
  %s0 = inlined_call_operand.vmem [shape: f32[2,16,16,8], index: 0, kind: input, shape index: {}]
  %s1 = inlined_call_operand.vmem [shape: f32[72,8], index: 1, kind: input, shape index: {}]
  %s2 = inlined_call_operand.vmem [shape: f32[1,8], index: 2, kind: input, shape index: {}]
  %s3 = inlined_call_operand.vmem [shape: f32[72,8], index: 3, kind: input, shape index: {}]
  %s4 = inlined_call_operand.vmem [shape: f32[1,8], index: 4, kind: input, shape index: {}]
  %s5 = inlined_call_operand.vmem [shape: f32[2,16,16,8], index: 5, kind: output, shape index: {}]
  %s6 = sld [smem:[#allocation0]]
  $region53: #{tpu_custom_call.1} parent=0
    _
  %s8 = ssub.s32 1, %s6
  %s9 = scalar_select 0, %s8, %s6
  loop: start=0, step=1, limit=4
  $region2: #{tpu_custom_call.1} parent=0 // loop_pre_header
    _
  $region3: #{tpu_custom_call.1} parent=0 // loop_header
    %s11 = sphi 0, %s15
    %p12 = scmp.ge.s32.totalorder %s11, 4
    %s21 = sphi 0, %s23
    %s24 = sphi 0, %s21
    %s25 = sphi 0, %s24
    %s41 = sphi 0, %s25
    %s45 = sphi 0, %s45
    %s47 = sphi 0, %s45
    %s48 = sphi 0, %s47
    %s62 = sphi 0, %s48
    %s66 = sphi 0, %s66
    %s68 = sphi 0, %s66
    %s69 = sphi 0, %s68
    %s83 = sphi 0, %s69
    %s87 = sphi 0, %s87
    %s89 = sphi 0, %s87
    %s90 = sphi 0, %s89
    %s104 = sphi 0, %s90
    %s108 = sphi 0, %s108
    %s110 = sphi 0, %s108
    %s111 = sphi 0, %s110
    %s125 = sphi 0, %s111
    %s131 = sphi 0, %s133
    %s134 = sphi 0, %s131
    %s135 = sphi 0, %s134
    %s151 = sphi 0, %s135
  $region4: #{tpu_custom_call.1} parent=0 // loop_header_branch
    %14 = sbr.rel (%p12) target = $region8
  $region5: #{tpu_custom_call.1} parent=0 // loop_body
    %s16 = ssub.s32 %s11, 1
    %s17 = ssub.s32 %s11, 2
    %s18 = sadd.s32 %s11, 1
    %s19 = ssub.s32 %s11, %s18
    %p20 = scmp.eq.s32.totalorder %s19, 0
    %s22 = sadd.s32 %s21, 1
    %s23 = scalar_select %p20, %s21, %s22
    %p26 = pneg %p20
    %p27 = scmp.eq.s32.totalorder %s11, 1
    %p28 = por %p26, %p27
    %p29 = scmp.ne.s32.totalorder %s21, %s24
    %p30 = scmp.eq.s32.totalorder %s11, 0
    %p31 = por %p29, %p30
    %p32 = scmp.ne.s32.totalorder %s21, %s24
    %p33 = scmp.eq.s32.totalorder %s16, 1
    %p34 = por %p32, %p33
    %p35 = scmp.ne.s32.totalorder %s24, %s25
    %p36 = scmp.eq.s32.totalorder %s16, 0
    %p37 = por %p35, %p36
    %p38 = scmp.ne.s32.totalorder %s24, %s25
    %p39 = scmp.eq.s32.totalorder %s17, 1
    %p40 = por %p38, %p39
    %p42 = scmp.ne.s32.totalorder %s25, %s41
    %p43 = scmp.eq.s32.totalorder %s17, 0
    %p44 = por %p42, %p43
    %s46 = sadd.s32 %s45, 1
    %p49 = scmp.eq.s32.totalorder %s11, 1
    %p50 = scmp.ne.s32.totalorder %s45, %s47
    %p51 = scmp.eq.s32.totalorder %s11, 0
    %p52 = por %p50, %p51
    %p53 = scmp.ne.s32.totalorder %s45, %s47
    %p54 = scmp.eq.s32.totalorder %s16, 1
    %p55 = por %p53, %p54
    %p56 = scmp.ne.s32.totalorder %s47, %s48
    %p57 = scmp.eq.s32.totalorder %s16, 0
    %p58 = por %p56, %p57
    %p59 = scmp.ne.s32.totalorder %s47, %s48
    %p60 = scmp.eq.s32.totalorder %s17, 1
    %p61 = por %p59, %p60
    %p63 = scmp.ne.s32.totalorder %s48, %s62
    %p64 = scmp.eq.s32.totalorder %s17, 0
    %p65 = por %p63, %p64
    %s67 = sadd.s32 %s66, 1
    %p70 = scmp.eq.s32.totalorder %s11, 1
    %p71 = scmp.ne.s32.totalorder %s66, %s68
    %p72 = scmp.eq.s32.totalorder %s11, 0
    %p73 = por %p71, %p72
    %p74 = scmp.ne.s32.totalorder %s66, %s68
    %p75 = scmp.eq.s32.totalorder %s16, 1
    %p76 = por %p74, %p75
    %p77 = scmp.ne.s32.totalorder %s68, %s69
    %p78 = scmp.eq.s32.totalorder %s16, 0
    %p79 = por %p77, %p78
    %p80 = scmp.ne.s32.totalorder %s68, %s69
    %p81 = scmp.eq.s32.totalorder %s17, 1
    %p82 = por %p80, %p81
    %p84 = scmp.ne.s32.totalorder %s69, %s83
    %p85 = scmp.eq.s32.totalorder %s17, 0
    %p86 = por %p84, %p85
    %s88 = sadd.s32 %s87, 1
    %p91 = scmp.eq.s32.totalorder %s11, 1
    %p92 = scmp.ne.s32.totalorder %s87, %s89
    %p93 = scmp.eq.s32.totalorder %s11, 0
    %p94 = por %p92, %p93
    %p95 = scmp.ne.s32.totalorder %s87, %s89
    %p96 = scmp.eq.s32.totalorder %s16, 1
    %p97 = por %p95, %p96
    %p98 = scmp.ne.s32.totalorder %s89, %s90
    %p99 = scmp.eq.s32.totalorder %s16, 0
    %p100 = por %p98, %p99
    %p101 = scmp.ne.s32.totalorder %s89, %s90
    %p102 = scmp.eq.s32.totalorder %s17, 1
    %p103 = por %p101, %p102
    %p105 = scmp.ne.s32.totalorder %s90, %s104
    %p106 = scmp.eq.s32.totalorder %s17, 0
    %p107 = por %p105, %p106
    %s109 = sadd.s32 %s108, 1
    %p112 = scmp.eq.s32.totalorder %s11, 1
    %p113 = scmp.ne.s32.totalorder %s108, %s110
    %p114 = scmp.eq.s32.totalorder %s11, 0
    %p115 = por %p113, %p114
    %p116 = scmp.ne.s32.totalorder %s108, %s110
    %p117 = scmp.eq.s32.totalorder %s16, 1
    %p118 = por %p116, %p117
    %p119 = scmp.ne.s32.totalorder %s110, %s111
    %p120 = scmp.eq.s32.totalorder %s16, 0
    %p121 = por %p119, %p120
    %p122 = scmp.ne.s32.totalorder %s110, %s111
    %p123 = scmp.eq.s32.totalorder %s17, 1
    %p124 = por %p122, %p123
    %p126 = scmp.ne.s32.totalorder %s111, %s125
    %p127 = scmp.eq.s32.totalorder %s17, 0
    %p128 = por %p126, %p127
    %s129 = ssub.s32 %s11, %s18
    %p130 = scmp.eq.s32.totalorder %s129, 0
    %s132 = sadd.s32 %s131, 1
    %s133 = scalar_select %p130, %s131, %s132
    %p136 = pneg %p130
    %p137 = scmp.eq.s32.totalorder %s11, 1
    %p138 = por %p136, %p137
    %p139 = scmp.ne.s32.totalorder %s131, %s134
    %p140 = scmp.eq.s32.totalorder %s11, 0
    %p141 = por %p139, %p140
    %p142 = scmp.ne.s32.totalorder %s131, %s134
    %p143 = scmp.eq.s32.totalorder %s16, 1
    %p144 = por %p142, %p143
    %p145 = scmp.ne.s32.totalorder %s134, %s135
    %p146 = scmp.eq.s32.totalorder %s16, 0
    %p147 = por %p145, %p146
    %p148 = scmp.ne.s32.totalorder %s134, %s135
    %p149 = scmp.eq.s32.totalorder %s17, 1
    %p150 = por %p148, %p149
    %p152 = scmp.ne.s32.totalorder %s135, %s151
    %p153 = scmp.eq.s32.totalorder %s17, 0
    %p154 = por %p152, %p153
    %p155 = scmp.le.s32.totalorder 1, %s11
    %p156 = scmp.lt.s32.totalorder %s11, 3
    %p157 = pnand %p155, %p156
    %p158 = pneg %p157
    // Predicated region
    $region9: #{tpu_custom_call.1} parent=5 // pred_check
      _
    $region10: #{tpu_custom_call.1} parent=5 // pred_check_branch
      %160 = sbr.rel (%p157) target = $region12
    $region11: #{tpu_custom_call.1} parent=5 // pred_region
      %s161 = ssub.s32 %s11, 1
      // Predicated region
      $region13: #{tpu_custom_call.1} parent=11 // pred_check
        %p162 = pneg %p58
      $region14: #{tpu_custom_call.1} parent=11 // pred_check_branch
        %164 = sbr.rel (%p162) target = $region16
      $region15: #{tpu_custom_call.1} parent=11 // pred_region
        _
      $region16: #{tpu_custom_call.1} parent=11 // pred_fallthru
        _
      // Predicated region
      $region17: #{tpu_custom_call.1} parent=11 // pred_check
        %p165 = pneg %p79
      $region18: #{tpu_custom_call.1} parent=11 // pred_check_branch
        %167 = sbr.rel (%p165) target = $region20
      $region19: #{tpu_custom_call.1} parent=11 // pred_region
        _
      $region20: #{tpu_custom_call.1} parent=11 // pred_fallthru
        _
      // Predicated region
      $region21: #{tpu_custom_call.1} parent=11 // pred_check
        %p168 = pneg %p100
      $region22: #{tpu_custom_call.1} parent=11 // pred_check_branch
        %170 = sbr.rel (%p168) target = $region24
      $region23: #{tpu_custom_call.1} parent=11 // pred_region
        _
      $region24: #{tpu_custom_call.1} parent=11 // pred_fallthru
        _
      // Predicated region
      $region25: #{tpu_custom_call.1} parent=11 // pred_check
        %p171 = pneg %p121
      $region26: #{tpu_custom_call.1} parent=11 // pred_check_branch
        %173 = sbr.rel (%p171) target = $region28
      $region27: #{tpu_custom_call.1} parent=11 // pred_region
        _
      $region28: #{tpu_custom_call.1} parent=11 // pred_fallthru
        _
    $region12: #{tpu_custom_call.1} parent=5 // pred_fallthru
      _
    %p174 = scmp.lt.s32.totalorder %s11, 2
    // Predicated region
    $region29: #{tpu_custom_call.1} parent=5 // pred_check
      %p175 = pneg %p174
    $region30: #{tpu_custom_call.1} parent=5 // pred_check_branch
      %177 = sbr.rel (%p175) target = $region32
    $region31: #{tpu_custom_call.1} parent=5 // pred_region
      // Predicated region
      $region33: #{tpu_custom_call.1} parent=31 // pred_check
        %p178 = pneg %p31
      $region34: #{tpu_custom_call.1} parent=31 // pred_check_branch
        %180 = sbr.rel (%p178) target = $region36
      $region35: #{tpu_custom_call.1} parent=31 // pred_region
        %p181 = scmp.lt.s32.totalorder %s11, 1
        %s182 = scalar_select %p181, %s11, 1
        %s183 = smul.addr %s182, 32
        %s184 = smul.addr %s183, 8
        %s185 = scalar_lea.vmem %s0, %s184
      $region36: #{tpu_custom_call.1} parent=31 // pred_fallthru
        _
    $region32: #{tpu_custom_call.1} parent=5 // pred_fallthru
      _
    %p186 = scmp.le.s32.totalorder 1, %s11
    %p187 = scmp.lt.s32.totalorder %s11, 3
    %p188 = pnand %p186, %p187
    %p189 = pneg %p188
    // Predicated region
    $region37: #{tpu_custom_call.1} parent=5 // pred_check
      _
    $region38: #{tpu_custom_call.1} parent=5 // pred_check_branch
      %191 = sbr.rel (%p188) target = $region40
    $region39: #{tpu_custom_call.1} parent=5 // pred_region
      %s192 = ssub.s32 %s11, 1
      %p193 = scmp.lt.s32.totalorder %s16, 1
      %s194 = scalar_select %p193, %s16, 1
      %s195 = smul.addr %s194, 32
      %s196 = smul.addr %s195, 8
      %s197 = scalar_lea.vmem %s0, %s196
      %p198 = pneg %p37
      %p199 = pneg %p34
      %p200 = pneg %p58
      %p201 = pneg %p55
      %p202 = pneg %p79
      %p203 = pneg %p76
      %p204 = pneg %p100
      %p205 = pneg %p97
      %p206 = pneg %p121
      %p207 = pneg %p118
      %p208 = pneg %p147
      %p209 = pneg %p144
      %p210 = scmp.lt.s32.totalorder %s16, 1
      %s211 = scalar_select %p210, %s16, 1
      %s212 = smul.addr %s211, 32
      %s213 = smul.addr %s212, 8
      %s214 = scalar_lea.vmem %s5, %s213
      %p215 = scmp.lt.s32.totalorder %s16, 1
      %s216 = scalar_select %p215, %s16, 1
      %s217 = smul.addr %s216, 32
      %s218 = smul.addr %s217, 8
      %s219 = scalar_lea.vmem %s0, %s218
      %p220 = scmp.lt.s32.totalorder %s16, 1
      %s221 = scalar_select %p220, %s16, 1
      %s222 = smul.addr %s221, 32
      %s223 = smul.addr %s222, 8
      %s224 = scalar_lea.vmem %s5, %s223
      %vm225 = vcmask 64512
      %226 = vst.msk [vmem:[#allocation2] sm:$0xff] %vm225, 0.0
      %227 = vst.msk [vmem:[#allocation2 + $0x8] sm:$0xff] %vm225, 0.0
      %vm228 = vcmask 58368
      %229 = vst.msk [vmem:[#allocation2 + $0x10] sm:$0x3] %vm228, 0.0
      %s230 = scalar_lea.vmem [#allocation2], 408
      %231 = vst.msk [vmem:[%s230] sm:$0xff] %vm225, 0.0
      %232 = vst.msk [vmem:[%s230 + $0x8] sm:$0xff] %vm225, 0.0
      %233 = vst.msk [vmem:[%s230 + $0x10] sm:$0x3] %vm228, 0.0
      %vm234 = vcmask 57344
      %235 = vst.msk [vmem:[#allocation2] sm:$0x1] %vm234, 0.0
      %236 = vst.msk [vmem:[#allocation2 + $0x18] sm:$0x1] %vm234, 0.0
      %237 = vst.msk [vmem:[#allocation2 + $0x30] sm:$0x1] %vm234, 0.0
      %238 = vst.msk [vmem:[#allocation2 + $0x48] sm:$0x1] %vm234, 0.0
      %239 = vst.msk [vmem:[#allocation2 + $0x60] sm:$0x1] %vm234, 0.0
      %240 = vst.msk [vmem:[#allocation2 + $0x78] sm:$0x1] %vm234, 0.0
      %241 = vst.msk [vmem:[#allocation2 + $0x90] sm:$0x1] %vm234, 0.0
      %242 = vst.msk [vmem:[#allocation2 + $0xa8] sm:$0x1] %vm234, 0.0
      %243 = vst.msk [vmem:[#allocation2 + $0xc0] sm:$0x1] %vm234, 0.0
      %244 = vst.msk [vmem:[#allocation2 + $0xd8] sm:$0x1] %vm234, 0.0
      %245 = vst.msk [vmem:[#allocation2 + $0xf0] sm:$0x1] %vm234, 0.0
      %246 = vst.msk [vmem:[#allocation2 + $0x108] sm:$0x1] %vm234, 0.0
      %247 = vst.msk [vmem:[#allocation2 + $0x120] sm:$0x1] %vm234, 0.0
      %248 = vst.msk [vmem:[#allocation2 + $0x138] sm:$0x1] %vm234, 0.0
      %249 = vst.msk [vmem:[#allocation2 + $0x150] sm:$0x1] %vm234, 0.0
      %250 = vst.msk [vmem:[#allocation2 + $0x168] sm:$0x1] %vm234, 0.0
      %251 = vst.msk [vmem:[#allocation2 + $0x180] sm:$0x1] %vm234, 0.0
      %252 = vst.msk [vmem:[#allocation2 + $0x198] sm:$0x1] %vm234, 0.0
      %253 = vst.msk [vmem:[#allocation2 + $0x11] sm:$0x1] %vm234, 0.0
      %254 = vst.msk [vmem:[#allocation2 + $0x29] sm:$0x1] %vm234, 0.0
      %255 = vst.msk [vmem:[#allocation2 + $0x41] sm:$0x1] %vm234, 0.0
      %256 = vst.msk [vmem:[#allocation2 + $0x59] sm:$0x1] %vm234, 0.0
      %257 = vst.msk [vmem:[#allocation2 + $0x71] sm:$0x1] %vm234, 0.0
      %258 = vst.msk [vmem:[#allocation2 + $0x89] sm:$0x1] %vm234, 0.0
      %259 = vst.msk [vmem:[#allocation2 + $0xa1] sm:$0x1] %vm234, 0.0
      %260 = vst.msk [vmem:[#allocation2 + $0xb9] sm:$0x1] %vm234, 0.0
      %261 = vst.msk [vmem:[#allocation2 + $0xd1] sm:$0x1] %vm234, 0.0
      %262 = vst.msk [vmem:[#allocation2 + $0xe9] sm:$0x1] %vm234, 0.0
      %263 = vst.msk [vmem:[#allocation2 + $0x101] sm:$0x1] %vm234, 0.0
      %264 = vst.msk [vmem:[#allocation2 + $0x119] sm:$0x1] %vm234, 0.0
      %265 = vst.msk [vmem:[#allocation2 + $0x131] sm:$0x1] %vm234, 0.0
      %266 = vst.msk [vmem:[#allocation2 + $0x149] sm:$0x1] %vm234, 0.0
      %267 = vst.msk [vmem:[#allocation2 + $0x161] sm:$0x1] %vm234, 0.0
      %268 = vst.msk [vmem:[#allocation2 + $0x179] sm:$0x1] %vm234, 0.0
      %269 = vst.msk [vmem:[#allocation2 + $0x191] sm:$0x1] %vm234, 0.0
      %270 = vst.msk [vmem:[#allocation2 + $0x1a9] sm:$0x1] %vm234, 0.0
      %271 = vst.msk [vmem:[#allocation3] sm:$0xff] %vm225, 0.0
      %272 = vst.msk [vmem:[#allocation3 + $0x8] sm:$0xff] %vm225, 0.0
      %273 = vst.msk [vmem:[#allocation3 + $0x10] sm:$0x3] %vm228, 0.0
      %s274 = scalar_lea.vmem [#allocation3], 408
      %275 = vst.msk [vmem:[%s274] sm:$0xff] %vm225, 0.0
      %276 = vst.msk [vmem:[%s274 + $0x8] sm:$0xff] %vm225, 0.0
      %277 = vst.msk [vmem:[%s274 + $0x10] sm:$0x3] %vm228, 0.0
      %278 = vst.msk [vmem:[#allocation3] sm:$0x1] %vm234, 0.0
      %279 = vst.msk [vmem:[#allocation3 + $0x18] sm:$0x1] %vm234, 0.0
      %280 = vst.msk [vmem:[#allocation3 + $0x30] sm:$0x1] %vm234, 0.0
      %281 = vst.msk [vmem:[#allocation3 + $0x48] sm:$0x1] %vm234, 0.0
      %282 = vst.msk [vmem:[#allocation3 + $0x60] sm:$0x1] %vm234, 0.0
      %283 = vst.msk [vmem:[#allocation3 + $0x78] sm:$0x1] %vm234, 0.0
      %284 = vst.msk [vmem:[#allocation3 + $0x90] sm:$0x1] %vm234, 0.0
      %285 = vst.msk [vmem:[#allocation3 + $0xa8] sm:$0x1] %vm234, 0.0
      %286 = vst.msk [vmem:[#allocation3 + $0xc0] sm:$0x1] %vm234, 0.0
      %287 = vst.msk [vmem:[#allocation3 + $0xd8] sm:$0x1] %vm234, 0.0
      %288 = vst.msk [vmem:[#allocation3 + $0xf0] sm:$0x1] %vm234, 0.0
      %289 = vst.msk [vmem:[#allocation3 + $0x108] sm:$0x1] %vm234, 0.0
      %290 = vst.msk [vmem:[#allocation3 + $0x120] sm:$0x1] %vm234, 0.0
      %291 = vst.msk [vmem:[#allocation3 + $0x138] sm:$0x1] %vm234, 0.0
      %292 = vst.msk [vmem:[#allocation3 + $0x150] sm:$0x1] %vm234, 0.0
      %293 = vst.msk [vmem:[#allocation3 + $0x168] sm:$0x1] %vm234, 0.0
      %294 = vst.msk [vmem:[#allocation3 + $0x180] sm:$0x1] %vm234, 0.0
      %295 = vst.msk [vmem:[#allocation3 + $0x198] sm:$0x1] %vm234, 0.0
      %296 = vst.msk [vmem:[#allocation3 + $0x11] sm:$0x1] %vm234, 0.0
      %297 = vst.msk [vmem:[#allocation3 + $0x29] sm:$0x1] %vm234, 0.0
      %298 = vst.msk [vmem:[#allocation3 + $0x41] sm:$0x1] %vm234, 0.0
      %299 = vst.msk [vmem:[#allocation3 + $0x59] sm:$0x1] %vm234, 0.0
      %300 = vst.msk [vmem:[#allocation3 + $0x71] sm:$0x1] %vm234, 0.0
      %301 = vst.msk [vmem:[#allocation3 + $0x89] sm:$0x1] %vm234, 0.0
      %302 = vst.msk [vmem:[#allocation3 + $0xa1] sm:$0x1] %vm234, 0.0
      %303 = vst.msk [vmem:[#allocation3 + $0xb9] sm:$0x1] %vm234, 0.0
      %304 = vst.msk [vmem:[#allocation3 + $0xd1] sm:$0x1] %vm234, 0.0
      %305 = vst.msk [vmem:[#allocation3 + $0xe9] sm:$0x1] %vm234, 0.0
      %306 = vst.msk [vmem:[#allocation3 + $0x101] sm:$0x1] %vm234, 0.0
      %307 = vst.msk [vmem:[#allocation3 + $0x119] sm:$0x1] %vm234, 0.0
      %308 = vst.msk [vmem:[#allocation3 + $0x131] sm:$0x1] %vm234, 0.0
      %309 = vst.msk [vmem:[#allocation3 + $0x149] sm:$0x1] %vm234, 0.0
      %310 = vst.msk [vmem:[#allocation3 + $0x161] sm:$0x1] %vm234, 0.0
      %311 = vst.msk [vmem:[#allocation3 + $0x179] sm:$0x1] %vm234, 0.0
      %312 = vst.msk [vmem:[#allocation3 + $0x191] sm:$0x1] %vm234, 0.0
      %313 = vst.msk [vmem:[#allocation3 + $0x1a9] sm:$0x1] %vm234, 0.0
      %v314 = vld [vmem:[%s219] sm:$0xff]
      %v315 = vld [vmem:[%s219 + $0x8] sm:$0xff]
      %v316 = vld [vmem:[%s219 + $0x10] sm:$0xff]
      %v317 = vld [vmem:[%s219 + $0x18] sm:$0xff]
      %v318 = vld [vmem:[%s219 + $0x20] sm:$0xff]
      %v319 = vld [vmem:[%s219 + $0x28] sm:$0xff]
      %v320 = vld [vmem:[%s219 + $0x30] sm:$0xff]
      %v321 = vld [vmem:[%s219 + $0x38] sm:$0xff]
      %v322 = vld [vmem:[%s219 + $0x40] sm:$0xff]
      %v323 = vld [vmem:[%s219 + $0x48] sm:$0xff]
      %v324 = vld [vmem:[%s219 + $0x50] sm:$0xff]
      %v325 = vld [vmem:[%s219 + $0x58] sm:$0xff]
      %v326 = vld [vmem:[%s219 + $0x60] sm:$0xff]
      %v327 = vld [vmem:[%s219 + $0x68] sm:$0xff]
      %v328 = vld [vmem:[%s219 + $0x70] sm:$0xff]
      %v329 = vld [vmem:[%s219 + $0x78] sm:$0xff]
      %v330 = vld [vmem:[%s219 + $0x80] sm:$0xff]
      %v331 = vld [vmem:[%s219 + $0x88] sm:$0xff]
      %v332 = vld [vmem:[%s219 + $0x90] sm:$0xff]
      %v333 = vld [vmem:[%s219 + $0x98] sm:$0xff]
      %v334 = vld [vmem:[%s219 + $0xa0] sm:$0xff]
      %v335 = vld [vmem:[%s219 + $0xa8] sm:$0xff]
      %v336 = vld [vmem:[%s219 + $0xb0] sm:$0xff]
      %v337 = vld [vmem:[%s219 + $0xb8] sm:$0xff]
      %v338 = vld [vmem:[%s219 + $0xc0] sm:$0xff]
      %v339 = vld [vmem:[%s219 + $0xc8] sm:$0xff]
      %v340 = vld [vmem:[%s219 + $0xd0] sm:$0xff]
      %v341 = vld [vmem:[%s219 + $0xd8] sm:$0xff]
      %v342 = vld [vmem:[%s219 + $0xe0] sm:$0xff]
      %v343 = vld [vmem:[%s219 + $0xe8] sm:$0xff]
      %v344 = vld [vmem:[%s219 + $0xf0] sm:$0xff]
      %v345 = vld [vmem:[%s219 + $0xf8] sm:$0xff]
      %s346 = scalar_lea.vmem [#allocation2], 24
      %347 = vst.msk [vmem:[%s346 + $0x1] sm:$0xff] %vm225, %v314
      %348 = vst.msk [vmem:[%s346 + $0x9] sm:$0xff] %vm225, %v315
      %349 = vst.msk [vmem:[%s346 + $0x19] sm:$0xff] %vm225, %v316
      %350 = vst.msk [vmem:[%s346 + $0x21] sm:$0xff] %vm225, %v317
      %351 = vst.msk [vmem:[%s346 + $0x31] sm:$0xff] %vm225, %v318
      %352 = vst.msk [vmem:[%s346 + $0x39] sm:$0xff] %vm225, %v319
      %353 = vst.msk [vmem:[%s346 + $0x49] sm:$0xff] %vm225, %v320
      %354 = vst.msk [vmem:[%s346 + $0x51] sm:$0xff] %vm225, %v321
      %355 = vst.msk [vmem:[%s346 + $0x61] sm:$0xff] %vm225, %v322
      %356 = vst.msk [vmem:[%s346 + $0x69] sm:$0xff] %vm225, %v323
      %357 = vst.msk [vmem:[%s346 + $0x79] sm:$0xff] %vm225, %v324
      %358 = vst.msk [vmem:[%s346 + $0x81] sm:$0xff] %vm225, %v325
      %359 = vst.msk [vmem:[%s346 + $0x91] sm:$0xff] %vm225, %v326
      %360 = vst.msk [vmem:[%s346 + $0x99] sm:$0xff] %vm225, %v327
      %361 = vst.msk [vmem:[%s346 + $0xa9] sm:$0xff] %vm225, %v328
      %362 = vst.msk [vmem:[%s346 + $0xb1] sm:$0xff] %vm225, %v329
      %363 = vst.msk [vmem:[%s346 + $0xc1] sm:$0xff] %vm225, %v330
      %364 = vst.msk [vmem:[%s346 + $0xc9] sm:$0xff] %vm225, %v331
      %365 = vst.msk [vmem:[%s346 + $0xd9] sm:$0xff] %vm225, %v332
      %366 = vst.msk [vmem:[%s346 + $0xe1] sm:$0xff] %vm225, %v333
      %367 = vst.msk [vmem:[%s346 + $0xf1] sm:$0xff] %vm225, %v334
      %368 = vst.msk [vmem:[%s346 + $0xf9] sm:$0xff] %vm225, %v335
      %369 = vst.msk [vmem:[%s346 + $0x109] sm:$0xff] %vm225, %v336
      %370 = vst.msk [vmem:[%s346 + $0x111] sm:$0xff] %vm225, %v337
      %371 = vst.msk [vmem:[%s346 + $0x121] sm:$0xff] %vm225, %v338
      %372 = vst.msk [vmem:[%s346 + $0x129] sm:$0xff] %vm225, %v339
      %373 = vst.msk [vmem:[%s346 + $0x139] sm:$0xff] %vm225, %v340
      %374 = vst.msk [vmem:[%s346 + $0x141] sm:$0xff] %vm225, %v341
      %375 = vst.msk [vmem:[%s346 + $0x151] sm:$0xff] %vm225, %v342
      %376 = vst.msk [vmem:[%s346 + $0x159] sm:$0xff] %vm225, %v343
      %377 = vst.msk [vmem:[%s346 + $0x169] sm:$0xff] %vm225, %v344
      %378 = vst.msk [vmem:[%s346 + $0x171] sm:$0xff] %vm225, %v345
      %v379 = vld [vmem:[#allocation2] sm:$0xff]
      %v380 = vld [vmem:[#allocation2 + $0x8] sm:$0xff]
      %v381 = vld [vmem:[#allocation2 + $0x18] sm:$0xff]
      %v382 = vld [vmem:[#allocation2 + $0x20] sm:$0xff]
      %v383 = vld [vmem:[#allocation2 + $0x30] sm:$0xff]
      %v384 = vld [vmem:[#allocation2 + $0x38] sm:$0xff]
      %v385 = vld [vmem:[#allocation2 + $0x48] sm:$0xff]
      %v386 = vld [vmem:[#allocation2 + $0x50] sm:$0xff]
      %v387 = vld [vmem:[#allocation2 + $0x60] sm:$0xff]
      %v388 = vld [vmem:[#allocation2 + $0x68] sm:$0xff]
      %v389 = vld [vmem:[#allocation2 + $0x78] sm:$0xff]
      %v390 = vld [vmem:[#allocation2 + $0x80] sm:$0xff]
      %v391 = vld [vmem:[#allocation2 + $0x90] sm:$0xff]
      %v392 = vld [vmem:[#allocation2 + $0x98] sm:$0xff]
      %v393 = vld [vmem:[#allocation2 + $0xa8] sm:$0xff]
      %v394 = vld [vmem:[#allocation2 + $0xb0] sm:$0xff]
      %v395 = vld [vmem:[#allocation2 + $0xc0] sm:$0xff]
      %v396 = vld [vmem:[#allocation2 + $0xc8] sm:$0xff]
      %v397 = vld [vmem:[#allocation2 + $0xd8] sm:$0xff]
      %v398 = vld [vmem:[#allocation2 + $0xe0] sm:$0xff]
      %v399 = vld [vmem:[#allocation2 + $0xf0] sm:$0xff]
      %v400 = vld [vmem:[#allocation2 + $0xf8] sm:$0xff]
      %v401 = vld [vmem:[#allocation2 + $0x108] sm:$0xff]
      %v402 = vld [vmem:[#allocation2 + $0x110] sm:$0xff]
      %v403 = vld [vmem:[#allocation2 + $0x120] sm:$0xff]
      %v404 = vld [vmem:[#allocation2 + $0x128] sm:$0xff]
      %v405 = vld [vmem:[#allocation2 + $0x138] sm:$0xff]
      %v406 = vld [vmem:[#allocation2 + $0x140] sm:$0xff]
      %v407 = vld [vmem:[#allocation2 + $0x150] sm:$0xff]
      %v408 = vld [vmem:[#allocation2 + $0x158] sm:$0xff]
      %v409 = vld [vmem:[#allocation2 + $0x168] sm:$0xff]
      %v410 = vld [vmem:[#allocation2 + $0x170] sm:$0xff]
      %v411 = vld [vmem:[#allocation2 + $0x1] sm:$0xff]
      %v412 = vld [vmem:[#allocation2 + $0x9] sm:$0xff]
      %v413 = vld [vmem:[#allocation2 + $0x19] sm:$0xff]
      %v414 = vld [vmem:[#allocation2 + $0x21] sm:$0xff]
      %v415 = vld [vmem:[#allocation2 + $0x31] sm:$0xff]
      %v416 = vld [vmem:[#allocation2 + $0x39] sm:$0xff]
      %v417 = vld [vmem:[#allocation2 + $0x49] sm:$0xff]
      %v418 = vld [vmem:[#allocation2 + $0x51] sm:$0xff]
      %v419 = vld [vmem:[#allocation2 + $0x61] sm:$0xff]
      %v420 = vld [vmem:[#allocation2 + $0x69] sm:$0xff]
      %v421 = vld [vmem:[#allocation2 + $0x79] sm:$0xff]
      %v422 = vld [vmem:[#allocation2 + $0x81] sm:$0xff]
      %v423 = vld [vmem:[#allocation2 + $0x91] sm:$0xff]
      %v424 = vld [vmem:[#allocation2 + $0x99] sm:$0xff]
      %v425 = vld [vmem:[#allocation2 + $0xa9] sm:$0xff]
      %v426 = vld [vmem:[#allocation2 + $0xb1] sm:$0xff]
      %v427 = vld [vmem:[#allocation2 + $0xc1] sm:$0xff]
      %v428 = vld [vmem:[#allocation2 + $0xc9] sm:$0xff]
      %v429 = vld [vmem:[#allocation2 + $0xd9] sm:$0xff]
      %v430 = vld [vmem:[#allocation2 + $0xe1] sm:$0xff]
      %v431 = vld [vmem:[#allocation2 + $0xf1] sm:$0xff]
      %v432 = vld [vmem:[#allocation2 + $0xf9] sm:$0xff]
      %v433 = vld [vmem:[#allocation2 + $0x109] sm:$0xff]
      %v434 = vld [vmem:[#allocation2 + $0x111] sm:$0xff]
      %v435 = vld [vmem:[#allocation2 + $0x121] sm:$0xff]
      %v436 = vld [vmem:[#allocation2 + $0x129] sm:$0xff]
      %v437 = vld [vmem:[#allocation2 + $0x139] sm:$0xff]
      %v438 = vld [vmem:[#allocation2 + $0x141] sm:$0xff]
      %v439 = vld [vmem:[#allocation2 + $0x151] sm:$0xff]
      %v440 = vld [vmem:[#allocation2 + $0x159] sm:$0xff]
      %v441 = vld [vmem:[#allocation2 + $0x169] sm:$0xff]
      %v442 = vld [vmem:[#allocation2 + $0x171] sm:$0xff]
      %v443 = vld [vmem:[#allocation2 + $0x2] sm:$0xff]
      %v444 = vld [vmem:[#allocation2 + $0xa] sm:$0xff]
      %v445 = vld [vmem:[#allocation2 + $0x1a] sm:$0xff]
      %v446 = vld [vmem:[#allocation2 + $0x22] sm:$0xff]
      %v447 = vld [vmem:[#allocation2 + $0x32] sm:$0xff]
      %v448 = vld [vmem:[#allocation2 + $0x3a] sm:$0xff]
      %v449 = vld [vmem:[#allocation2 + $0x4a] sm:$0xff]
      %v450 = vld [vmem:[#allocation2 + $0x52] sm:$0xff]
      %v451 = vld [vmem:[#allocation2 + $0x62] sm:$0xff]
      %v452 = vld [vmem:[#allocation2 + $0x6a] sm:$0xff]
      %v453 = vld [vmem:[#allocation2 + $0x7a] sm:$0xff]
      %v454 = vld [vmem:[#allocation2 + $0x82] sm:$0xff]
      %v455 = vld [vmem:[#allocation2 + $0x92] sm:$0xff]
      %v456 = vld [vmem:[#allocation2 + $0x9a] sm:$0xff]
      %v457 = vld [vmem:[#allocation2 + $0xaa] sm:$0xff]
      %v458 = vld [vmem:[#allocation2 + $0xb2] sm:$0xff]
      %v459 = vld [vmem:[#allocation2 + $0xc2] sm:$0xff]
      %v460 = vld [vmem:[#allocation2 + $0xca] sm:$0xff]
      %v461 = vld [vmem:[#allocation2 + $0xda] sm:$0xff]
      %v462 = vld [vmem:[#allocation2 + $0xe2] sm:$0xff]
      %v463 = vld [vmem:[#allocation2 + $0xf2] sm:$0xff]
      %v464 = vld [vmem:[#allocation2 + $0xfa] sm:$0xff]
      %v465 = vld [vmem:[#allocation2 + $0x10a] sm:$0xff]
      %v466 = vld [vmem:[#allocation2 + $0x112] sm:$0xff]
      %v467 = vld [vmem:[#allocation2 + $0x122] sm:$0xff]
      %v468 = vld [vmem:[#allocation2 + $0x12a] sm:$0xff]
      %v469 = vld [vmem:[#allocation2 + $0x13a] sm:$0xff]
      %v470 = vld [vmem:[#allocation2 + $0x142] sm:$0xff]
      %v471 = vld [vmem:[#allocation2 + $0x152] sm:$0xff]
      %v472 = vld [vmem:[#allocation2 + $0x15a] sm:$0xff]
      %v473 = vld [vmem:[#allocation2 + $0x16a] sm:$0xff]
      %v474 = vld [vmem:[#allocation2 + $0x172] sm:$0xff]
      %v475 = vld [vmem:[%s346] sm:$0xff]
      %v476 = vld [vmem:[%s346 + $0x8] sm:$0xff]
      %v477 = vld [vmem:[%s346 + $0x18] sm:$0xff]
      %v478 = vld [vmem:[%s346 + $0x20] sm:$0xff]
      %v479 = vld [vmem:[%s346 + $0x30] sm:$0xff]
      %v480 = vld [vmem:[%s346 + $0x38] sm:$0xff]
      %v481 = vld [vmem:[%s346 + $0x48] sm:$0xff]
      %v482 = vld [vmem:[%s346 + $0x50] sm:$0xff]
      %v483 = vld [vmem:[%s346 + $0x60] sm:$0xff]
      %v484 = vld [vmem:[%s346 + $0x68] sm:$0xff]
      %v485 = vld [vmem:[%s346 + $0x78] sm:$0xff]
      %v486 = vld [vmem:[%s346 + $0x80] sm:$0xff]
      %v487 = vld [vmem:[%s346 + $0x90] sm:$0xff]
      %v488 = vld [vmem:[%s346 + $0x98] sm:$0xff]
      %v489 = vld [vmem:[%s346 + $0xa8] sm:$0xff]
      %v490 = vld [vmem:[%s346 + $0xb0] sm:$0xff]
      %v491 = vld [vmem:[%s346 + $0xc0] sm:$0xff]
      %v492 = vld [vmem:[%s346 + $0xc8] sm:$0xff]
      %v493 = vld [vmem:[%s346 + $0xd8] sm:$0xff]
      %v494 = vld [vmem:[%s346 + $0xe0] sm:$0xff]
      %v495 = vld [vmem:[%s346 + $0xf0] sm:$0xff]
      %v496 = vld [vmem:[%s346 + $0xf8] sm:$0xff]
      %v497 = vld [vmem:[%s346 + $0x108] sm:$0xff]
      %v498 = vld [vmem:[%s346 + $0x110] sm:$0xff]
      %v499 = vld [vmem:[%s346 + $0x120] sm:$0xff]
      %v500 = vld [vmem:[%s346 + $0x128] sm:$0xff]
      %v501 = vld [vmem:[%s346 + $0x138] sm:$0xff]
      %v502 = vld [vmem:[%s346 + $0x140] sm:$0xff]
      %v503 = vld [vmem:[%s346 + $0x150] sm:$0xff]
      %v504 = vld [vmem:[%s346 + $0x158] sm:$0xff]
      %v505 = vld [vmem:[%s346 + $0x168] sm:$0xff]
      %v506 = vld [vmem:[%s346 + $0x170] sm:$0xff]
      %v507 = vld [vmem:[%s346 + $0x1] sm:$0xff]
      %v508 = vld [vmem:[%s346 + $0x9] sm:$0xff]
      %v509 = vld [vmem:[%s346 + $0x19] sm:$0xff]
      %v510 = vld [vmem:[%s346 + $0x21] sm:$0xff]
      %v511 = vld [vmem:[%s346 + $0x31] sm:$0xff]
      %v512 = vld [vmem:[%s346 + $0x39] sm:$0xff]
      %v513 = vld [vmem:[%s346 + $0x49] sm:$0xff]
      %v514 = vld [vmem:[%s346 + $0x51] sm:$0xff]
      %v515 = vld [vmem:[%s346 + $0x61] sm:$0xff]
      %v516 = vld [vmem:[%s346 + $0x69] sm:$0xff]
      %v517 = vld [vmem:[%s346 + $0x79] sm:$0xff]
      %v518 = vld [vmem:[%s346 + $0x81] sm:$0xff]
      %v519 = vld [vmem:[%s346 + $0x91] sm:$0xff]
      %v520 = vld [vmem:[%s346 + $0x99] sm:$0xff]
      %v521 = vld [vmem:[%s346 + $0xa9] sm:$0xff]
      %v522 = vld [vmem:[%s346 + $0xb1] sm:$0xff]
      %v523 = vld [vmem:[%s346 + $0xc1] sm:$0xff]
      %v524 = vld [vmem:[%s346 + $0xc9] sm:$0xff]
      %v525 = vld [vmem:[%s346 + $0xd9] sm:$0xff]
      %v526 = vld [vmem:[%s346 + $0xe1] sm:$0xff]
      %v527 = vld [vmem:[%s346 + $0xf1] sm:$0xff]
      %v528 = vld [vmem:[%s346 + $0xf9] sm:$0xff]
      %v529 = vld [vmem:[%s346 + $0x109] sm:$0xff]
      %v530 = vld [vmem:[%s346 + $0x111] sm:$0xff]
      %v531 = vld [vmem:[%s346 + $0x121] sm:$0xff]
      %v532 = vld [vmem:[%s346 + $0x129] sm:$0xff]
      %v533 = vld [vmem:[%s346 + $0x139] sm:$0xff]
      %v534 = vld [vmem:[%s346 + $0x141] sm:$0xff]
      %v535 = vld [vmem:[%s346 + $0x151] sm:$0xff]
      %v536 = vld [vmem:[%s346 + $0x159] sm:$0xff]
      %v537 = vld [vmem:[%s346 + $0x169] sm:$0xff]
      %v538 = vld [vmem:[%s346 + $0x171] sm:$0xff]
      %v539 = vld [vmem:[%s346 + $0x2] sm:$0xff]
      %v540 = vld [vmem:[%s346 + $0xa] sm:$0xff]
      %v541 = vld [vmem:[%s346 + $0x1a] sm:$0xff]
      %v542 = vld [vmem:[%s346 + $0x22] sm:$0xff]
      %v543 = vld [vmem:[%s346 + $0x32] sm:$0xff]
      %v544 = vld [vmem:[%s346 + $0x3a] sm:$0xff]
      %v545 = vld [vmem:[%s346 + $0x4a] sm:$0xff]
      %v546 = vld [vmem:[%s346 + $0x52] sm:$0xff]
      %v547 = vld [vmem:[%s346 + $0x62] sm:$0xff]
      %v548 = vld [vmem:[%s346 + $0x6a] sm:$0xff]
      %v549 = vld [vmem:[%s346 + $0x7a] sm:$0xff]
      %v550 = vld [vmem:[%s346 + $0x82] sm:$0xff]
      %v551 = vld [vmem:[%s346 + $0x92] sm:$0xff]
      %v552 = vld [vmem:[%s346 + $0x9a] sm:$0xff]
      %v553 = vld [vmem:[%s346 + $0xaa] sm:$0xff]
      %v554 = vld [vmem:[%s346 + $0xb2] sm:$0xff]
      %v555 = vld [vmem:[%s346 + $0xc2] sm:$0xff]
      %v556 = vld [vmem:[%s346 + $0xca] sm:$0xff]
      %v557 = vld [vmem:[%s346 + $0xda] sm:$0xff]
      %v558 = vld [vmem:[%s346 + $0xe2] sm:$0xff]
      %v559 = vld [vmem:[%s346 + $0xf2] sm:$0xff]
      %v560 = vld [vmem:[%s346 + $0xfa] sm:$0xff]
      %v561 = vld [vmem:[%s346 + $0x10a] sm:$0xff]
      %v562 = vld [vmem:[%s346 + $0x112] sm:$0xff]
      %v563 = vld [vmem:[%s346 + $0x122] sm:$0xff]
      %v564 = vld [vmem:[%s346 + $0x12a] sm:$0xff]
      %v565 = vld [vmem:[%s346 + $0x13a] sm:$0xff]
      %v566 = vld [vmem:[%s346 + $0x142] sm:$0xff]
      %v567 = vld [vmem:[%s346 + $0x152] sm:$0xff]
      %v568 = vld [vmem:[%s346 + $0x15a] sm:$0xff]
      %v569 = vld [vmem:[%s346 + $0x16a] sm:$0xff]
      %v570 = vld [vmem:[%s346 + $0x172] sm:$0xff]
      %s571 = scalar_lea.vmem [#allocation2], 48
      %v572 = vld [vmem:[%s571] sm:$0xff]
      %v573 = vld [vmem:[%s571 + $0x8] sm:$0xff]
      %v574 = vld [vmem:[%s571 + $0x18] sm:$0xff]
      %v575 = vld [vmem:[%s571 + $0x20] sm:$0xff]
      %v576 = vld [vmem:[%s571 + $0x30] sm:$0xff]
      %v577 = vld [vmem:[%s571 + $0x38] sm:$0xff]
      %v578 = vld [vmem:[%s571 + $0x48] sm:$0xff]
      %v579 = vld [vmem:[%s571 + $0x50] sm:$0xff]
      %v580 = vld [vmem:[%s571 + $0x60] sm:$0xff]
      %v581 = vld [vmem:[%s571 + $0x68] sm:$0xff]
      %v582 = vld [vmem:[%s571 + $0x78] sm:$0xff]
      %v583 = vld [vmem:[%s571 + $0x80] sm:$0xff]
      %v584 = vld [vmem:[%s571 + $0x90] sm:$0xff]
      %v585 = vld [vmem:[%s571 + $0x98] sm:$0xff]
      %v586 = vld [vmem:[%s571 + $0xa8] sm:$0xff]
      %v587 = vld [vmem:[%s571 + $0xb0] sm:$0xff]
      %v588 = vld [vmem:[%s571 + $0xc0] sm:$0xff]
      %v589 = vld [vmem:[%s571 + $0xc8] sm:$0xff]
      %v590 = vld [vmem:[%s571 + $0xd8] sm:$0xff]
      %v591 = vld [vmem:[%s571 + $0xe0] sm:$0xff]
      %v592 = vld [vmem:[%s571 + $0xf0] sm:$0xff]
      %v593 = vld [vmem:[%s571 + $0xf8] sm:$0xff]
      %v594 = vld [vmem:[%s571 + $0x108] sm:$0xff]
      %v595 = vld [vmem:[%s571 + $0x110] sm:$0xff]
      %v596 = vld [vmem:[%s571 + $0x120] sm:$0xff]
      %v597 = vld [vmem:[%s571 + $0x128] sm:$0xff]
      %v598 = vld [vmem:[%s571 + $0x138] sm:$0xff]
      %v599 = vld [vmem:[%s571 + $0x140] sm:$0xff]
      %v600 = vld [vmem:[%s571 + $0x150] sm:$0xff]
      %v601 = vld [vmem:[%s571 + $0x158] sm:$0xff]
      %v602 = vld [vmem:[%s571 + $0x168] sm:$0xff]
      %v603 = vld [vmem:[%s571 + $0x170] sm:$0xff]
      %v604 = vld [vmem:[%s571 + $0x1] sm:$0xff]
      %v605 = vld [vmem:[%s571 + $0x9] sm:$0xff]
      %v606 = vld [vmem:[%s571 + $0x19] sm:$0xff]
      %v607 = vld [vmem:[%s571 + $0x21] sm:$0xff]
      %v608 = vld [vmem:[%s571 + $0x31] sm:$0xff]
      %v609 = vld [vmem:[%s571 + $0x39] sm:$0xff]
      %v610 = vld [vmem:[%s571 + $0x49] sm:$0xff]
      %v611 = vld [vmem:[%s571 + $0x51] sm:$0xff]
      %v612 = vld [vmem:[%s571 + $0x61] sm:$0xff]
      %v613 = vld [vmem:[%s571 + $0x69] sm:$0xff]
      %v614 = vld [vmem:[%s571 + $0x79] sm:$0xff]
      %v615 = vld [vmem:[%s571 + $0x81] sm:$0xff]
      %v616 = vld [vmem:[%s571 + $0x91] sm:$0xff]
      %v617 = vld [vmem:[%s571 + $0x99] sm:$0xff]
      %v618 = vld [vmem:[%s571 + $0xa9] sm:$0xff]
      %v619 = vld [vmem:[%s571 + $0xb1] sm:$0xff]
      %v620 = vld [vmem:[%s571 + $0xc1] sm:$0xff]
      %v621 = vld [vmem:[%s571 + $0xc9] sm:$0xff]
      %v622 = vld [vmem:[%s571 + $0xd9] sm:$0xff]
      %v623 = vld [vmem:[%s571 + $0xe1] sm:$0xff]
      %v624 = vld [vmem:[%s571 + $0xf1] sm:$0xff]
      %v625 = vld [vmem:[%s571 + $0xf9] sm:$0xff]
      %v626 = vld [vmem:[%s571 + $0x109] sm:$0xff]
      %v627 = vld [vmem:[%s571 + $0x111] sm:$0xff]
      %v628 = vld [vmem:[%s571 + $0x121] sm:$0xff]
      %v629 = vld [vmem:[%s571 + $0x129] sm:$0xff]
      %v630 = vld [vmem:[%s571 + $0x139] sm:$0xff]
      %v631 = vld [vmem:[%s571 + $0x141] sm:$0xff]
      %v632 = vld [vmem:[%s571 + $0x151] sm:$0xff]
      %v633 = vld [vmem:[%s571 + $0x159] sm:$0xff]
      %v634 = vld [vmem:[%s571 + $0x169] sm:$0xff]
      %v635 = vld [vmem:[%s571 + $0x171] sm:$0xff]
      %v636 = vld [vmem:[%s571 + $0x2] sm:$0xff]
      %v637 = vld [vmem:[%s571 + $0xa] sm:$0xff]
      %v638 = vld [vmem:[%s571 + $0x1a] sm:$0xff]
      %v639 = vld [vmem:[%s571 + $0x22] sm:$0xff]
      %v640 = vld [vmem:[%s571 + $0x32] sm:$0xff]
      %v641 = vld [vmem:[%s571 + $0x3a] sm:$0xff]
      %v642 = vld [vmem:[%s571 + $0x4a] sm:$0xff]
      %v643 = vld [vmem:[%s571 + $0x52] sm:$0xff]
      %v644 = vld [vmem:[%s571 + $0x62] sm:$0xff]
      %v645 = vld [vmem:[%s571 + $0x6a] sm:$0xff]
      %v646 = vld [vmem:[%s571 + $0x7a] sm:$0xff]
      %v647 = vld [vmem:[%s571 + $0x82] sm:$0xff]
      %v648 = vld [vmem:[%s571 + $0x92] sm:$0xff]
      %v649 = vld [vmem:[%s571 + $0x9a] sm:$0xff]
      %v650 = vld [vmem:[%s571 + $0xaa] sm:$0xff]
      %v651 = vld [vmem:[%s571 + $0xb2] sm:$0xff]
      %v652 = vld [vmem:[%s571 + $0xc2] sm:$0xff]
      %v653 = vld [vmem:[%s571 + $0xca] sm:$0xff]
      %v654 = vld [vmem:[%s571 + $0xda] sm:$0xff]
      %v655 = vld [vmem:[%s571 + $0xe2] sm:$0xff]
      %v656 = vld [vmem:[%s571 + $0xf2] sm:$0xff]
      %v657 = vld [vmem:[%s571 + $0xfa] sm:$0xff]
      %v658 = vld [vmem:[%s571 + $0x10a] sm:$0xff]
      %v659 = vld [vmem:[%s571 + $0x112] sm:$0xff]
      %v660 = vld [vmem:[%s571 + $0x122] sm:$0xff]
      %v661 = vld [vmem:[%s571 + $0x12a] sm:$0xff]
      %v662 = vld [vmem:[%s571 + $0x13a] sm:$0xff]
      %v663 = vld [vmem:[%s571 + $0x142] sm:$0xff]
      %v664 = vld [vmem:[%s571 + $0x152] sm:$0xff]
      %v665 = vld [vmem:[%s571 + $0x15a] sm:$0xff]
      %v666 = vld [vmem:[%s571 + $0x16a] sm:$0xff]
      %v667 = vld [vmem:[%s571 + $0x172] sm:$0xff]
      %700 = vrot.lane.b32.xlu0 %v411, 8
      %v701 = vpop.permute.xlu0 %700
      %702 = vrot.lane.b32.xlu0 %v412, 8
      %v703 = vpop.permute.xlu0 %702
      %704 = vrot.lane.b32.xlu0 %v413, 8
      %v705 = vpop.permute.xlu0 %704
      %706 = vrot.lane.b32.xlu0 %v414, 8
      %v707 = vpop.permute.xlu0 %706
      %708 = vrot.lane.b32.xlu0 %v415, 8
      %v709 = vpop.permute.xlu0 %708
      %710 = vrot.lane.b32.xlu0 %v416, 8
      %v711 = vpop.permute.xlu0 %710
      %712 = vrot.lane.b32.xlu0 %v417, 8
      %v713 = vpop.permute.xlu0 %712
      %714 = vrot.lane.b32.xlu0 %v418, 8
      %v715 = vpop.permute.xlu0 %714
      %716 = vrot.lane.b32.xlu0 %v419, 8
      %v717 = vpop.permute.xlu0 %716
      %718 = vrot.lane.b32.xlu0 %v420, 8
      %v719 = vpop.permute.xlu0 %718
      %720 = vrot.lane.b32.xlu0 %v421, 8
      %v721 = vpop.permute.xlu0 %720
      %722 = vrot.lane.b32.xlu0 %v422, 8
      %v723 = vpop.permute.xlu0 %722
      %724 = vrot.lane.b32.xlu0 %v423, 8
      %v725 = vpop.permute.xlu0 %724
      %726 = vrot.lane.b32.xlu0 %v424, 8
      %v727 = vpop.permute.xlu0 %726
      %728 = vrot.lane.b32.xlu0 %v425, 8
      %v729 = vpop.permute.xlu0 %728
      %730 = vrot.lane.b32.xlu0 %v426, 8
      %v731 = vpop.permute.xlu0 %730
      %732 = vrot.lane.b32.xlu0 %v427, 8
      %v733 = vpop.permute.xlu0 %732
      %734 = vrot.lane.b32.xlu0 %v428, 8
      %v735 = vpop.permute.xlu0 %734
      %736 = vrot.lane.b32.xlu0 %v429, 8
      %v737 = vpop.permute.xlu0 %736
      %738 = vrot.lane.b32.xlu0 %v430, 8
      %v739 = vpop.permute.xlu0 %738
      %740 = vrot.lane.b32.xlu0 %v431, 8
      %v741 = vpop.permute.xlu0 %740
      %742 = vrot.lane.b32.xlu0 %v432, 8
      %v743 = vpop.permute.xlu0 %742
      %744 = vrot.lane.b32.xlu0 %v433, 8
      %v745 = vpop.permute.xlu0 %744
      %746 = vrot.lane.b32.xlu0 %v434, 8
      %v747 = vpop.permute.xlu0 %746
      %748 = vrot.lane.b32.xlu0 %v435, 8
      %v749 = vpop.permute.xlu0 %748
      %750 = vrot.lane.b32.xlu0 %v436, 8
      %v751 = vpop.permute.xlu0 %750
      %752 = vrot.lane.b32.xlu0 %v437, 8
      %v753 = vpop.permute.xlu0 %752
      %754 = vrot.lane.b32.xlu0 %v438, 8
      %v755 = vpop.permute.xlu0 %754
      %756 = vrot.lane.b32.xlu0 %v439, 8
      %v757 = vpop.permute.xlu0 %756
      %758 = vrot.lane.b32.xlu0 %v440, 8
      %v759 = vpop.permute.xlu0 %758
      %760 = vrot.lane.b32.xlu0 %v441, 8
      %v761 = vpop.permute.xlu0 %760
      %762 = vrot.lane.b32.xlu0 %v442, 8
      %v763 = vpop.permute.xlu0 %762
      %828 = vrot.lane.b32.xlu0 %v443, 16
      %v829 = vpop.permute.xlu0 %828
      %830 = vrot.lane.b32.xlu0 %v444, 16
      %v831 = vpop.permute.xlu0 %830
      %832 = vrot.lane.b32.xlu0 %v445, 16
      %v833 = vpop.permute.xlu0 %832
      %834 = vrot.lane.b32.xlu0 %v446, 16
      %v835 = vpop.permute.xlu0 %834
      %836 = vrot.lane.b32.xlu0 %v447, 16
      %v837 = vpop.permute.xlu0 %836
      %838 = vrot.lane.b32.xlu0 %v448, 16
      %v839 = vpop.permute.xlu0 %838
      %840 = vrot.lane.b32.xlu0 %v449, 16
      %v841 = vpop.permute.xlu0 %840
      %842 = vrot.lane.b32.xlu0 %v450, 16
      %v843 = vpop.permute.xlu0 %842
      %844 = vrot.lane.b32.xlu0 %v451, 16
      %v845 = vpop.permute.xlu0 %844
      %846 = vrot.lane.b32.xlu0 %v452, 16
      %v847 = vpop.permute.xlu0 %846
      %848 = vrot.lane.b32.xlu0 %v453, 16
      %v849 = vpop.permute.xlu0 %848
      %850 = vrot.lane.b32.xlu0 %v454, 16
      %v851 = vpop.permute.xlu0 %850
      %852 = vrot.lane.b32.xlu0 %v455, 16
      %v853 = vpop.permute.xlu0 %852
      %854 = vrot.lane.b32.xlu0 %v456, 16
      %v855 = vpop.permute.xlu0 %854
      %856 = vrot.lane.b32.xlu0 %v457, 16
      %v857 = vpop.permute.xlu0 %856
      %858 = vrot.lane.b32.xlu0 %v458, 16
      %v859 = vpop.permute.xlu0 %858
      %860 = vrot.lane.b32.xlu0 %v459, 16
      %v861 = vpop.permute.xlu0 %860
      %862 = vrot.lane.b32.xlu0 %v460, 16
      %v863 = vpop.permute.xlu0 %862
      %864 = vrot.lane.b32.xlu0 %v461, 16
      %v865 = vpop.permute.xlu0 %864
      %866 = vrot.lane.b32.xlu0 %v462, 16
      %v867 = vpop.permute.xlu0 %866
      %868 = vrot.lane.b32.xlu0 %v463, 16
      %v869 = vpop.permute.xlu0 %868
      %870 = vrot.lane.b32.xlu0 %v464, 16
      %v871 = vpop.permute.xlu0 %870
      %872 = vrot.lane.b32.xlu0 %v465, 16
      %v873 = vpop.permute.xlu0 %872
      %874 = vrot.lane.b32.xlu0 %v466, 16
      %v875 = vpop.permute.xlu0 %874
      %876 = vrot.lane.b32.xlu0 %v467, 16
      %v877 = vpop.permute.xlu0 %876
      %878 = vrot.lane.b32.xlu0 %v468, 16
      %v879 = vpop.permute.xlu0 %878
      %880 = vrot.lane.b32.xlu0 %v469, 16
      %v881 = vpop.permute.xlu0 %880
      %882 = vrot.lane.b32.xlu0 %v470, 16
      %v883 = vpop.permute.xlu0 %882
      %884 = vrot.lane.b32.xlu0 %v471, 16
      %v885 = vpop.permute.xlu0 %884
      %886 = vrot.lane.b32.xlu0 %v472, 16
      %v887 = vpop.permute.xlu0 %886
      %888 = vrot.lane.b32.xlu0 %v473, 16
      %v889 = vpop.permute.xlu0 %888
      %890 = vrot.lane.b32.xlu0 %v474, 16
      %v891 = vpop.permute.xlu0 %890
      %956 = vrot.lane.b32.xlu0 %v475, 24
      %v957 = vpop.permute.xlu0 %956
      %958 = vrot.lane.b32.xlu0 %v476, 24
      %v959 = vpop.permute.xlu0 %958
      %960 = vrot.lane.b32.xlu0 %v477, 24
      %v961 = vpop.permute.xlu0 %960
      %962 = vrot.lane.b32.xlu0 %v478, 24
      %v963 = vpop.permute.xlu0 %962
      %964 = vrot.lane.b32.xlu0 %v479, 24
      %v965 = vpop.permute.xlu0 %964
      %966 = vrot.lane.b32.xlu0 %v480, 24
      %v967 = vpop.permute.xlu0 %966
      %968 = vrot.lane.b32.xlu0 %v481, 24
      %v969 = vpop.permute.xlu0 %968
      %970 = vrot.lane.b32.xlu0 %v482, 24
      %v971 = vpop.permute.xlu0 %970
      %972 = vrot.lane.b32.xlu0 %v483, 24
      %v973 = vpop.permute.xlu0 %972
      %974 = vrot.lane.b32.xlu0 %v484, 24
      %v975 = vpop.permute.xlu0 %974
      %976 = vrot.lane.b32.xlu0 %v485, 24
      %v977 = vpop.permute.xlu0 %976
      %978 = vrot.lane.b32.xlu0 %v486, 24
      %v979 = vpop.permute.xlu0 %978
      %980 = vrot.lane.b32.xlu0 %v487, 24
      %v981 = vpop.permute.xlu0 %980
      %982 = vrot.lane.b32.xlu0 %v488, 24
      %v983 = vpop.permute.xlu0 %982
      %984 = vrot.lane.b32.xlu0 %v489, 24
      %v985 = vpop.permute.xlu0 %984
      %986 = vrot.lane.b32.xlu0 %v490, 24
      %v987 = vpop.permute.xlu0 %986
      %988 = vrot.lane.b32.xlu0 %v491, 24
      %v989 = vpop.permute.xlu0 %988
      %990 = vrot.lane.b32.xlu0 %v492, 24
      %v991 = vpop.permute.xlu0 %990
      %992 = vrot.lane.b32.xlu0 %v493, 24
      %v993 = vpop.permute.xlu0 %992
      %994 = vrot.lane.b32.xlu0 %v494, 24
      %v995 = vpop.permute.xlu0 %994
      %996 = vrot.lane.b32.xlu0 %v495, 24
      %v997 = vpop.permute.xlu0 %996
      %998 = vrot.lane.b32.xlu0 %v496, 24
      %v999 = vpop.permute.xlu0 %998
      %1000 = vrot.lane.b32.xlu0 %v497, 24
      %v1001 = vpop.permute.xlu0 %1000
      %1002 = vrot.lane.b32.xlu0 %v498, 24
      %v1003 = vpop.permute.xlu0 %1002
      %1004 = vrot.lane.b32.xlu0 %v499, 24
      %v1005 = vpop.permute.xlu0 %1004
      %1006 = vrot.lane.b32.xlu0 %v500, 24
      %v1007 = vpop.permute.xlu0 %1006
      %1008 = vrot.lane.b32.xlu0 %v501, 24
      %v1009 = vpop.permute.xlu0 %1008
      %1010 = vrot.lane.b32.xlu0 %v502, 24
      %v1011 = vpop.permute.xlu0 %1010
      %1012 = vrot.lane.b32.xlu0 %v503, 24
      %v1013 = vpop.permute.xlu0 %1012
      %1014 = vrot.lane.b32.xlu0 %v504, 24
      %v1015 = vpop.permute.xlu0 %1014
      %1016 = vrot.lane.b32.xlu0 %v505, 24
      %v1017 = vpop.permute.xlu0 %1016
      %1018 = vrot.lane.b32.xlu0 %v506, 24
      %v1019 = vpop.permute.xlu0 %1018
      %1084 = vrot.lane.b32.xlu0 %v507, 32
      %v1085 = vpop.permute.xlu0 %1084
      %1086 = vrot.lane.b32.xlu0 %v508, 32
      %v1087 = vpop.permute.xlu0 %1086
      %1088 = vrot.lane.b32.xlu0 %v509, 32
      %v1089 = vpop.permute.xlu0 %1088
      %1090 = vrot.lane.b32.xlu0 %v510, 32
      %v1091 = vpop.permute.xlu0 %1090
      %1092 = vrot.lane.b32.xlu0 %v511, 32
      %v1093 = vpop.permute.xlu0 %1092
      %1094 = vrot.lane.b32.xlu0 %v512, 32
      %v1095 = vpop.permute.xlu0 %1094
      %1096 = vrot.lane.b32.xlu0 %v513, 32
      %v1097 = vpop.permute.xlu0 %1096
      %1098 = vrot.lane.b32.xlu0 %v514, 32
      %v1099 = vpop.permute.xlu0 %1098
      %1100 = vrot.lane.b32.xlu0 %v515, 32
      %v1101 = vpop.permute.xlu0 %1100
      %1102 = vrot.lane.b32.xlu0 %v516, 32
      %v1103 = vpop.permute.xlu0 %1102
      %1104 = vrot.lane.b32.xlu0 %v517, 32
      %v1105 = vpop.permute.xlu0 %1104
      %1106 = vrot.lane.b32.xlu0 %v518, 32
      %v1107 = vpop.permute.xlu0 %1106
      %1108 = vrot.lane.b32.xlu0 %v519, 32
      %v1109 = vpop.permute.xlu0 %1108
      %1110 = vrot.lane.b32.xlu0 %v520, 32
      %v1111 = vpop.permute.xlu0 %1110
      %1112 = vrot.lane.b32.xlu0 %v521, 32
      %v1113 = vpop.permute.xlu0 %1112
      %1114 = vrot.lane.b32.xlu0 %v522, 32
      %v1115 = vpop.permute.xlu0 %1114
      %1116 = vrot.lane.b32.xlu0 %v523, 32
      %v1117 = vpop.permute.xlu0 %1116
      %1118 = vrot.lane.b32.xlu0 %v524, 32
      %v1119 = vpop.permute.xlu0 %1118
      %1120 = vrot.lane.b32.xlu0 %v525, 32
      %v1121 = vpop.permute.xlu0 %1120
      %1122 = vrot.lane.b32.xlu0 %v526, 32
      %v1123 = vpop.permute.xlu0 %1122
      %1124 = vrot.lane.b32.xlu0 %v527, 32
      %v1125 = vpop.permute.xlu0 %1124
      %1126 = vrot.lane.b32.xlu0 %v528, 32
      %v1127 = vpop.permute.xlu0 %1126
      %1128 = vrot.lane.b32.xlu0 %v529, 32
      %v1129 = vpop.permute.xlu0 %1128
      %1130 = vrot.lane.b32.xlu0 %v530, 32
      %v1131 = vpop.permute.xlu0 %1130
      %1132 = vrot.lane.b32.xlu0 %v531, 32
      %v1133 = vpop.permute.xlu0 %1132
      %1134 = vrot.lane.b32.xlu0 %v532, 32
      %v1135 = vpop.permute.xlu0 %1134
      %1136 = vrot.lane.b32.xlu0 %v533, 32
      %v1137 = vpop.permute.xlu0 %1136
      %1138 = vrot.lane.b32.xlu0 %v534, 32
      %v1139 = vpop.permute.xlu0 %1138
      %1140 = vrot.lane.b32.xlu0 %v535, 32
      %v1141 = vpop.permute.xlu0 %1140
      %1142 = vrot.lane.b32.xlu0 %v536, 32
      %v1143 = vpop.permute.xlu0 %1142
      %1144 = vrot.lane.b32.xlu0 %v537, 32
      %v1145 = vpop.permute.xlu0 %1144
      %1146 = vrot.lane.b32.xlu0 %v538, 32
      %v1147 = vpop.permute.xlu0 %1146
      %1212 = vrot.lane.b32.xlu0 %v539, 40
      %v1213 = vpop.permute.xlu0 %1212
      %1214 = vrot.lane.b32.xlu0 %v540, 40
      %v1215 = vpop.permute.xlu0 %1214
      %1216 = vrot.lane.b32.xlu0 %v541, 40
      %v1217 = vpop.permute.xlu0 %1216
      %1218 = vrot.lane.b32.xlu0 %v542, 40
      %v1219 = vpop.permute.xlu0 %1218
      %1220 = vrot.lane.b32.xlu0 %v543, 40
      %v1221 = vpop.permute.xlu0 %1220
      %1222 = vrot.lane.b32.xlu0 %v544, 40
      %v1223 = vpop.permute.xlu0 %1222
      %1224 = vrot.lane.b32.xlu0 %v545, 40
      %v1225 = vpop.permute.xlu0 %1224
      %1226 = vrot.lane.b32.xlu0 %v546, 40
      %v1227 = vpop.permute.xlu0 %1226
      %1228 = vrot.lane.b32.xlu0 %v547, 40
      %v1229 = vpop.permute.xlu0 %1228
      %1230 = vrot.lane.b32.xlu0 %v548, 40
      %v1231 = vpop.permute.xlu0 %1230
      %1232 = vrot.lane.b32.xlu0 %v549, 40
      %v1233 = vpop.permute.xlu0 %1232
      %1234 = vrot.lane.b32.xlu0 %v550, 40
      %v1235 = vpop.permute.xlu0 %1234
      %1236 = vrot.lane.b32.xlu0 %v551, 40
      %v1237 = vpop.permute.xlu0 %1236
      %1238 = vrot.lane.b32.xlu0 %v552, 40
      %v1239 = vpop.permute.xlu0 %1238
      %1240 = vrot.lane.b32.xlu0 %v553, 40
      %v1241 = vpop.permute.xlu0 %1240
      %1242 = vrot.lane.b32.xlu0 %v554, 40
      %v1243 = vpop.permute.xlu0 %1242
      %1244 = vrot.lane.b32.xlu0 %v555, 40
      %v1245 = vpop.permute.xlu0 %1244
      %1246 = vrot.lane.b32.xlu0 %v556, 40
      %v1247 = vpop.permute.xlu0 %1246
      %1248 = vrot.lane.b32.xlu0 %v557, 40
      %v1249 = vpop.permute.xlu0 %1248
      %1250 = vrot.lane.b32.xlu0 %v558, 40
      %v1251 = vpop.permute.xlu0 %1250
      %1252 = vrot.lane.b32.xlu0 %v559, 40
      %v1253 = vpop.permute.xlu0 %1252
      %1254 = vrot.lane.b32.xlu0 %v560, 40
      %v1255 = vpop.permute.xlu0 %1254
      %1256 = vrot.lane.b32.xlu0 %v561, 40
      %v1257 = vpop.permute.xlu0 %1256
      %1258 = vrot.lane.b32.xlu0 %v562, 40
      %v1259 = vpop.permute.xlu0 %1258
      %1260 = vrot.lane.b32.xlu0 %v563, 40
      %v1261 = vpop.permute.xlu0 %1260
      %1262 = vrot.lane.b32.xlu0 %v564, 40
      %v1263 = vpop.permute.xlu0 %1262
      %1264 = vrot.lane.b32.xlu0 %v565, 40
      %v1265 = vpop.permute.xlu0 %1264
      %1266 = vrot.lane.b32.xlu0 %v566, 40
      %v1267 = vpop.permute.xlu0 %1266
      %1268 = vrot.lane.b32.xlu0 %v567, 40
      %v1269 = vpop.permute.xlu0 %1268
      %1270 = vrot.lane.b32.xlu0 %v568, 40
      %v1271 = vpop.permute.xlu0 %1270
      %1272 = vrot.lane.b32.xlu0 %v569, 40
      %v1273 = vpop.permute.xlu0 %1272
      %1274 = vrot.lane.b32.xlu0 %v570, 40
      %v1275 = vpop.permute.xlu0 %1274
      %1340 = vrot.lane.b32.xlu0 %v572, 48
      %v1341 = vpop.permute.xlu0 %1340
      %1342 = vrot.lane.b32.xlu0 %v573, 48
      %v1343 = vpop.permute.xlu0 %1342
      %1344 = vrot.lane.b32.xlu0 %v574, 48
      %v1345 = vpop.permute.xlu0 %1344
      %1346 = vrot.lane.b32.xlu0 %v575, 48
      %v1347 = vpop.permute.xlu0 %1346
      %1348 = vrot.lane.b32.xlu0 %v576, 48
      %v1349 = vpop.permute.xlu0 %1348
      %1350 = vrot.lane.b32.xlu0 %v577, 48
      %v1351 = vpop.permute.xlu0 %1350
      %1352 = vrot.lane.b32.xlu0 %v578, 48
      %v1353 = vpop.permute.xlu0 %1352
      %1354 = vrot.lane.b32.xlu0 %v579, 48
      %v1355 = vpop.permute.xlu0 %1354
      %1356 = vrot.lane.b32.xlu0 %v580, 48
      %v1357 = vpop.permute.xlu0 %1356
      %1358 = vrot.lane.b32.xlu0 %v581, 48
      %v1359 = vpop.permute.xlu0 %1358
      %1360 = vrot.lane.b32.xlu0 %v582, 48
      %v1361 = vpop.permute.xlu0 %1360
      %1362 = vrot.lane.b32.xlu0 %v583, 48
      %v1363 = vpop.permute.xlu0 %1362
      %1364 = vrot.lane.b32.xlu0 %v584, 48
      %v1365 = vpop.permute.xlu0 %1364
      %1366 = vrot.lane.b32.xlu0 %v585, 48
      %v1367 = vpop.permute.xlu0 %1366
      %1368 = vrot.lane.b32.xlu0 %v586, 48
      %v1369 = vpop.permute.xlu0 %1368
      %1370 = vrot.lane.b32.xlu0 %v587, 48
      %v1371 = vpop.permute.xlu0 %1370
      %1372 = vrot.lane.b32.xlu0 %v588, 48
      %v1373 = vpop.permute.xlu0 %1372
      %1374 = vrot.lane.b32.xlu0 %v589, 48
      %v1375 = vpop.permute.xlu0 %1374
      %1376 = vrot.lane.b32.xlu0 %v590, 48
      %v1377 = vpop.permute.xlu0 %1376
      %1378 = vrot.lane.b32.xlu0 %v591, 48
      %v1379 = vpop.permute.xlu0 %1378
      %1380 = vrot.lane.b32.xlu0 %v592, 48
      %v1381 = vpop.permute.xlu0 %1380
      %1382 = vrot.lane.b32.xlu0 %v593, 48
      %v1383 = vpop.permute.xlu0 %1382
      %1384 = vrot.lane.b32.xlu0 %v594, 48
      %v1385 = vpop.permute.xlu0 %1384
      %1386 = vrot.lane.b32.xlu0 %v595, 48
      %v1387 = vpop.permute.xlu0 %1386
      %1388 = vrot.lane.b32.xlu0 %v596, 48
      %v1389 = vpop.permute.xlu0 %1388
      %1390 = vrot.lane.b32.xlu0 %v597, 48
      %v1391 = vpop.permute.xlu0 %1390
      %1392 = vrot.lane.b32.xlu0 %v598, 48
      %v1393 = vpop.permute.xlu0 %1392
      %1394 = vrot.lane.b32.xlu0 %v599, 48
      %v1395 = vpop.permute.xlu0 %1394
      %1396 = vrot.lane.b32.xlu0 %v600, 48
      %v1397 = vpop.permute.xlu0 %1396
      %1398 = vrot.lane.b32.xlu0 %v601, 48
      %v1399 = vpop.permute.xlu0 %1398
      %1400 = vrot.lane.b32.xlu0 %v602, 48
      %v1401 = vpop.permute.xlu0 %1400
      %1402 = vrot.lane.b32.xlu0 %v603, 48
      %v1403 = vpop.permute.xlu0 %1402
      %1468 = vrot.lane.b32.xlu0 %v604, 56
      %v1469 = vpop.permute.xlu0 %1468
      %1470 = vrot.lane.b32.xlu0 %v605, 56
      %v1471 = vpop.permute.xlu0 %1470
      %1472 = vrot.lane.b32.xlu0 %v606, 56
      %v1473 = vpop.permute.xlu0 %1472
      %1474 = vrot.lane.b32.xlu0 %v607, 56
      %v1475 = vpop.permute.xlu0 %1474
      %1476 = vrot.lane.b32.xlu0 %v608, 56
      %v1477 = vpop.permute.xlu0 %1476
      %1478 = vrot.lane.b32.xlu0 %v609, 56
      %v1479 = vpop.permute.xlu0 %1478
      %1480 = vrot.lane.b32.xlu0 %v610, 56
      %v1481 = vpop.permute.xlu0 %1480
      %1482 = vrot.lane.b32.xlu0 %v611, 56
      %v1483 = vpop.permute.xlu0 %1482
      %1484 = vrot.lane.b32.xlu0 %v612, 56
      %v1485 = vpop.permute.xlu0 %1484
      %1486 = vrot.lane.b32.xlu0 %v613, 56
      %v1487 = vpop.permute.xlu0 %1486
      %1488 = vrot.lane.b32.xlu0 %v614, 56
      %v1489 = vpop.permute.xlu0 %1488
      %1490 = vrot.lane.b32.xlu0 %v615, 56
      %v1491 = vpop.permute.xlu0 %1490
      %1492 = vrot.lane.b32.xlu0 %v616, 56
      %v1493 = vpop.permute.xlu0 %1492
      %1494 = vrot.lane.b32.xlu0 %v617, 56
      %v1495 = vpop.permute.xlu0 %1494
      %1496 = vrot.lane.b32.xlu0 %v618, 56
      %v1497 = vpop.permute.xlu0 %1496
      %1498 = vrot.lane.b32.xlu0 %v619, 56
      %v1499 = vpop.permute.xlu0 %1498
      %1500 = vrot.lane.b32.xlu0 %v620, 56
      %v1501 = vpop.permute.xlu0 %1500
      %1502 = vrot.lane.b32.xlu0 %v621, 56
      %v1503 = vpop.permute.xlu0 %1502
      %1504 = vrot.lane.b32.xlu0 %v622, 56
      %v1505 = vpop.permute.xlu0 %1504
      %1506 = vrot.lane.b32.xlu0 %v623, 56
      %v1507 = vpop.permute.xlu0 %1506
      %1508 = vrot.lane.b32.xlu0 %v624, 56
      %v1509 = vpop.permute.xlu0 %1508
      %1510 = vrot.lane.b32.xlu0 %v625, 56
      %v1511 = vpop.permute.xlu0 %1510
      %1512 = vrot.lane.b32.xlu0 %v626, 56
      %v1513 = vpop.permute.xlu0 %1512
      %1514 = vrot.lane.b32.xlu0 %v627, 56
      %v1515 = vpop.permute.xlu0 %1514
      %1516 = vrot.lane.b32.xlu0 %v628, 56
      %v1517 = vpop.permute.xlu0 %1516
      %1518 = vrot.lane.b32.xlu0 %v629, 56
      %v1519 = vpop.permute.xlu0 %1518
      %1520 = vrot.lane.b32.xlu0 %v630, 56
      %v1521 = vpop.permute.xlu0 %1520
      %1522 = vrot.lane.b32.xlu0 %v631, 56
      %v1523 = vpop.permute.xlu0 %1522
      %1524 = vrot.lane.b32.xlu0 %v632, 56
      %v1525 = vpop.permute.xlu0 %1524
      %1526 = vrot.lane.b32.xlu0 %v633, 56
      %v1527 = vpop.permute.xlu0 %1526
      %1528 = vrot.lane.b32.xlu0 %v634, 56
      %v1529 = vpop.permute.xlu0 %1528
      %1530 = vrot.lane.b32.xlu0 %v635, 56
      %v1531 = vpop.permute.xlu0 %1530
      %1596 = vrot.lane.b32.xlu0 %v636, 64
      %v1597 = vpop.permute.xlu0 %1596
      %1598 = vrot.lane.b32.xlu0 %v637, 64
      %v1599 = vpop.permute.xlu0 %1598
      %1600 = vrot.lane.b32.xlu0 %v638, 64
      %v1601 = vpop.permute.xlu0 %1600
      %1602 = vrot.lane.b32.xlu0 %v639, 64
      %v1603 = vpop.permute.xlu0 %1602
      %1604 = vrot.lane.b32.xlu0 %v640, 64
      %v1605 = vpop.permute.xlu0 %1604
      %1606 = vrot.lane.b32.xlu0 %v641, 64
      %v1607 = vpop.permute.xlu0 %1606
      %1608 = vrot.lane.b32.xlu0 %v642, 64
      %v1609 = vpop.permute.xlu0 %1608
      %1610 = vrot.lane.b32.xlu0 %v643, 64
      %v1611 = vpop.permute.xlu0 %1610
      %1612 = vrot.lane.b32.xlu0 %v644, 64
      %v1613 = vpop.permute.xlu0 %1612
      %1614 = vrot.lane.b32.xlu0 %v645, 64
      %v1615 = vpop.permute.xlu0 %1614
      %1616 = vrot.lane.b32.xlu0 %v646, 64
      %v1617 = vpop.permute.xlu0 %1616
      %1618 = vrot.lane.b32.xlu0 %v647, 64
      %v1619 = vpop.permute.xlu0 %1618
      %1620 = vrot.lane.b32.xlu0 %v648, 64
      %v1621 = vpop.permute.xlu0 %1620
      %1622 = vrot.lane.b32.xlu0 %v649, 64
      %v1623 = vpop.permute.xlu0 %1622
      %1624 = vrot.lane.b32.xlu0 %v650, 64
      %v1625 = vpop.permute.xlu0 %1624
      %1626 = vrot.lane.b32.xlu0 %v651, 64
      %v1627 = vpop.permute.xlu0 %1626
      %1628 = vrot.lane.b32.xlu0 %v652, 64
      %v1629 = vpop.permute.xlu0 %1628
      %1630 = vrot.lane.b32.xlu0 %v653, 64
      %v1631 = vpop.permute.xlu0 %1630
      %1632 = vrot.lane.b32.xlu0 %v654, 64
      %v1633 = vpop.permute.xlu0 %1632
      %1634 = vrot.lane.b32.xlu0 %v655, 64
      %v1635 = vpop.permute.xlu0 %1634
      %1636 = vrot.lane.b32.xlu0 %v656, 64
      %v1637 = vpop.permute.xlu0 %1636
      %1638 = vrot.lane.b32.xlu0 %v657, 64
      %v1639 = vpop.permute.xlu0 %1638
      %1640 = vrot.lane.b32.xlu0 %v658, 64
      %v1641 = vpop.permute.xlu0 %1640
      %1642 = vrot.lane.b32.xlu0 %v659, 64
      %v1643 = vpop.permute.xlu0 %1642
      %1644 = vrot.lane.b32.xlu0 %v660, 64
      %v1645 = vpop.permute.xlu0 %1644
      %1646 = vrot.lane.b32.xlu0 %v661, 64
      %v1647 = vpop.permute.xlu0 %1646
      %1648 = vrot.lane.b32.xlu0 %v662, 64
      %v1649 = vpop.permute.xlu0 %1648
      %1650 = vrot.lane.b32.xlu0 %v663, 64
      %v1651 = vpop.permute.xlu0 %1650
      %1652 = vrot.lane.b32.xlu0 %v664, 64
      %v1653 = vpop.permute.xlu0 %1652
      %1654 = vrot.lane.b32.xlu0 %v665, 64
      %v1655 = vpop.permute.xlu0 %1654
      %1656 = vrot.lane.b32.xlu0 %v666, 64
      %v1657 = vpop.permute.xlu0 %1656
      %1658 = vrot.lane.b32.xlu0 %v667, 64
      %v1659 = vpop.permute.xlu0 %1658
      %v1692 = vsel %vm225, %v379, %v701
      %v1693 = vsel %vm225, %v380, %v703
      %v1694 = vsel %vm225, %v381, %v705
      %v1695 = vsel %vm225, %v382, %v707
      %v1696 = vsel %vm225, %v383, %v709
      %v1697 = vsel %vm225, %v384, %v711
      %v1698 = vsel %vm225, %v385, %v713
      %v1699 = vsel %vm225, %v386, %v715
      %v1700 = vsel %vm225, %v387, %v717
      %v1701 = vsel %vm225, %v388, %v719
      %v1702 = vsel %vm225, %v389, %v721
      %v1703 = vsel %vm225, %v390, %v723
      %v1704 = vsel %vm225, %v391, %v725
      %v1705 = vsel %vm225, %v392, %v727
      %v1706 = vsel %vm225, %v393, %v729
      %v1707 = vsel %vm225, %v394, %v731
      %v1708 = vsel %vm225, %v395, %v733
      %v1709 = vsel %vm225, %v396, %v735
      %v1710 = vsel %vm225, %v397, %v737
      %v1711 = vsel %vm225, %v398, %v739
      %v1712 = vsel %vm225, %v399, %v741
      %v1713 = vsel %vm225, %v400, %v743
      %v1714 = vsel %vm225, %v401, %v745
      %v1715 = vsel %vm225, %v402, %v747
      %v1716 = vsel %vm225, %v403, %v749
      %v1717 = vsel %vm225, %v404, %v751
      %v1718 = vsel %vm225, %v405, %v753
      %v1719 = vsel %vm225, %v406, %v755
      %v1720 = vsel %vm225, %v407, %v757
      %v1721 = vsel %vm225, %v408, %v759
      %v1722 = vsel %vm225, %v409, %v761
      %v1723 = vsel %vm225, %v410, %v763
      %vm1724 = vcmask 130048
      %v1725 = vsel %vm1724, %v1692, %v829
      %v1726 = vsel %vm1724, %v1693, %v831
      %v1727 = vsel %vm1724, %v1694, %v833
      %v1728 = vsel %vm1724, %v1695, %v835
      %v1729 = vsel %vm1724, %v1696, %v837
      %v1730 = vsel %vm1724, %v1697, %v839
      %v1731 = vsel %vm1724, %v1698, %v841
      %v1732 = vsel %vm1724, %v1699, %v843
      %v1733 = vsel %vm1724, %v1700, %v845
      %v1734 = vsel %vm1724, %v1701, %v847
      %v1735 = vsel %vm1724, %v1702, %v849
      %v1736 = vsel %vm1724, %v1703, %v851
      %v1737 = vsel %vm1724, %v1704, %v853
      %v1738 = vsel %vm1724, %v1705, %v855
      %v1739 = vsel %vm1724, %v1706, %v857
      %v1740 = vsel %vm1724, %v1707, %v859
      %v1741 = vsel %vm1724, %v1708, %v861
      %v1742 = vsel %vm1724, %v1709, %v863
      %v1743 = vsel %vm1724, %v1710, %v865
      %v1744 = vsel %vm1724, %v1711, %v867
      %v1745 = vsel %vm1724, %v1712, %v869
      %v1746 = vsel %vm1724, %v1713, %v871
      %v1747 = vsel %vm1724, %v1714, %v873
      %v1748 = vsel %vm1724, %v1715, %v875
      %v1749 = vsel %vm1724, %v1716, %v877
      %v1750 = vsel %vm1724, %v1717, %v879
      %v1751 = vsel %vm1724, %v1718, %v881
      %v1752 = vsel %vm1724, %v1719, %v883
      %v1753 = vsel %vm1724, %v1720, %v885
      %v1754 = vsel %vm1724, %v1721, %v887
      %v1755 = vsel %vm1724, %v1722, %v889
      %v1756 = vsel %vm1724, %v1723, %v891
      %vm1757 = vcmask 195584
      %v1758 = vsel %vm1757, %v1725, %v957
      %v1759 = vsel %vm1757, %v1726, %v959
      %v1760 = vsel %vm1757, %v1727, %v961
      %v1761 = vsel %vm1757, %v1728, %v963
      %v1762 = vsel %vm1757, %v1729, %v965
      %v1763 = vsel %vm1757, %v1730, %v967
      %v1764 = vsel %vm1757, %v1731, %v969
      %v1765 = vsel %vm1757, %v1732, %v971
      %v1766 = vsel %vm1757, %v1733, %v973
      %v1767 = vsel %vm1757, %v1734, %v975
      %v1768 = vsel %vm1757, %v1735, %v977
      %v1769 = vsel %vm1757, %v1736, %v979
      %v1770 = vsel %vm1757, %v1737, %v981
      %v1771 = vsel %vm1757, %v1738, %v983
      %v1772 = vsel %vm1757, %v1739, %v985
      %v1773 = vsel %vm1757, %v1740, %v987
      %v1774 = vsel %vm1757, %v1741, %v989
      %v1775 = vsel %vm1757, %v1742, %v991
      %v1776 = vsel %vm1757, %v1743, %v993
      %v1777 = vsel %vm1757, %v1744, %v995
      %v1778 = vsel %vm1757, %v1745, %v997
      %v1779 = vsel %vm1757, %v1746, %v999
      %v1780 = vsel %vm1757, %v1747, %v1001
      %v1781 = vsel %vm1757, %v1748, %v1003
      %v1782 = vsel %vm1757, %v1749, %v1005
      %v1783 = vsel %vm1757, %v1750, %v1007
      %v1784 = vsel %vm1757, %v1751, %v1009
      %v1785 = vsel %vm1757, %v1752, %v1011
      %v1786 = vsel %vm1757, %v1753, %v1013
      %v1787 = vsel %vm1757, %v1754, %v1015
      %v1788 = vsel %vm1757, %v1755, %v1017
      %v1789 = vsel %vm1757, %v1756, %v1019
      %vm1790 = vcmask 261120
      %v1791 = vsel %vm1790, %v1758, %v1085
      %v1792 = vsel %vm1790, %v1759, %v1087
      %v1793 = vsel %vm1790, %v1760, %v1089
      %v1794 = vsel %vm1790, %v1761, %v1091
      %v1795 = vsel %vm1790, %v1762, %v1093
      %v1796 = vsel %vm1790, %v1763, %v1095
      %v1797 = vsel %vm1790, %v1764, %v1097
      %v1798 = vsel %vm1790, %v1765, %v1099
      %v1799 = vsel %vm1790, %v1766, %v1101
      %v1800 = vsel %vm1790, %v1767, %v1103
      %v1801 = vsel %vm1790, %v1768, %v1105
      %v1802 = vsel %vm1790, %v1769, %v1107
      %v1803 = vsel %vm1790, %v1770, %v1109
      %v1804 = vsel %vm1790, %v1771, %v1111
      %v1805 = vsel %vm1790, %v1772, %v1113
      %v1806 = vsel %vm1790, %v1773, %v1115
      %v1807 = vsel %vm1790, %v1774, %v1117
      %v1808 = vsel %vm1790, %v1775, %v1119
      %v1809 = vsel %vm1790, %v1776, %v1121
      %v1810 = vsel %vm1790, %v1777, %v1123
      %v1811 = vsel %vm1790, %v1778, %v1125
      %v1812 = vsel %vm1790, %v1779, %v1127
      %v1813 = vsel %vm1790, %v1780, %v1129
      %v1814 = vsel %vm1790, %v1781, %v1131
      %v1815 = vsel %vm1790, %v1782, %v1133
      %v1816 = vsel %vm1790, %v1783, %v1135
      %v1817 = vsel %vm1790, %v1784, %v1137
      %v1818 = vsel %vm1790, %v1785, %v1139
      %v1819 = vsel %vm1790, %v1786, %v1141
      %v1820 = vsel %vm1790, %v1787, %v1143
      %v1821 = vsel %vm1790, %v1788, %v1145
      %v1822 = vsel %vm1790, %v1789, %v1147
      %vm1823 = vcmask 326656
      %v1824 = vsel %vm1823, %v1791, %v1213
      %v1825 = vsel %vm1823, %v1792, %v1215
      %v1826 = vsel %vm1823, %v1793, %v1217
      %v1827 = vsel %vm1823, %v1794, %v1219
      %v1828 = vsel %vm1823, %v1795, %v1221
      %v1829 = vsel %vm1823, %v1796, %v1223
      %v1830 = vsel %vm1823, %v1797, %v1225
      %v1831 = vsel %vm1823, %v1798, %v1227
      %v1832 = vsel %vm1823, %v1799, %v1229
      %v1833 = vsel %vm1823, %v1800, %v1231
      %v1834 = vsel %vm1823, %v1801, %v1233
      %v1835 = vsel %vm1823, %v1802, %v1235
      %v1836 = vsel %vm1823, %v1803, %v1237
      %v1837 = vsel %vm1823, %v1804, %v1239
      %v1838 = vsel %vm1823, %v1805, %v1241
      %v1839 = vsel %vm1823, %v1806, %v1243
      %v1840 = vsel %vm1823, %v1807, %v1245
      %v1841 = vsel %vm1823, %v1808, %v1247
      %v1842 = vsel %vm1823, %v1809, %v1249
      %v1843 = vsel %vm1823, %v1810, %v1251
      %v1844 = vsel %vm1823, %v1811, %v1253
      %v1845 = vsel %vm1823, %v1812, %v1255
      %v1846 = vsel %vm1823, %v1813, %v1257
      %v1847 = vsel %vm1823, %v1814, %v1259
      %v1848 = vsel %vm1823, %v1815, %v1261
      %v1849 = vsel %vm1823, %v1816, %v1263
      %v1850 = vsel %vm1823, %v1817, %v1265
      %v1851 = vsel %vm1823, %v1818, %v1267
      %v1852 = vsel %vm1823, %v1819, %v1269
      %v1853 = vsel %vm1823, %v1820, %v1271
      %v1854 = vsel %vm1823, %v1821, %v1273
      %v1855 = vsel %vm1823, %v1822, %v1275
      %vm1856 = vcmask 392192
      %v1857 = vsel %vm1856, %v1824, %v1341
      %v1858 = vsel %vm1856, %v1825, %v1343
      %v1859 = vsel %vm1856, %v1826, %v1345
      %v1860 = vsel %vm1856, %v1827, %v1347
      %v1861 = vsel %vm1856, %v1828, %v1349
      %v1862 = vsel %vm1856, %v1829, %v1351
      %v1863 = vsel %vm1856, %v1830, %v1353
      %v1864 = vsel %vm1856, %v1831, %v1355
      %v1865 = vsel %vm1856, %v1832, %v1357
      %v1866 = vsel %vm1856, %v1833, %v1359
      %v1867 = vsel %vm1856, %v1834, %v1361
      %v1868 = vsel %vm1856, %v1835, %v1363
      %v1869 = vsel %vm1856, %v1836, %v1365
      %v1870 = vsel %vm1856, %v1837, %v1367
      %v1871 = vsel %vm1856, %v1838, %v1369
      %v1872 = vsel %vm1856, %v1839, %v1371
      %v1873 = vsel %vm1856, %v1840, %v1373
      %v1874 = vsel %vm1856, %v1841, %v1375
      %v1875 = vsel %vm1856, %v1842, %v1377
      %v1876 = vsel %vm1856, %v1843, %v1379
      %v1877 = vsel %vm1856, %v1844, %v1381
      %v1878 = vsel %vm1856, %v1845, %v1383
      %v1879 = vsel %vm1856, %v1846, %v1385
      %v1880 = vsel %vm1856, %v1847, %v1387
      %v1881 = vsel %vm1856, %v1848, %v1389
      %v1882 = vsel %vm1856, %v1849, %v1391
      %v1883 = vsel %vm1856, %v1850, %v1393
      %v1884 = vsel %vm1856, %v1851, %v1395
      %v1885 = vsel %vm1856, %v1852, %v1397
      %v1886 = vsel %vm1856, %v1853, %v1399
      %v1887 = vsel %vm1856, %v1854, %v1401
      %v1888 = vsel %vm1856, %v1855, %v1403
      %vm1889 = vcmask 457728
      %v1890 = vsel %vm1889, %v1857, %v1469
      %v1891 = vsel %vm1889, %v1858, %v1471
      %v1892 = vsel %vm1889, %v1859, %v1473
      %v1893 = vsel %vm1889, %v1860, %v1475
      %v1894 = vsel %vm1889, %v1861, %v1477
      %v1895 = vsel %vm1889, %v1862, %v1479
      %v1896 = vsel %vm1889, %v1863, %v1481
      %v1897 = vsel %vm1889, %v1864, %v1483
      %v1898 = vsel %vm1889, %v1865, %v1485
      %v1899 = vsel %vm1889, %v1866, %v1487
      %v1900 = vsel %vm1889, %v1867, %v1489
      %v1901 = vsel %vm1889, %v1868, %v1491
      %v1902 = vsel %vm1889, %v1869, %v1493
      %v1903 = vsel %vm1889, %v1870, %v1495
      %v1904 = vsel %vm1889, %v1871, %v1497
      %v1905 = vsel %vm1889, %v1872, %v1499
      %v1906 = vsel %vm1889, %v1873, %v1501
      %v1907 = vsel %vm1889, %v1874, %v1503
      %v1908 = vsel %vm1889, %v1875, %v1505
      %v1909 = vsel %vm1889, %v1876, %v1507
      %v1910 = vsel %vm1889, %v1877, %v1509
      %v1911 = vsel %vm1889, %v1878, %v1511
      %v1912 = vsel %vm1889, %v1879, %v1513
      %v1913 = vsel %vm1889, %v1880, %v1515
      %v1914 = vsel %vm1889, %v1881, %v1517
      %v1915 = vsel %vm1889, %v1882, %v1519
      %v1916 = vsel %vm1889, %v1883, %v1521
      %v1917 = vsel %vm1889, %v1884, %v1523
      %v1918 = vsel %vm1889, %v1885, %v1525
      %v1919 = vsel %vm1889, %v1886, %v1527
      %v1920 = vsel %vm1889, %v1887, %v1529
      %v1921 = vsel %vm1889, %v1888, %v1531
      %vm1922 = vcmask 523264
      %v1923 = vsel %vm1922, %v1890, %v1597
      %v1924 = vsel %vm1922, %v1891, %v1599
      %v1925 = vsel %vm1922, %v1892, %v1601
      %v1926 = vsel %vm1922, %v1893, %v1603
      %v1927 = vsel %vm1922, %v1894, %v1605
      %v1928 = vsel %vm1922, %v1895, %v1607
      %v1929 = vsel %vm1922, %v1896, %v1609
      %v1930 = vsel %vm1922, %v1897, %v1611
      %v1931 = vsel %vm1922, %v1898, %v1613
      %v1932 = vsel %vm1922, %v1899, %v1615
      %v1933 = vsel %vm1922, %v1900, %v1617
      %v1934 = vsel %vm1922, %v1901, %v1619
      %v1935 = vsel %vm1922, %v1902, %v1621
      %v1936 = vsel %vm1922, %v1903, %v1623
      %v1937 = vsel %vm1922, %v1904, %v1625
      %v1938 = vsel %vm1922, %v1905, %v1627
      %v1939 = vsel %vm1922, %v1906, %v1629
      %v1940 = vsel %vm1922, %v1907, %v1631
      %v1941 = vsel %vm1922, %v1908, %v1633
      %v1942 = vsel %vm1922, %v1909, %v1635
      %v1943 = vsel %vm1922, %v1910, %v1637
      %v1944 = vsel %vm1922, %v1911, %v1639
      %v1945 = vsel %vm1922, %v1912, %v1641
      %v1946 = vsel %vm1922, %v1913, %v1643
      %v1947 = vsel %vm1922, %v1914, %v1645
      %v1948 = vsel %vm1922, %v1915, %v1647
      %v1949 = vsel %vm1922, %v1916, %v1649
      %v1950 = vsel %vm1922, %v1917, %v1651
      %v1951 = vsel %vm1922, %v1918, %v1653
      %v1952 = vsel %vm1922, %v1919, %v1655
      %v1953 = vsel %vm1922, %v1920, %v1657
      %v1954 = vsel %vm1922, %v1921, %v1659
      %v1955 = vld [vmem:[%s1] sm:$0xff]
      %v1956 = vld [vmem:[%s1 + $0x8] sm:$0xff]
      %v1957 = vld [vmem:[%s1 + $0x10] sm:$0xff]
      %v1958 = vld [vmem:[%s1 + $0x18] sm:$0xff]
      %v1959 = vld [vmem:[%s1 + $0x20] sm:$0xff]
      %v1960 = vld [vmem:[%s1 + $0x28] sm:$0xff]
      %v1961 = vld [vmem:[%s1 + $0x30] sm:$0xff]
      %v1962 = vld [vmem:[%s1 + $0x38] sm:$0xff]
      %v1963 = vld [vmem:[%s1 + $0x40] sm:$0xff]
      %v1964 = vld [vmem:[%s2] sm:$0x1]
      %v1966 = vlaneseq
      %v1967 = vshrl.u32 %v1966, 7
      %v1968 = vsub.s32 0, %v1967
      %v1969 = vrot.slane %v1964, %v1968
      %vm1971 = vcmask 588800
      %v1973 = vsel %vm1971, %v1923, 0
      %v1976 = vsel %vm1971, %v1924, 0
      %v1979 = vsel %vm1971, %v1925, 0
      %v1982 = vsel %vm1971, %v1926, 0
      %v1985 = vsel %vm1971, %v1927, 0
      %v1988 = vsel %vm1971, %v1928, 0
      %v1991 = vsel %vm1971, %v1929, 0
      %v1994 = vsel %vm1971, %v1930, 0
      %v1997 = vsel %vm1971, %v1931, 0
      %v2000 = vsel %vm1971, %v1932, 0
      %v2003 = vsel %vm1971, %v1933, 0
      %v2006 = vsel %vm1971, %v1934, 0
      %v2009 = vsel %vm1971, %v1935, 0
      %v2012 = vsel %vm1971, %v1936, 0
      %v2015 = vsel %vm1971, %v1937, 0
      %v2018 = vsel %vm1971, %v1938, 0
      %v2021 = vsel %vm1971, %v1939, 0
      %v2024 = vsel %vm1971, %v1940, 0
      %v2027 = vsel %vm1971, %v1941, 0
      %v2030 = vsel %vm1971, %v1942, 0
      %v2033 = vsel %vm1971, %v1943, 0
      %v2036 = vsel %vm1971, %v1944, 0
      %v2039 = vsel %vm1971, %v1945, 0
      %v2042 = vsel %vm1971, %v1946, 0
      %v2045 = vsel %vm1971, %v1947, 0
      %v2048 = vsel %vm1971, %v1948, 0
      %v2051 = vsel %vm1971, %v1949, 0
      %v2054 = vsel %vm1971, %v1950, 0
      %v2057 = vsel %vm1971, %v1951, 0
      %v2060 = vsel %vm1971, %v1952, 0
      %v2063 = vsel %vm1971, %v1953, 0
      %v2066 = vsel %vm1971, %v1954, 0
      %2068 = vmatprep.subr.mxu0 0.0
      %2069 = vmatpush1.msra.mxu0 %v1955
      %2070 = vmatprep.subr.mxu0 0.0
      %2071 = vmatpush1.msra.mxu0 %v1956
      %2072 = vmatprep.subr.mxu0 0.0
      %2073 = vmatpush1.msra.mxu0 %v1957
      %2074 = vmatprep.subr.mxu0 0.0
      %2075 = vmatpush1.msra.mxu0 %v1958
      %2076 = vmatprep.subr.mxu0 0.0
      %2077 = vmatpush1.msra.mxu0 %v1959
      %2078 = vmatprep.subr.mxu0 0.0
      %2079 = vmatpush1.msra.mxu0 %v1960
      %2080 = vmatprep.subr.mxu0 0.0
      %2081 = vmatpush1.msra.mxu0 %v1961
      %2082 = vmatprep.subr.mxu0 0.0
      %2083 = vmatpush1.msra.mxu0 %v1962
      %2084 = vmatprep.subr.mxu0 0.0
      %2085 = vmatpush1.msra.mxu0 %v1963
      %2086 = vmatprep.subr.mxu0 0.0
      %2087 = vmatpush1.msra.mxu0 0.0
      %2088 = vmatprep.subr.mxu0 0.0
      %2089 = vmatpush1.msra.mxu0 0.0
      %2090 = vmatprep.subr.mxu0 0.0
      %2091 = vmatpush1.msra.mxu0 0.0
      %2092 = vmatprep.subr.mxu0 0.0
      %2093 = vmatpush1.msra.mxu0 0.0
      %2094 = vmatprep.subr.mxu0 0.0
      %2095 = vmatpush1.msra.mxu0 0.0
      %2096 = vmatprep.subr.mxu0 0.0
      %2097 = vmatpush1.msra.mxu0 0.0
      %2098 = vmatprep.subr.mxu0 0.0
      %2099 = vmatpush1.msra.mxu0 0.0
      %2100 = vmatprep.subr.mxu0 0.0
      %2101 = vmatpush1.msra.mxu0 0.0
      %2102 = vmatprep.subr.mxu0 0.0
      %2103 = vmatpush1.msra.mxu0 0.0
      %2104 = vmatprep.subr.mxu0 0.0
      %2105 = vmatpush1.msra.mxu0 0.0
      %2106 = vmatprep.subr.mxu0 0.0
      %2107 = vmatpush1.msra.mxu0 0.0
      %2108 = vmatprep.subr.mxu0 0.0
      %2109 = vmatpush1.msra.mxu0 0.0
      %2110 = vmatprep.subr.mxu0 0.0
      %2111 = vmatpush1.msra.mxu0 0.0
      %2112 = vmatprep.subr.mxu0 0.0
      %2113 = vmatpush1.msra.mxu0 0.0
      %2114 = vmatprep.subr.mxu0 0.0
      %2115 = vmatpush1.msra.mxu0 0.0
      %2116 = vmatprep.subr.mxu0 0.0
      %2117 = vmatpush1.msra.mxu0 0.0
      %2118 = vmatprep.subr.mxu0 0.0
      %2119 = vmatpush1.msra.mxu0 0.0
      %2120 = vmatprep.subr.mxu0 0.0
      %2121 = vmatpush1.msra.mxu0 0.0
      %2122 = vmatprep.subr.mxu0 0.0
      %2123 = vmatpush1.msra.mxu0 0.0
      %2124 = vmatprep.subr.mxu0 0.0
      %2125 = vmatpush1.msra.mxu0 0.0
      %2126 = vmatprep.subr.mxu0 0.0
      %2127 = vmatpush1.msra.mxu0 0.0
      %2128 = vmatprep.subr.mxu0 0.0
      %2129 = vmatpush1.msra.mxu0 0.0
      %2130 = vmatprep.subr.mxu0 0.0
      %2131 = vmatpush1.msra.mxu0 0.0
      %2132 = vmatprep.mubr.f32.mxu0 0.0
      %2133 = vmatmul.mubr.f32.gmra.mrb[0].mxu0 %v1973
      %v2134 = vpop.f32.mrb[0].mxu0
      %v2135 = vadd.f32 %v1969, %v2134
      %v2136 = vpop.f32.mrb[0].mxu0
      %2137 = vmatprep.mubr.f32.mxu0 0.0
      %2138 = vmatmul.mubr.f32.gmra.mrb[0].mxu0 %v1976
      %v2139 = vpop.f32.mrb[0].mxu0
      %v2140 = vadd.f32 %v1969, %v2139
      %v2141 = vpop.f32.mrb[0].mxu0
      %2142 = vmatprep.mubr.f32.mxu0 0.0
      %2143 = vmatmul.mubr.f32.gmra.mrb[0].mxu0 %v1979
      %v2144 = vpop.f32.mrb[0].mxu0
      %v2145 = vadd.f32 %v1969, %v2144
      %v2146 = vpop.f32.mrb[0].mxu0
      %2147 = vmatprep.mubr.f32.mxu0 0.0
      %2148 = vmatmul.mubr.f32.gmra.mrb[0].mxu0 %v1982
      %v2149 = vpop.f32.mrb[0].mxu0
      %v2150 = vadd.f32 %v1969, %v2149
      %v2151 = vpop.f32.mrb[0].mxu0
      %2152 = vmatprep.mubr.f32.mxu0 0.0
      %2153 = vmatmul.mubr.f32.gmra.mrb[0].mxu0 %v1985
      %v2154 = vpop.f32.mrb[0].mxu0
      %v2155 = vadd.f32 %v1969, %v2154
      %v2156 = vpop.f32.mrb[0].mxu0
      %2157 = vmatprep.mubr.f32.mxu0 0.0
      %2158 = vmatmul.mubr.f32.gmra.mrb[0].mxu0 %v1988
      %v2159 = vpop.f32.mrb[0].mxu0
      %v2160 = vadd.f32 %v1969, %v2159
      %v2161 = vpop.f32.mrb[0].mxu0
      %2162 = vmatprep.mubr.f32.mxu0 0.0
      %2163 = vmatmul.mubr.f32.gmra.mrb[0].mxu0 %v1991
      %v2164 = vpop.f32.mrb[0].mxu0
      %v2165 = vadd.f32 %v1969, %v2164
      %v2166 = vpop.f32.mrb[0].mxu0
      %2167 = vmatprep.mubr.f32.mxu0 0.0
      %2168 = vmatmul.mubr.f32.gmra.mrb[0].mxu0 %v1994
      %v2169 = vpop.f32.mrb[0].mxu0
      %v2170 = vadd.f32 %v1969, %v2169
      %v2171 = vpop.f32.mrb[0].mxu0
      %2172 = vmatprep.mubr.f32.mxu0 0.0
      %2173 = vmatmul.mubr.f32.gmra.mrb[0].mxu0 %v1997
      %v2174 = vpop.f32.mrb[0].mxu0
      %v2175 = vadd.f32 %v1969, %v2174
      %v2176 = vpop.f32.mrb[0].mxu0
      %2177 = vmatprep.mubr.f32.mxu0 0.0
      %2178 = vmatmul.mubr.f32.gmra.mrb[0].mxu0 %v2000
      %v2179 = vpop.f32.mrb[0].mxu0
      %v2180 = vadd.f32 %v1969, %v2179
      %v2181 = vpop.f32.mrb[0].mxu0
      %2182 = vmatprep.mubr.f32.mxu0 0.0
      %2183 = vmatmul.mubr.f32.gmra.mrb[0].mxu0 %v2003
      %v2184 = vpop.f32.mrb[0].mxu0
      %v2185 = vadd.f32 %v1969, %v2184
      %v2186 = vpop.f32.mrb[0].mxu0
      %2187 = vmatprep.mubr.f32.mxu0 0.0
      %2188 = vmatmul.mubr.f32.gmra.mrb[0].mxu0 %v2006
      %v2189 = vpop.f32.mrb[0].mxu0
      %v2190 = vadd.f32 %v1969, %v2189
      %v2191 = vpop.f32.mrb[0].mxu0
      %2192 = vmatprep.mubr.f32.mxu0 0.0
      %2193 = vmatmul.mubr.f32.gmra.mrb[0].mxu0 %v2009
      %v2194 = vpop.f32.mrb[0].mxu0
      %v2195 = vadd.f32 %v1969, %v2194
      %v2196 = vpop.f32.mrb[0].mxu0
      %2197 = vmatprep.mubr.f32.mxu0 0.0
      %2198 = vmatmul.mubr.f32.gmra.mrb[0].mxu0 %v2012
      %v2199 = vpop.f32.mrb[0].mxu0
      %v2200 = vadd.f32 %v1969, %v2199
      %v2201 = vpop.f32.mrb[0].mxu0
      %2202 = vmatprep.mubr.f32.mxu0 0.0
      %2203 = vmatmul.mubr.f32.gmra.mrb[0].mxu0 %v2015
      %v2204 = vpop.f32.mrb[0].mxu0
      %v2205 = vadd.f32 %v1969, %v2204
      %v2206 = vpop.f32.mrb[0].mxu0
      %2207 = vmatprep.mubr.f32.mxu0 0.0
      %2208 = vmatmul.mubr.f32.gmra.mrb[0].mxu0 %v2018
      %v2209 = vpop.f32.mrb[0].mxu0
      %v2210 = vadd.f32 %v1969, %v2209
      %v2211 = vpop.f32.mrb[0].mxu0
      %2212 = vmatprep.mubr.f32.mxu0 0.0
      %2213 = vmatmul.mubr.f32.gmra.mrb[0].mxu0 %v2021
      %v2214 = vpop.f32.mrb[0].mxu0
      %v2215 = vadd.f32 %v1969, %v2214
      %v2216 = vpop.f32.mrb[0].mxu0
      %2217 = vmatprep.mubr.f32.mxu0 0.0
      %2218 = vmatmul.mubr.f32.gmra.mrb[0].mxu0 %v2024
      %v2219 = vpop.f32.mrb[0].mxu0
      %v2220 = vadd.f32 %v1969, %v2219
      %v2221 = vpop.f32.mrb[0].mxu0
      %2222 = vmatprep.mubr.f32.mxu0 0.0
      %2223 = vmatmul.mubr.f32.gmra.mrb[0].mxu0 %v2027
      %v2224 = vpop.f32.mrb[0].mxu0
      %v2225 = vadd.f32 %v1969, %v2224
      %v2226 = vpop.f32.mrb[0].mxu0
      %2227 = vmatprep.mubr.f32.mxu0 0.0
      %2228 = vmatmul.mubr.f32.gmra.mrb[0].mxu0 %v2030
      %v2229 = vpop.f32.mrb[0].mxu0
      %v2230 = vadd.f32 %v1969, %v2229
      %v2231 = vpop.f32.mrb[0].mxu0
      %2232 = vmatprep.mubr.f32.mxu0 0.0
      %2233 = vmatmul.mubr.f32.gmra.mrb[0].mxu0 %v2033
      %v2234 = vpop.f32.mrb[0].mxu0
      %v2235 = vadd.f32 %v1969, %v2234
      %v2236 = vpop.f32.mrb[0].mxu0
      %2237 = vmatprep.mubr.f32.mxu0 0.0
      %2238 = vmatmul.mubr.f32.gmra.mrb[0].mxu0 %v2036
      %v2239 = vpop.f32.mrb[0].mxu0
      %v2240 = vadd.f32 %v1969, %v2239
      %v2241 = vpop.f32.mrb[0].mxu0
      %2242 = vmatprep.mubr.f32.mxu0 0.0
      %2243 = vmatmul.mubr.f32.gmra.mrb[0].mxu0 %v2039
      %v2244 = vpop.f32.mrb[0].mxu0
      %v2245 = vadd.f32 %v1969, %v2244
      %v2246 = vpop.f32.mrb[0].mxu0
      %2247 = vmatprep.mubr.f32.mxu0 0.0
      %2248 = vmatmul.mubr.f32.gmra.mrb[0].mxu0 %v2042
      %v2249 = vpop.f32.mrb[0].mxu0
      %v2250 = vadd.f32 %v1969, %v2249
      %v2251 = vpop.f32.mrb[0].mxu0
      %2252 = vmatprep.mubr.f32.mxu0 0.0
      %2253 = vmatmul.mubr.f32.gmra.mrb[0].mxu0 %v2045
      %v2254 = vpop.f32.mrb[0].mxu0
      %v2255 = vadd.f32 %v1969, %v2254
      %v2256 = vpop.f32.mrb[0].mxu0
      %2257 = vmatprep.mubr.f32.mxu0 0.0
      %2258 = vmatmul.mubr.f32.gmra.mrb[0].mxu0 %v2048
      %v2259 = vpop.f32.mrb[0].mxu0
      %v2260 = vadd.f32 %v1969, %v2259
      %v2261 = vpop.f32.mrb[0].mxu0
      %2262 = vmatprep.mubr.f32.mxu0 0.0
      %2263 = vmatmul.mubr.f32.gmra.mrb[0].mxu0 %v2051
      %v2264 = vpop.f32.mrb[0].mxu0
      %v2265 = vadd.f32 %v1969, %v2264
      %v2266 = vpop.f32.mrb[0].mxu0
      %2267 = vmatprep.mubr.f32.mxu0 0.0
      %2268 = vmatmul.mubr.f32.gmra.mrb[0].mxu0 %v2054
      %v2269 = vpop.f32.mrb[0].mxu0
      %v2270 = vadd.f32 %v1969, %v2269
      %v2271 = vpop.f32.mrb[0].mxu0
      %2272 = vmatprep.mubr.f32.mxu0 0.0
      %2273 = vmatmul.mubr.f32.gmra.mrb[0].mxu0 %v2057
      %v2274 = vpop.f32.mrb[0].mxu0
      %v2275 = vadd.f32 %v1969, %v2274
      %v2276 = vpop.f32.mrb[0].mxu0
      %2277 = vmatprep.mubr.f32.mxu0 0.0
      %2278 = vmatmul.mubr.f32.gmra.mrb[0].mxu0 %v2060
      %v2279 = vpop.f32.mrb[0].mxu0
      %v2280 = vadd.f32 %v1969, %v2279
      %v2281 = vpop.f32.mrb[0].mxu0
      %2282 = vmatprep.mubr.f32.mxu0 0.0
      %2283 = vmatmul.mubr.f32.gmra.mrb[0].mxu0 %v2063
      %v2284 = vpop.f32.mrb[0].mxu0
      %v2285 = vadd.f32 %v1969, %v2284
      %v2286 = vpop.f32.mrb[0].mxu0
      %2287 = vmatprep.mubr.f32.mxu0 0.0
      %2288 = vmatmul.mubr.f32.gmra.mrb[0].mxu0 %v2066
      %v2289 = vpop.f32.mrb[0].mxu0
      %v2290 = vadd.f32 %v1969, %v2289
      %v2291 = vpop.f32.mrb[0].mxu0
      %2292 = vdwg.mxu0
      %v2293 = vmax.f32 %v2135, 0.0
      %v2294 = vmax.f32 %v2140, 0.0
      %v2295 = vmax.f32 %v2145, 0.0
      %v2296 = vmax.f32 %v2150, 0.0
      %v2297 = vmax.f32 %v2155, 0.0
      %v2298 = vmax.f32 %v2160, 0.0
      %v2299 = vmax.f32 %v2165, 0.0
      %v2300 = vmax.f32 %v2170, 0.0
      %v2301 = vmax.f32 %v2175, 0.0
      %v2302 = vmax.f32 %v2180, 0.0
      %v2303 = vmax.f32 %v2185, 0.0
      %v2304 = vmax.f32 %v2190, 0.0
      %v2305 = vmax.f32 %v2195, 0.0
      %v2306 = vmax.f32 %v2200, 0.0
      %v2307 = vmax.f32 %v2205, 0.0
      %v2308 = vmax.f32 %v2210, 0.0
      %v2309 = vmax.f32 %v2215, 0.0
      %v2310 = vmax.f32 %v2220, 0.0
      %v2311 = vmax.f32 %v2225, 0.0
      %v2312 = vmax.f32 %v2230, 0.0
      %v2313 = vmax.f32 %v2235, 0.0
      %v2314 = vmax.f32 %v2240, 0.0
      %v2315 = vmax.f32 %v2245, 0.0
      %v2316 = vmax.f32 %v2250, 0.0
      %v2317 = vmax.f32 %v2255, 0.0
      %v2318 = vmax.f32 %v2260, 0.0
      %v2319 = vmax.f32 %v2265, 0.0
      %v2320 = vmax.f32 %v2270, 0.0
      %v2321 = vmax.f32 %v2275, 0.0
      %v2322 = vmax.f32 %v2280, 0.0
      %v2323 = vmax.f32 %v2285, 0.0
      %v2324 = vmax.f32 %v2290, 0.0
      %s2325 = scalar_lea.vmem [#allocation3], 24
      %2326 = vst.msk [vmem:[%s2325 + $0x1] sm:$0xff] %vm225, %v2293
      %2327 = vst.msk [vmem:[%s2325 + $0x9] sm:$0xff] %vm225, %v2294
      %2328 = vst.msk [vmem:[%s2325 + $0x19] sm:$0xff] %vm225, %v2295
      %2329 = vst.msk [vmem:[%s2325 + $0x21] sm:$0xff] %vm225, %v2296
      %2330 = vst.msk [vmem:[%s2325 + $0x31] sm:$0xff] %vm225, %v2297
      %2331 = vst.msk [vmem:[%s2325 + $0x39] sm:$0xff] %vm225, %v2298
      %2332 = vst.msk [vmem:[%s2325 + $0x49] sm:$0xff] %vm225, %v2299
      %2333 = vst.msk [vmem:[%s2325 + $0x51] sm:$0xff] %vm225, %v2300
      %2334 = vst.msk [vmem:[%s2325 + $0x61] sm:$0xff] %vm225, %v2301
      %2335 = vst.msk [vmem:[%s2325 + $0x69] sm:$0xff] %vm225, %v2302
      %2336 = vst.msk [vmem:[%s2325 + $0x79] sm:$0xff] %vm225, %v2303
      %2337 = vst.msk [vmem:[%s2325 + $0x81] sm:$0xff] %vm225, %v2304
      %2338 = vst.msk [vmem:[%s2325 + $0x91] sm:$0xff] %vm225, %v2305
      %2339 = vst.msk [vmem:[%s2325 + $0x99] sm:$0xff] %vm225, %v2306
      %2340 = vst.msk [vmem:[%s2325 + $0xa9] sm:$0xff] %vm225, %v2307
      %2341 = vst.msk [vmem:[%s2325 + $0xb1] sm:$0xff] %vm225, %v2308
      %2342 = vst.msk [vmem:[%s2325 + $0xc1] sm:$0xff] %vm225, %v2309
      %2343 = vst.msk [vmem:[%s2325 + $0xc9] sm:$0xff] %vm225, %v2310
      %2344 = vst.msk [vmem:[%s2325 + $0xd9] sm:$0xff] %vm225, %v2311
      %2345 = vst.msk [vmem:[%s2325 + $0xe1] sm:$0xff] %vm225, %v2312
      %2346 = vst.msk [vmem:[%s2325 + $0xf1] sm:$0xff] %vm225, %v2313
      %2347 = vst.msk [vmem:[%s2325 + $0xf9] sm:$0xff] %vm225, %v2314
      %2348 = vst.msk [vmem:[%s2325 + $0x109] sm:$0xff] %vm225, %v2315
      %2349 = vst.msk [vmem:[%s2325 + $0x111] sm:$0xff] %vm225, %v2316
      %2350 = vst.msk [vmem:[%s2325 + $0x121] sm:$0xff] %vm225, %v2317
      %2351 = vst.msk [vmem:[%s2325 + $0x129] sm:$0xff] %vm225, %v2318
      %2352 = vst.msk [vmem:[%s2325 + $0x139] sm:$0xff] %vm225, %v2319
      %2353 = vst.msk [vmem:[%s2325 + $0x141] sm:$0xff] %vm225, %v2320
      %2354 = vst.msk [vmem:[%s2325 + $0x151] sm:$0xff] %vm225, %v2321
      %2355 = vst.msk [vmem:[%s2325 + $0x159] sm:$0xff] %vm225, %v2322
      %2356 = vst.msk [vmem:[%s2325 + $0x169] sm:$0xff] %vm225, %v2323
      %2357 = vst.msk [vmem:[%s2325 + $0x171] sm:$0xff] %vm225, %v2324
      %v2358 = vld [vmem:[#allocation3] sm:$0xff]
      %v2359 = vld [vmem:[#allocation3 + $0x8] sm:$0xff]
      %v2360 = vld [vmem:[#allocation3 + $0x18] sm:$0xff]
      %v2361 = vld [vmem:[#allocation3 + $0x20] sm:$0xff]
      %v2362 = vld [vmem:[#allocation3 + $0x30] sm:$0xff]
      %v2363 = vld [vmem:[#allocation3 + $0x38] sm:$0xff]
      %v2364 = vld [vmem:[#allocation3 + $0x48] sm:$0xff]
      %v2365 = vld [vmem:[#allocation3 + $0x50] sm:$0xff]
      %v2366 = vld [vmem:[#allocation3 + $0x60] sm:$0xff]
      %v2367 = vld [vmem:[#allocation3 + $0x68] sm:$0xff]
      %v2368 = vld [vmem:[#allocation3 + $0x78] sm:$0xff]
      %v2369 = vld [vmem:[#allocation3 + $0x80] sm:$0xff]
      %v2370 = vld [vmem:[#allocation3 + $0x90] sm:$0xff]
      %v2371 = vld [vmem:[#allocation3 + $0x98] sm:$0xff]
      %v2372 = vld [vmem:[#allocation3 + $0xa8] sm:$0xff]
      %v2373 = vld [vmem:[#allocation3 + $0xb0] sm:$0xff]
      %v2374 = vld [vmem:[#allocation3 + $0xc0] sm:$0xff]
      %v2375 = vld [vmem:[#allocation3 + $0xc8] sm:$0xff]
      %v2376 = vld [vmem:[#allocation3 + $0xd8] sm:$0xff]
      %v2377 = vld [vmem:[#allocation3 + $0xe0] sm:$0xff]
      %v2378 = vld [vmem:[#allocation3 + $0xf0] sm:$0xff]
      %v2379 = vld [vmem:[#allocation3 + $0xf8] sm:$0xff]
      %v2380 = vld [vmem:[#allocation3 + $0x108] sm:$0xff]
      %v2381 = vld [vmem:[#allocation3 + $0x110] sm:$0xff]
      %v2382 = vld [vmem:[#allocation3 + $0x120] sm:$0xff]
      %v2383 = vld [vmem:[#allocation3 + $0x128] sm:$0xff]
      %v2384 = vld [vmem:[#allocation3 + $0x138] sm:$0xff]
      %v2385 = vld [vmem:[#allocation3 + $0x140] sm:$0xff]
      %v2386 = vld [vmem:[#allocation3 + $0x150] sm:$0xff]
      %v2387 = vld [vmem:[#allocation3 + $0x158] sm:$0xff]
      %v2388 = vld [vmem:[#allocation3 + $0x168] sm:$0xff]
      %v2389 = vld [vmem:[#allocation3 + $0x170] sm:$0xff]
      %v2390 = vld [vmem:[#allocation3 + $0x1] sm:$0xff]
      %v2391 = vld [vmem:[#allocation3 + $0x9] sm:$0xff]
      %v2392 = vld [vmem:[#allocation3 + $0x19] sm:$0xff]
      %v2393 = vld [vmem:[#allocation3 + $0x21] sm:$0xff]
      %v2394 = vld [vmem:[#allocation3 + $0x31] sm:$0xff]
      %v2395 = vld [vmem:[#allocation3 + $0x39] sm:$0xff]
      %v2396 = vld [vmem:[#allocation3 + $0x49] sm:$0xff]
      %v2397 = vld [vmem:[#allocation3 + $0x51] sm:$0xff]
      %v2398 = vld [vmem:[#allocation3 + $0x61] sm:$0xff]
      %v2399 = vld [vmem:[#allocation3 + $0x69] sm:$0xff]
      %v2400 = vld [vmem:[#allocation3 + $0x79] sm:$0xff]
      %v2401 = vld [vmem:[#allocation3 + $0x81] sm:$0xff]
      %v2402 = vld [vmem:[#allocation3 + $0x91] sm:$0xff]
      %v2403 = vld [vmem:[#allocation3 + $0x99] sm:$0xff]
      %v2404 = vld [vmem:[#allocation3 + $0xa9] sm:$0xff]
      %v2405 = vld [vmem:[#allocation3 + $0xb1] sm:$0xff]
      %v2406 = vld [vmem:[#allocation3 + $0xc1] sm:$0xff]
      %v2407 = vld [vmem:[#allocation3 + $0xc9] sm:$0xff]
      %v2408 = vld [vmem:[#allocation3 + $0xd9] sm:$0xff]
      %v2409 = vld [vmem:[#allocation3 + $0xe1] sm:$0xff]
      %v2410 = vld [vmem:[#allocation3 + $0xf1] sm:$0xff]
      %v2411 = vld [vmem:[#allocation3 + $0xf9] sm:$0xff]
      %v2412 = vld [vmem:[#allocation3 + $0x109] sm:$0xff]
      %v2413 = vld [vmem:[#allocation3 + $0x111] sm:$0xff]
      %v2414 = vld [vmem:[#allocation3 + $0x121] sm:$0xff]
      %v2415 = vld [vmem:[#allocation3 + $0x129] sm:$0xff]
      %v2416 = vld [vmem:[#allocation3 + $0x139] sm:$0xff]
      %v2417 = vld [vmem:[#allocation3 + $0x141] sm:$0xff]
      %v2418 = vld [vmem:[#allocation3 + $0x151] sm:$0xff]
      %v2419 = vld [vmem:[#allocation3 + $0x159] sm:$0xff]
      %v2420 = vld [vmem:[#allocation3 + $0x169] sm:$0xff]
      %v2421 = vld [vmem:[#allocation3 + $0x171] sm:$0xff]
      %v2422 = vld [vmem:[#allocation3 + $0x2] sm:$0xff]
      %v2423 = vld [vmem:[#allocation3 + $0xa] sm:$0xff]
      %v2424 = vld [vmem:[#allocation3 + $0x1a] sm:$0xff]
      %v2425 = vld [vmem:[#allocation3 + $0x22] sm:$0xff]
      %v2426 = vld [vmem:[#allocation3 + $0x32] sm:$0xff]
      %v2427 = vld [vmem:[#allocation3 + $0x3a] sm:$0xff]
      %v2428 = vld [vmem:[#allocation3 + $0x4a] sm:$0xff]
      %v2429 = vld [vmem:[#allocation3 + $0x52] sm:$0xff]
      %v2430 = vld [vmem:[#allocation3 + $0x62] sm:$0xff]
      %v2431 = vld [vmem:[#allocation3 + $0x6a] sm:$0xff]
      %v2432 = vld [vmem:[#allocation3 + $0x7a] sm:$0xff]
      %v2433 = vld [vmem:[#allocation3 + $0x82] sm:$0xff]
      %v2434 = vld [vmem:[#allocation3 + $0x92] sm:$0xff]
      %v2435 = vld [vmem:[#allocation3 + $0x9a] sm:$0xff]
      %v2436 = vld [vmem:[#allocation3 + $0xaa] sm:$0xff]
      %v2437 = vld [vmem:[#allocation3 + $0xb2] sm:$0xff]
      %v2438 = vld [vmem:[#allocation3 + $0xc2] sm:$0xff]
      %v2439 = vld [vmem:[#allocation3 + $0xca] sm:$0xff]
      %v2440 = vld [vmem:[#allocation3 + $0xda] sm:$0xff]
      %v2441 = vld [vmem:[#allocation3 + $0xe2] sm:$0xff]
      %v2442 = vld [vmem:[#allocation3 + $0xf2] sm:$0xff]
      %v2443 = vld [vmem:[#allocation3 + $0xfa] sm:$0xff]
      %v2444 = vld [vmem:[#allocation3 + $0x10a] sm:$0xff]
      %v2445 = vld [vmem:[#allocation3 + $0x112] sm:$0xff]
      %v2446 = vld [vmem:[#allocation3 + $0x122] sm:$0xff]
      %v2447 = vld [vmem:[#allocation3 + $0x12a] sm:$0xff]
      %v2448 = vld [vmem:[#allocation3 + $0x13a] sm:$0xff]
      %v2449 = vld [vmem:[#allocation3 + $0x142] sm:$0xff]
      %v2450 = vld [vmem:[#allocation3 + $0x152] sm:$0xff]
      %v2451 = vld [vmem:[#allocation3 + $0x15a] sm:$0xff]
      %v2452 = vld [vmem:[#allocation3 + $0x16a] sm:$0xff]
      %v2453 = vld [vmem:[#allocation3 + $0x172] sm:$0xff]
      %v2454 = vld [vmem:[%s2325] sm:$0xff]
      %v2455 = vld [vmem:[%s2325 + $0x8] sm:$0xff]
      %v2456 = vld [vmem:[%s2325 + $0x18] sm:$0xff]
      %v2457 = vld [vmem:[%s2325 + $0x20] sm:$0xff]
      %v2458 = vld [vmem:[%s2325 + $0x30] sm:$0xff]
      %v2459 = vld [vmem:[%s2325 + $0x38] sm:$0xff]
      %v2460 = vld [vmem:[%s2325 + $0x48] sm:$0xff]
      %v2461 = vld [vmem:[%s2325 + $0x50] sm:$0xff]
      %v2462 = vld [vmem:[%s2325 + $0x60] sm:$0xff]
      %v2463 = vld [vmem:[%s2325 + $0x68] sm:$0xff]
      %v2464 = vld [vmem:[%s2325 + $0x78] sm:$0xff]
      %v2465 = vld [vmem:[%s2325 + $0x80] sm:$0xff]
      %v2466 = vld [vmem:[%s2325 + $0x90] sm:$0xff]
      %v2467 = vld [vmem:[%s2325 + $0x98] sm:$0xff]
      %v2468 = vld [vmem:[%s2325 + $0xa8] sm:$0xff]
      %v2469 = vld [vmem:[%s2325 + $0xb0] sm:$0xff]
      %v2470 = vld [vmem:[%s2325 + $0xc0] sm:$0xff]
      %v2471 = vld [vmem:[%s2325 + $0xc8] sm:$0xff]
      %v2472 = vld [vmem:[%s2325 + $0xd8] sm:$0xff]
      %v2473 = vld [vmem:[%s2325 + $0xe0] sm:$0xff]
      %v2474 = vld [vmem:[%s2325 + $0xf0] sm:$0xff]
      %v2475 = vld [vmem:[%s2325 + $0xf8] sm:$0xff]
      %v2476 = vld [vmem:[%s2325 + $0x108] sm:$0xff]
      %v2477 = vld [vmem:[%s2325 + $0x110] sm:$0xff]
      %v2478 = vld [vmem:[%s2325 + $0x120] sm:$0xff]
      %v2479 = vld [vmem:[%s2325 + $0x128] sm:$0xff]
      %v2480 = vld [vmem:[%s2325 + $0x138] sm:$0xff]
      %v2481 = vld [vmem:[%s2325 + $0x140] sm:$0xff]
      %v2482 = vld [vmem:[%s2325 + $0x150] sm:$0xff]
      %v2483 = vld [vmem:[%s2325 + $0x158] sm:$0xff]
      %v2484 = vld [vmem:[%s2325 + $0x168] sm:$0xff]
      %v2485 = vld [vmem:[%s2325 + $0x170] sm:$0xff]
      %v2486 = vld [vmem:[%s2325 + $0x1] sm:$0xff]
      %v2487 = vld [vmem:[%s2325 + $0x9] sm:$0xff]
      %v2488 = vld [vmem:[%s2325 + $0x19] sm:$0xff]
      %v2489 = vld [vmem:[%s2325 + $0x21] sm:$0xff]
      %v2490 = vld [vmem:[%s2325 + $0x31] sm:$0xff]
      %v2491 = vld [vmem:[%s2325 + $0x39] sm:$0xff]
      %v2492 = vld [vmem:[%s2325 + $0x49] sm:$0xff]
      %v2493 = vld [vmem:[%s2325 + $0x51] sm:$0xff]
      %v2494 = vld [vmem:[%s2325 + $0x61] sm:$0xff]
      %v2495 = vld [vmem:[%s2325 + $0x69] sm:$0xff]
      %v2496 = vld [vmem:[%s2325 + $0x79] sm:$0xff]
      %v2497 = vld [vmem:[%s2325 + $0x81] sm:$0xff]
      %v2498 = vld [vmem:[%s2325 + $0x91] sm:$0xff]
      %v2499 = vld [vmem:[%s2325 + $0x99] sm:$0xff]
      %v2500 = vld [vmem:[%s2325 + $0xa9] sm:$0xff]
      %v2501 = vld [vmem:[%s2325 + $0xb1] sm:$0xff]
      %v2502 = vld [vmem:[%s2325 + $0xc1] sm:$0xff]
      %v2503 = vld [vmem:[%s2325 + $0xc9] sm:$0xff]
      %v2504 = vld [vmem:[%s2325 + $0xd9] sm:$0xff]
      %v2505 = vld [vmem:[%s2325 + $0xe1] sm:$0xff]
      %v2506 = vld [vmem:[%s2325 + $0xf1] sm:$0xff]
      %v2507 = vld [vmem:[%s2325 + $0xf9] sm:$0xff]
      %v2508 = vld [vmem:[%s2325 + $0x109] sm:$0xff]
      %v2509 = vld [vmem:[%s2325 + $0x111] sm:$0xff]
      %v2510 = vld [vmem:[%s2325 + $0x121] sm:$0xff]
      %v2511 = vld [vmem:[%s2325 + $0x129] sm:$0xff]
      %v2512 = vld [vmem:[%s2325 + $0x139] sm:$0xff]
      %v2513 = vld [vmem:[%s2325 + $0x141] sm:$0xff]
      %v2514 = vld [vmem:[%s2325 + $0x151] sm:$0xff]
      %v2515 = vld [vmem:[%s2325 + $0x159] sm:$0xff]
      %v2516 = vld [vmem:[%s2325 + $0x169] sm:$0xff]
      %v2517 = vld [vmem:[%s2325 + $0x171] sm:$0xff]
      %v2518 = vld [vmem:[%s2325 + $0x2] sm:$0xff]
      %v2519 = vld [vmem:[%s2325 + $0xa] sm:$0xff]
      %v2520 = vld [vmem:[%s2325 + $0x1a] sm:$0xff]
      %v2521 = vld [vmem:[%s2325 + $0x22] sm:$0xff]
      %v2522 = vld [vmem:[%s2325 + $0x32] sm:$0xff]
      %v2523 = vld [vmem:[%s2325 + $0x3a] sm:$0xff]
      %v2524 = vld [vmem:[%s2325 + $0x4a] sm:$0xff]
      %v2525 = vld [vmem:[%s2325 + $0x52] sm:$0xff]
      %v2526 = vld [vmem:[%s2325 + $0x62] sm:$0xff]
      %v2527 = vld [vmem:[%s2325 + $0x6a] sm:$0xff]
      %v2528 = vld [vmem:[%s2325 + $0x7a] sm:$0xff]
      %v2529 = vld [vmem:[%s2325 + $0x82] sm:$0xff]
      %v2530 = vld [vmem:[%s2325 + $0x92] sm:$0xff]
      %v2531 = vld [vmem:[%s2325 + $0x9a] sm:$0xff]
      %v2532 = vld [vmem:[%s2325 + $0xaa] sm:$0xff]
      %v2533 = vld [vmem:[%s2325 + $0xb2] sm:$0xff]
      %v2534 = vld [vmem:[%s2325 + $0xc2] sm:$0xff]
      %v2535 = vld [vmem:[%s2325 + $0xca] sm:$0xff]
      %v2536 = vld [vmem:[%s2325 + $0xda] sm:$0xff]
      %v2537 = vld [vmem:[%s2325 + $0xe2] sm:$0xff]
      %v2538 = vld [vmem:[%s2325 + $0xf2] sm:$0xff]
      %v2539 = vld [vmem:[%s2325 + $0xfa] sm:$0xff]
      %v2540 = vld [vmem:[%s2325 + $0x10a] sm:$0xff]
      %v2541 = vld [vmem:[%s2325 + $0x112] sm:$0xff]
      %v2542 = vld [vmem:[%s2325 + $0x122] sm:$0xff]
      %v2543 = vld [vmem:[%s2325 + $0x12a] sm:$0xff]
      %v2544 = vld [vmem:[%s2325 + $0x13a] sm:$0xff]
      %v2545 = vld [vmem:[%s2325 + $0x142] sm:$0xff]
      %v2546 = vld [vmem:[%s2325 + $0x152] sm:$0xff]
      %v2547 = vld [vmem:[%s2325 + $0x15a] sm:$0xff]
      %v2548 = vld [vmem:[%s2325 + $0x16a] sm:$0xff]
      %v2549 = vld [vmem:[%s2325 + $0x172] sm:$0xff]
      %s2550 = scalar_lea.vmem [#allocation3], 48
      %v2551 = vld [vmem:[%s2550] sm:$0xff]
      %v2552 = vld [vmem:[%s2550 + $0x8] sm:$0xff]
      %v2553 = vld [vmem:[%s2550 + $0x18] sm:$0xff]
      %v2554 = vld [vmem:[%s2550 + $0x20] sm:$0xff]
      %v2555 = vld [vmem:[%s2550 + $0x30] sm:$0xff]
      %v2556 = vld [vmem:[%s2550 + $0x38] sm:$0xff]
      %v2557 = vld [vmem:[%s2550 + $0x48] sm:$0xff]
      %v2558 = vld [vmem:[%s2550 + $0x50] sm:$0xff]
      %v2559 = vld [vmem:[%s2550 + $0x60] sm:$0xff]
      %v2560 = vld [vmem:[%s2550 + $0x68] sm:$0xff]
      %v2561 = vld [vmem:[%s2550 + $0x78] sm:$0xff]
      %v2562 = vld [vmem:[%s2550 + $0x80] sm:$0xff]
      %v2563 = vld [vmem:[%s2550 + $0x90] sm:$0xff]
      %v2564 = vld [vmem:[%s2550 + $0x98] sm:$0xff]
      %v2565 = vld [vmem:[%s2550 + $0xa8] sm:$0xff]
      %v2566 = vld [vmem:[%s2550 + $0xb0] sm:$0xff]
      %v2567 = vld [vmem:[%s2550 + $0xc0] sm:$0xff]
      %v2568 = vld [vmem:[%s2550 + $0xc8] sm:$0xff]
      %v2569 = vld [vmem:[%s2550 + $0xd8] sm:$0xff]
      %v2570 = vld [vmem:[%s2550 + $0xe0] sm:$0xff]
      %v2571 = vld [vmem:[%s2550 + $0xf0] sm:$0xff]
      %v2572 = vld [vmem:[%s2550 + $0xf8] sm:$0xff]
      %v2573 = vld [vmem:[%s2550 + $0x108] sm:$0xff]
      %v2574 = vld [vmem:[%s2550 + $0x110] sm:$0xff]
      %v2575 = vld [vmem:[%s2550 + $0x120] sm:$0xff]
      %v2576 = vld [vmem:[%s2550 + $0x128] sm:$0xff]
      %v2577 = vld [vmem:[%s2550 + $0x138] sm:$0xff]
      %v2578 = vld [vmem:[%s2550 + $0x140] sm:$0xff]
      %v2579 = vld [vmem:[%s2550 + $0x150] sm:$0xff]
      %v2580 = vld [vmem:[%s2550 + $0x158] sm:$0xff]
      %v2581 = vld [vmem:[%s2550 + $0x168] sm:$0xff]
      %v2582 = vld [vmem:[%s2550 + $0x170] sm:$0xff]
      %v2583 = vld [vmem:[%s2550 + $0x1] sm:$0xff]
      %v2584 = vld [vmem:[%s2550 + $0x9] sm:$0xff]
      %v2585 = vld [vmem:[%s2550 + $0x19] sm:$0xff]
      %v2586 = vld [vmem:[%s2550 + $0x21] sm:$0xff]
      %v2587 = vld [vmem:[%s2550 + $0x31] sm:$0xff]
      %v2588 = vld [vmem:[%s2550 + $0x39] sm:$0xff]
      %v2589 = vld [vmem:[%s2550 + $0x49] sm:$0xff]
      %v2590 = vld [vmem:[%s2550 + $0x51] sm:$0xff]
      %v2591 = vld [vmem:[%s2550 + $0x61] sm:$0xff]
      %v2592 = vld [vmem:[%s2550 + $0x69] sm:$0xff]
      %v2593 = vld [vmem:[%s2550 + $0x79] sm:$0xff]
      %v2594 = vld [vmem:[%s2550 + $0x81] sm:$0xff]
      %v2595 = vld [vmem:[%s2550 + $0x91] sm:$0xff]
      %v2596 = vld [vmem:[%s2550 + $0x99] sm:$0xff]
      %v2597 = vld [vmem:[%s2550 + $0xa9] sm:$0xff]
      %v2598 = vld [vmem:[%s2550 + $0xb1] sm:$0xff]
      %v2599 = vld [vmem:[%s2550 + $0xc1] sm:$0xff]
      %v2600 = vld [vmem:[%s2550 + $0xc9] sm:$0xff]
      %v2601 = vld [vmem:[%s2550 + $0xd9] sm:$0xff]
      %v2602 = vld [vmem:[%s2550 + $0xe1] sm:$0xff]
      %v2603 = vld [vmem:[%s2550 + $0xf1] sm:$0xff]
      %v2604 = vld [vmem:[%s2550 + $0xf9] sm:$0xff]
      %v2605 = vld [vmem:[%s2550 + $0x109] sm:$0xff]
      %v2606 = vld [vmem:[%s2550 + $0x111] sm:$0xff]
      %v2607 = vld [vmem:[%s2550 + $0x121] sm:$0xff]
      %v2608 = vld [vmem:[%s2550 + $0x129] sm:$0xff]
      %v2609 = vld [vmem:[%s2550 + $0x139] sm:$0xff]
      %v2610 = vld [vmem:[%s2550 + $0x141] sm:$0xff]
      %v2611 = vld [vmem:[%s2550 + $0x151] sm:$0xff]
      %v2612 = vld [vmem:[%s2550 + $0x159] sm:$0xff]
      %v2613 = vld [vmem:[%s2550 + $0x169] sm:$0xff]
      %v2614 = vld [vmem:[%s2550 + $0x171] sm:$0xff]
      %v2615 = vld [vmem:[%s2550 + $0x2] sm:$0xff]
      %v2616 = vld [vmem:[%s2550 + $0xa] sm:$0xff]
      %v2617 = vld [vmem:[%s2550 + $0x1a] sm:$0xff]
      %v2618 = vld [vmem:[%s2550 + $0x22] sm:$0xff]
      %v2619 = vld [vmem:[%s2550 + $0x32] sm:$0xff]
      %v2620 = vld [vmem:[%s2550 + $0x3a] sm:$0xff]
      %v2621 = vld [vmem:[%s2550 + $0x4a] sm:$0xff]
      %v2622 = vld [vmem:[%s2550 + $0x52] sm:$0xff]
      %v2623 = vld [vmem:[%s2550 + $0x62] sm:$0xff]
      %v2624 = vld [vmem:[%s2550 + $0x6a] sm:$0xff]
      %v2625 = vld [vmem:[%s2550 + $0x7a] sm:$0xff]
      %v2626 = vld [vmem:[%s2550 + $0x82] sm:$0xff]
      %v2627 = vld [vmem:[%s2550 + $0x92] sm:$0xff]
      %v2628 = vld [vmem:[%s2550 + $0x9a] sm:$0xff]
      %v2629 = vld [vmem:[%s2550 + $0xaa] sm:$0xff]
      %v2630 = vld [vmem:[%s2550 + $0xb2] sm:$0xff]
      %v2631 = vld [vmem:[%s2550 + $0xc2] sm:$0xff]
      %v2632 = vld [vmem:[%s2550 + $0xca] sm:$0xff]
      %v2633 = vld [vmem:[%s2550 + $0xda] sm:$0xff]
      %v2634 = vld [vmem:[%s2550 + $0xe2] sm:$0xff]
      %v2635 = vld [vmem:[%s2550 + $0xf2] sm:$0xff]
      %v2636 = vld [vmem:[%s2550 + $0xfa] sm:$0xff]
      %v2637 = vld [vmem:[%s2550 + $0x10a] sm:$0xff]
      %v2638 = vld [vmem:[%s2550 + $0x112] sm:$0xff]
      %v2639 = vld [vmem:[%s2550 + $0x122] sm:$0xff]
      %v2640 = vld [vmem:[%s2550 + $0x12a] sm:$0xff]
      %v2641 = vld [vmem:[%s2550 + $0x13a] sm:$0xff]
      %v2642 = vld [vmem:[%s2550 + $0x142] sm:$0xff]
      %v2643 = vld [vmem:[%s2550 + $0x152] sm:$0xff]
      %v2644 = vld [vmem:[%s2550 + $0x15a] sm:$0xff]
      %v2645 = vld [vmem:[%s2550 + $0x16a] sm:$0xff]
      %v2646 = vld [vmem:[%s2550 + $0x172] sm:$0xff]
      %2679 = vrot.lane.b32.xlu0 %v2390, 8
      %v2680 = vpop.permute.xlu0 %2679
      %2681 = vrot.lane.b32.xlu0 %v2391, 8
      %v2682 = vpop.permute.xlu0 %2681
      %2683 = vrot.lane.b32.xlu0 %v2392, 8
      %v2684 = vpop.permute.xlu0 %2683
      %2685 = vrot.lane.b32.xlu0 %v2393, 8
      %v2686 = vpop.permute.xlu0 %2685
      %2687 = vrot.lane.b32.xlu0 %v2394, 8
      %v2688 = vpop.permute.xlu0 %2687
      %2689 = vrot.lane.b32.xlu0 %v2395, 8
      %v2690 = vpop.permute.xlu0 %2689
      %2691 = vrot.lane.b32.xlu0 %v2396, 8
      %v2692 = vpop.permute.xlu0 %2691
      %2693 = vrot.lane.b32.xlu0 %v2397, 8
      %v2694 = vpop.permute.xlu0 %2693
      %2695 = vrot.lane.b32.xlu0 %v2398, 8
      %v2696 = vpop.permute.xlu0 %2695
      %2697 = vrot.lane.b32.xlu0 %v2399, 8
      %v2698 = vpop.permute.xlu0 %2697
      %2699 = vrot.lane.b32.xlu0 %v2400, 8
      %v2700 = vpop.permute.xlu0 %2699
      %2701 = vrot.lane.b32.xlu0 %v2401, 8
      %v2702 = vpop.permute.xlu0 %2701
      %2703 = vrot.lane.b32.xlu0 %v2402, 8
      %v2704 = vpop.permute.xlu0 %2703
      %2705 = vrot.lane.b32.xlu0 %v2403, 8
      %v2706 = vpop.permute.xlu0 %2705
      %2707 = vrot.lane.b32.xlu0 %v2404, 8
      %v2708 = vpop.permute.xlu0 %2707
      %2709 = vrot.lane.b32.xlu0 %v2405, 8
      %v2710 = vpop.permute.xlu0 %2709
      %2711 = vrot.lane.b32.xlu0 %v2406, 8
      %v2712 = vpop.permute.xlu0 %2711
      %2713 = vrot.lane.b32.xlu0 %v2407, 8
      %v2714 = vpop.permute.xlu0 %2713
      %2715 = vrot.lane.b32.xlu0 %v2408, 8
      %v2716 = vpop.permute.xlu0 %2715
      %2717 = vrot.lane.b32.xlu0 %v2409, 8
      %v2718 = vpop.permute.xlu0 %2717
      %2719 = vrot.lane.b32.xlu0 %v2410, 8
      %v2720 = vpop.permute.xlu0 %2719
      %2721 = vrot.lane.b32.xlu0 %v2411, 8
      %v2722 = vpop.permute.xlu0 %2721
      %2723 = vrot.lane.b32.xlu0 %v2412, 8
      %v2724 = vpop.permute.xlu0 %2723
      %2725 = vrot.lane.b32.xlu0 %v2413, 8
      %v2726 = vpop.permute.xlu0 %2725
      %2727 = vrot.lane.b32.xlu0 %v2414, 8
      %v2728 = vpop.permute.xlu0 %2727
      %2729 = vrot.lane.b32.xlu0 %v2415, 8
      %v2730 = vpop.permute.xlu0 %2729
      %2731 = vrot.lane.b32.xlu0 %v2416, 8
      %v2732 = vpop.permute.xlu0 %2731
      %2733 = vrot.lane.b32.xlu0 %v2417, 8
      %v2734 = vpop.permute.xlu0 %2733
      %2735 = vrot.lane.b32.xlu0 %v2418, 8
      %v2736 = vpop.permute.xlu0 %2735
      %2737 = vrot.lane.b32.xlu0 %v2419, 8
      %v2738 = vpop.permute.xlu0 %2737
      %2739 = vrot.lane.b32.xlu0 %v2420, 8
      %v2740 = vpop.permute.xlu0 %2739
      %2741 = vrot.lane.b32.xlu0 %v2421, 8
      %v2742 = vpop.permute.xlu0 %2741
      %2807 = vrot.lane.b32.xlu0 %v2422, 16
      %v2808 = vpop.permute.xlu0 %2807
      %2809 = vrot.lane.b32.xlu0 %v2423, 16
      %v2810 = vpop.permute.xlu0 %2809
      %2811 = vrot.lane.b32.xlu0 %v2424, 16
      %v2812 = vpop.permute.xlu0 %2811
      %2813 = vrot.lane.b32.xlu0 %v2425, 16
      %v2814 = vpop.permute.xlu0 %2813
      %2815 = vrot.lane.b32.xlu0 %v2426, 16
      %v2816 = vpop.permute.xlu0 %2815
      %2817 = vrot.lane.b32.xlu0 %v2427, 16
      %v2818 = vpop.permute.xlu0 %2817
      %2819 = vrot.lane.b32.xlu0 %v2428, 16
      %v2820 = vpop.permute.xlu0 %2819
      %2821 = vrot.lane.b32.xlu0 %v2429, 16
      %v2822 = vpop.permute.xlu0 %2821
      %2823 = vrot.lane.b32.xlu0 %v2430, 16
      %v2824 = vpop.permute.xlu0 %2823
      %2825 = vrot.lane.b32.xlu0 %v2431, 16
      %v2826 = vpop.permute.xlu0 %2825
      %2827 = vrot.lane.b32.xlu0 %v2432, 16
      %v2828 = vpop.permute.xlu0 %2827
      %2829 = vrot.lane.b32.xlu0 %v2433, 16
      %v2830 = vpop.permute.xlu0 %2829
      %2831 = vrot.lane.b32.xlu0 %v2434, 16
      %v2832 = vpop.permute.xlu0 %2831
      %2833 = vrot.lane.b32.xlu0 %v2435, 16
      %v2834 = vpop.permute.xlu0 %2833
      %2835 = vrot.lane.b32.xlu0 %v2436, 16
      %v2836 = vpop.permute.xlu0 %2835
      %2837 = vrot.lane.b32.xlu0 %v2437, 16
      %v2838 = vpop.permute.xlu0 %2837
      %2839 = vrot.lane.b32.xlu0 %v2438, 16
      %v2840 = vpop.permute.xlu0 %2839
      %2841 = vrot.lane.b32.xlu0 %v2439, 16
      %v2842 = vpop.permute.xlu0 %2841
      %2843 = vrot.lane.b32.xlu0 %v2440, 16
      %v2844 = vpop.permute.xlu0 %2843
      %2845 = vrot.lane.b32.xlu0 %v2441, 16
      %v2846 = vpop.permute.xlu0 %2845
      %2847 = vrot.lane.b32.xlu0 %v2442, 16
      %v2848 = vpop.permute.xlu0 %2847
      %2849 = vrot.lane.b32.xlu0 %v2443, 16
      %v2850 = vpop.permute.xlu0 %2849
      %2851 = vrot.lane.b32.xlu0 %v2444, 16
      %v2852 = vpop.permute.xlu0 %2851
      %2853 = vrot.lane.b32.xlu0 %v2445, 16
      %v2854 = vpop.permute.xlu0 %2853
      %2855 = vrot.lane.b32.xlu0 %v2446, 16
      %v2856 = vpop.permute.xlu0 %2855
      %2857 = vrot.lane.b32.xlu0 %v2447, 16
      %v2858 = vpop.permute.xlu0 %2857
      %2859 = vrot.lane.b32.xlu0 %v2448, 16
      %v2860 = vpop.permute.xlu0 %2859
      %2861 = vrot.lane.b32.xlu0 %v2449, 16
      %v2862 = vpop.permute.xlu0 %2861
      %2863 = vrot.lane.b32.xlu0 %v2450, 16
      %v2864 = vpop.permute.xlu0 %2863
      %2865 = vrot.lane.b32.xlu0 %v2451, 16
      %v2866 = vpop.permute.xlu0 %2865
      %2867 = vrot.lane.b32.xlu0 %v2452, 16
      %v2868 = vpop.permute.xlu0 %2867
      %2869 = vrot.lane.b32.xlu0 %v2453, 16
      %v2870 = vpop.permute.xlu0 %2869
      %2935 = vrot.lane.b32.xlu0 %v2454, 24
      %v2936 = vpop.permute.xlu0 %2935
      %2937 = vrot.lane.b32.xlu0 %v2455, 24
      %v2938 = vpop.permute.xlu0 %2937
      %2939 = vrot.lane.b32.xlu0 %v2456, 24
      %v2940 = vpop.permute.xlu0 %2939
      %2941 = vrot.lane.b32.xlu0 %v2457, 24
      %v2942 = vpop.permute.xlu0 %2941
      %2943 = vrot.lane.b32.xlu0 %v2458, 24
      %v2944 = vpop.permute.xlu0 %2943
      %2945 = vrot.lane.b32.xlu0 %v2459, 24
      %v2946 = vpop.permute.xlu0 %2945
      %2947 = vrot.lane.b32.xlu0 %v2460, 24
      %v2948 = vpop.permute.xlu0 %2947
      %2949 = vrot.lane.b32.xlu0 %v2461, 24
      %v2950 = vpop.permute.xlu0 %2949
      %2951 = vrot.lane.b32.xlu0 %v2462, 24
      %v2952 = vpop.permute.xlu0 %2951
      %2953 = vrot.lane.b32.xlu0 %v2463, 24
      %v2954 = vpop.permute.xlu0 %2953
      %2955 = vrot.lane.b32.xlu0 %v2464, 24
      %v2956 = vpop.permute.xlu0 %2955
      %2957 = vrot.lane.b32.xlu0 %v2465, 24
      %v2958 = vpop.permute.xlu0 %2957
      %2959 = vrot.lane.b32.xlu0 %v2466, 24
      %v2960 = vpop.permute.xlu0 %2959
      %2961 = vrot.lane.b32.xlu0 %v2467, 24
      %v2962 = vpop.permute.xlu0 %2961
      %2963 = vrot.lane.b32.xlu0 %v2468, 24
      %v2964 = vpop.permute.xlu0 %2963
      %2965 = vrot.lane.b32.xlu0 %v2469, 24
      %v2966 = vpop.permute.xlu0 %2965
      %2967 = vrot.lane.b32.xlu0 %v2470, 24
      %v2968 = vpop.permute.xlu0 %2967
      %2969 = vrot.lane.b32.xlu0 %v2471, 24
      %v2970 = vpop.permute.xlu0 %2969
      %2971 = vrot.lane.b32.xlu0 %v2472, 24
      %v2972 = vpop.permute.xlu0 %2971
      %2973 = vrot.lane.b32.xlu0 %v2473, 24
      %v2974 = vpop.permute.xlu0 %2973
      %2975 = vrot.lane.b32.xlu0 %v2474, 24
      %v2976 = vpop.permute.xlu0 %2975
      %2977 = vrot.lane.b32.xlu0 %v2475, 24
      %v2978 = vpop.permute.xlu0 %2977
      %2979 = vrot.lane.b32.xlu0 %v2476, 24
      %v2980 = vpop.permute.xlu0 %2979
      %2981 = vrot.lane.b32.xlu0 %v2477, 24
      %v2982 = vpop.permute.xlu0 %2981
      %2983 = vrot.lane.b32.xlu0 %v2478, 24
      %v2984 = vpop.permute.xlu0 %2983
      %2985 = vrot.lane.b32.xlu0 %v2479, 24
      %v2986 = vpop.permute.xlu0 %2985
      %2987 = vrot.lane.b32.xlu0 %v2480, 24
      %v2988 = vpop.permute.xlu0 %2987
      %2989 = vrot.lane.b32.xlu0 %v2481, 24
      %v2990 = vpop.permute.xlu0 %2989
      %2991 = vrot.lane.b32.xlu0 %v2482, 24
      %v2992 = vpop.permute.xlu0 %2991
      %2993 = vrot.lane.b32.xlu0 %v2483, 24
      %v2994 = vpop.permute.xlu0 %2993
      %2995 = vrot.lane.b32.xlu0 %v2484, 24
      %v2996 = vpop.permute.xlu0 %2995
      %2997 = vrot.lane.b32.xlu0 %v2485, 24
      %v2998 = vpop.permute.xlu0 %2997
      %3063 = vrot.lane.b32.xlu0 %v2486, 32
      %v3064 = vpop.permute.xlu0 %3063
      %3065 = vrot.lane.b32.xlu0 %v2487, 32
      %v3066 = vpop.permute.xlu0 %3065
      %3067 = vrot.lane.b32.xlu0 %v2488, 32
      %v3068 = vpop.permute.xlu0 %3067
      %3069 = vrot.lane.b32.xlu0 %v2489, 32
      %v3070 = vpop.permute.xlu0 %3069
      %3071 = vrot.lane.b32.xlu0 %v2490, 32
      %v3072 = vpop.permute.xlu0 %3071
      %3073 = vrot.lane.b32.xlu0 %v2491, 32
      %v3074 = vpop.permute.xlu0 %3073
      %3075 = vrot.lane.b32.xlu0 %v2492, 32
      %v3076 = vpop.permute.xlu0 %3075
      %3077 = vrot.lane.b32.xlu0 %v2493, 32
      %v3078 = vpop.permute.xlu0 %3077
      %3079 = vrot.lane.b32.xlu0 %v2494, 32
      %v3080 = vpop.permute.xlu0 %3079
      %3081 = vrot.lane.b32.xlu0 %v2495, 32
      %v3082 = vpop.permute.xlu0 %3081
      %3083 = vrot.lane.b32.xlu0 %v2496, 32
      %v3084 = vpop.permute.xlu0 %3083
      %3085 = vrot.lane.b32.xlu0 %v2497, 32
      %v3086 = vpop.permute.xlu0 %3085
      %3087 = vrot.lane.b32.xlu0 %v2498, 32
      %v3088 = vpop.permute.xlu0 %3087
      %3089 = vrot.lane.b32.xlu0 %v2499, 32
      %v3090 = vpop.permute.xlu0 %3089
      %3091 = vrot.lane.b32.xlu0 %v2500, 32
      %v3092 = vpop.permute.xlu0 %3091
      %3093 = vrot.lane.b32.xlu0 %v2501, 32
      %v3094 = vpop.permute.xlu0 %3093
      %3095 = vrot.lane.b32.xlu0 %v2502, 32
      %v3096 = vpop.permute.xlu0 %3095
      %3097 = vrot.lane.b32.xlu0 %v2503, 32
      %v3098 = vpop.permute.xlu0 %3097
      %3099 = vrot.lane.b32.xlu0 %v2504, 32
      %v3100 = vpop.permute.xlu0 %3099
      %3101 = vrot.lane.b32.xlu0 %v2505, 32
      %v3102 = vpop.permute.xlu0 %3101
      %3103 = vrot.lane.b32.xlu0 %v2506, 32
      %v3104 = vpop.permute.xlu0 %3103
      %3105 = vrot.lane.b32.xlu0 %v2507, 32
      %v3106 = vpop.permute.xlu0 %3105
      %3107 = vrot.lane.b32.xlu0 %v2508, 32
      %v3108 = vpop.permute.xlu0 %3107
      %3109 = vrot.lane.b32.xlu0 %v2509, 32
      %v3110 = vpop.permute.xlu0 %3109
      %3111 = vrot.lane.b32.xlu0 %v2510, 32
      %v3112 = vpop.permute.xlu0 %3111
      %3113 = vrot.lane.b32.xlu0 %v2511, 32
      %v3114 = vpop.permute.xlu0 %3113
      %3115 = vrot.lane.b32.xlu0 %v2512, 32
      %v3116 = vpop.permute.xlu0 %3115
      %3117 = vrot.lane.b32.xlu0 %v2513, 32
      %v3118 = vpop.permute.xlu0 %3117
      %3119 = vrot.lane.b32.xlu0 %v2514, 32
      %v3120 = vpop.permute.xlu0 %3119
      %3121 = vrot.lane.b32.xlu0 %v2515, 32
      %v3122 = vpop.permute.xlu0 %3121
      %3123 = vrot.lane.b32.xlu0 %v2516, 32
      %v3124 = vpop.permute.xlu0 %3123
      %3125 = vrot.lane.b32.xlu0 %v2517, 32
      %v3126 = vpop.permute.xlu0 %3125
      %3191 = vrot.lane.b32.xlu0 %v2518, 40
      %v3192 = vpop.permute.xlu0 %3191
      %3193 = vrot.lane.b32.xlu0 %v2519, 40
      %v3194 = vpop.permute.xlu0 %3193
      %3195 = vrot.lane.b32.xlu0 %v2520, 40
      %v3196 = vpop.permute.xlu0 %3195
      %3197 = vrot.lane.b32.xlu0 %v2521, 40
      %v3198 = vpop.permute.xlu0 %3197
      %3199 = vrot.lane.b32.xlu0 %v2522, 40
      %v3200 = vpop.permute.xlu0 %3199
      %3201 = vrot.lane.b32.xlu0 %v2523, 40
      %v3202 = vpop.permute.xlu0 %3201
      %3203 = vrot.lane.b32.xlu0 %v2524, 40
      %v3204 = vpop.permute.xlu0 %3203
      %3205 = vrot.lane.b32.xlu0 %v2525, 40
      %v3206 = vpop.permute.xlu0 %3205
      %3207 = vrot.lane.b32.xlu0 %v2526, 40
      %v3208 = vpop.permute.xlu0 %3207
      %3209 = vrot.lane.b32.xlu0 %v2527, 40
      %v3210 = vpop.permute.xlu0 %3209
      %3211 = vrot.lane.b32.xlu0 %v2528, 40
      %v3212 = vpop.permute.xlu0 %3211
      %3213 = vrot.lane.b32.xlu0 %v2529, 40
      %v3214 = vpop.permute.xlu0 %3213
      %3215 = vrot.lane.b32.xlu0 %v2530, 40
      %v3216 = vpop.permute.xlu0 %3215
      %3217 = vrot.lane.b32.xlu0 %v2531, 40
      %v3218 = vpop.permute.xlu0 %3217
      %3219 = vrot.lane.b32.xlu0 %v2532, 40
      %v3220 = vpop.permute.xlu0 %3219
      %3221 = vrot.lane.b32.xlu0 %v2533, 40
      %v3222 = vpop.permute.xlu0 %3221
      %3223 = vrot.lane.b32.xlu0 %v2534, 40
      %v3224 = vpop.permute.xlu0 %3223
      %3225 = vrot.lane.b32.xlu0 %v2535, 40
      %v3226 = vpop.permute.xlu0 %3225
      %3227 = vrot.lane.b32.xlu0 %v2536, 40
      %v3228 = vpop.permute.xlu0 %3227
      %3229 = vrot.lane.b32.xlu0 %v2537, 40
      %v3230 = vpop.permute.xlu0 %3229
      %3231 = vrot.lane.b32.xlu0 %v2538, 40
      %v3232 = vpop.permute.xlu0 %3231
      %3233 = vrot.lane.b32.xlu0 %v2539, 40
      %v3234 = vpop.permute.xlu0 %3233
      %3235 = vrot.lane.b32.xlu0 %v2540, 40
      %v3236 = vpop.permute.xlu0 %3235
      %3237 = vrot.lane.b32.xlu0 %v2541, 40
      %v3238 = vpop.permute.xlu0 %3237
      %3239 = vrot.lane.b32.xlu0 %v2542, 40
      %v3240 = vpop.permute.xlu0 %3239
      %3241 = vrot.lane.b32.xlu0 %v2543, 40
      %v3242 = vpop.permute.xlu0 %3241
      %3243 = vrot.lane.b32.xlu0 %v2544, 40
      %v3244 = vpop.permute.xlu0 %3243
      %3245 = vrot.lane.b32.xlu0 %v2545, 40
      %v3246 = vpop.permute.xlu0 %3245
      %3247 = vrot.lane.b32.xlu0 %v2546, 40
      %v3248 = vpop.permute.xlu0 %3247
      %3249 = vrot.lane.b32.xlu0 %v2547, 40
      %v3250 = vpop.permute.xlu0 %3249
      %3251 = vrot.lane.b32.xlu0 %v2548, 40
      %v3252 = vpop.permute.xlu0 %3251
      %3253 = vrot.lane.b32.xlu0 %v2549, 40
      %v3254 = vpop.permute.xlu0 %3253
      %3319 = vrot.lane.b32.xlu0 %v2551, 48
      %v3320 = vpop.permute.xlu0 %3319
      %3321 = vrot.lane.b32.xlu0 %v2552, 48
      %v3322 = vpop.permute.xlu0 %3321
      %3323 = vrot.lane.b32.xlu0 %v2553, 48
      %v3324 = vpop.permute.xlu0 %3323
      %3325 = vrot.lane.b32.xlu0 %v2554, 48
      %v3326 = vpop.permute.xlu0 %3325
      %3327 = vrot.lane.b32.xlu0 %v2555, 48
      %v3328 = vpop.permute.xlu0 %3327
      %3329 = vrot.lane.b32.xlu0 %v2556, 48
      %v3330 = vpop.permute.xlu0 %3329
      %3331 = vrot.lane.b32.xlu0 %v2557, 48
      %v3332 = vpop.permute.xlu0 %3331
      %3333 = vrot.lane.b32.xlu0 %v2558, 48
      %v3334 = vpop.permute.xlu0 %3333
      %3335 = vrot.lane.b32.xlu0 %v2559, 48
      %v3336 = vpop.permute.xlu0 %3335
      %3337 = vrot.lane.b32.xlu0 %v2560, 48
      %v3338 = vpop.permute.xlu0 %3337
      %3339 = vrot.lane.b32.xlu0 %v2561, 48
      %v3340 = vpop.permute.xlu0 %3339
      %3341 = vrot.lane.b32.xlu0 %v2562, 48
      %v3342 = vpop.permute.xlu0 %3341
      %3343 = vrot.lane.b32.xlu0 %v2563, 48
      %v3344 = vpop.permute.xlu0 %3343
      %3345 = vrot.lane.b32.xlu0 %v2564, 48
      %v3346 = vpop.permute.xlu0 %3345
      %3347 = vrot.lane.b32.xlu0 %v2565, 48
      %v3348 = vpop.permute.xlu0 %3347
      %3349 = vrot.lane.b32.xlu0 %v2566, 48
      %v3350 = vpop.permute.xlu0 %3349
      %3351 = vrot.lane.b32.xlu0 %v2567, 48
      %v3352 = vpop.permute.xlu0 %3351
      %3353 = vrot.lane.b32.xlu0 %v2568, 48
      %v3354 = vpop.permute.xlu0 %3353
      %3355 = vrot.lane.b32.xlu0 %v2569, 48
      %v3356 = vpop.permute.xlu0 %3355
      %3357 = vrot.lane.b32.xlu0 %v2570, 48
      %v3358 = vpop.permute.xlu0 %3357
      %3359 = vrot.lane.b32.xlu0 %v2571, 48
      %v3360 = vpop.permute.xlu0 %3359
      %3361 = vrot.lane.b32.xlu0 %v2572, 48
      %v3362 = vpop.permute.xlu0 %3361
      %3363 = vrot.lane.b32.xlu0 %v2573, 48
      %v3364 = vpop.permute.xlu0 %3363
      %3365 = vrot.lane.b32.xlu0 %v2574, 48
      %v3366 = vpop.permute.xlu0 %3365
      %3367 = vrot.lane.b32.xlu0 %v2575, 48
      %v3368 = vpop.permute.xlu0 %3367
      %3369 = vrot.lane.b32.xlu0 %v2576, 48
      %v3370 = vpop.permute.xlu0 %3369
      %3371 = vrot.lane.b32.xlu0 %v2577, 48
      %v3372 = vpop.permute.xlu0 %3371
      %3373 = vrot.lane.b32.xlu0 %v2578, 48
      %v3374 = vpop.permute.xlu0 %3373
      %3375 = vrot.lane.b32.xlu0 %v2579, 48
      %v3376 = vpop.permute.xlu0 %3375
      %3377 = vrot.lane.b32.xlu0 %v2580, 48
      %v3378 = vpop.permute.xlu0 %3377
      %3379 = vrot.lane.b32.xlu0 %v2581, 48
      %v3380 = vpop.permute.xlu0 %3379
      %3381 = vrot.lane.b32.xlu0 %v2582, 48
      %v3382 = vpop.permute.xlu0 %3381
      %3447 = vrot.lane.b32.xlu0 %v2583, 56
      %v3448 = vpop.permute.xlu0 %3447
      %3449 = vrot.lane.b32.xlu0 %v2584, 56
      %v3450 = vpop.permute.xlu0 %3449
      %3451 = vrot.lane.b32.xlu0 %v2585, 56
      %v3452 = vpop.permute.xlu0 %3451
      %3453 = vrot.lane.b32.xlu0 %v2586, 56
      %v3454 = vpop.permute.xlu0 %3453
      %3455 = vrot.lane.b32.xlu0 %v2587, 56
      %v3456 = vpop.permute.xlu0 %3455
      %3457 = vrot.lane.b32.xlu0 %v2588, 56
      %v3458 = vpop.permute.xlu0 %3457
      %3459 = vrot.lane.b32.xlu0 %v2589, 56
      %v3460 = vpop.permute.xlu0 %3459
      %3461 = vrot.lane.b32.xlu0 %v2590, 56
      %v3462 = vpop.permute.xlu0 %3461
      %3463 = vrot.lane.b32.xlu0 %v2591, 56
      %v3464 = vpop.permute.xlu0 %3463
      %3465 = vrot.lane.b32.xlu0 %v2592, 56
      %v3466 = vpop.permute.xlu0 %3465
      %3467 = vrot.lane.b32.xlu0 %v2593, 56
      %v3468 = vpop.permute.xlu0 %3467
      %3469 = vrot.lane.b32.xlu0 %v2594, 56
      %v3470 = vpop.permute.xlu0 %3469
      %3471 = vrot.lane.b32.xlu0 %v2595, 56
      %v3472 = vpop.permute.xlu0 %3471
      %3473 = vrot.lane.b32.xlu0 %v2596, 56
      %v3474 = vpop.permute.xlu0 %3473
      %3475 = vrot.lane.b32.xlu0 %v2597, 56
      %v3476 = vpop.permute.xlu0 %3475
      %3477 = vrot.lane.b32.xlu0 %v2598, 56
      %v3478 = vpop.permute.xlu0 %3477
      %3479 = vrot.lane.b32.xlu0 %v2599, 56
      %v3480 = vpop.permute.xlu0 %3479
      %3481 = vrot.lane.b32.xlu0 %v2600, 56
      %v3482 = vpop.permute.xlu0 %3481
      %3483 = vrot.lane.b32.xlu0 %v2601, 56
      %v3484 = vpop.permute.xlu0 %3483
      %3485 = vrot.lane.b32.xlu0 %v2602, 56
      %v3486 = vpop.permute.xlu0 %3485
      %3487 = vrot.lane.b32.xlu0 %v2603, 56
      %v3488 = vpop.permute.xlu0 %3487
      %3489 = vrot.lane.b32.xlu0 %v2604, 56
      %v3490 = vpop.permute.xlu0 %3489
      %3491 = vrot.lane.b32.xlu0 %v2605, 56
      %v3492 = vpop.permute.xlu0 %3491
      %3493 = vrot.lane.b32.xlu0 %v2606, 56
      %v3494 = vpop.permute.xlu0 %3493
      %3495 = vrot.lane.b32.xlu0 %v2607, 56
      %v3496 = vpop.permute.xlu0 %3495
      %3497 = vrot.lane.b32.xlu0 %v2608, 56
      %v3498 = vpop.permute.xlu0 %3497
      %3499 = vrot.lane.b32.xlu0 %v2609, 56
      %v3500 = vpop.permute.xlu0 %3499
      %3501 = vrot.lane.b32.xlu0 %v2610, 56
      %v3502 = vpop.permute.xlu0 %3501
      %3503 = vrot.lane.b32.xlu0 %v2611, 56
      %v3504 = vpop.permute.xlu0 %3503
      %3505 = vrot.lane.b32.xlu0 %v2612, 56
      %v3506 = vpop.permute.xlu0 %3505
      %3507 = vrot.lane.b32.xlu0 %v2613, 56
      %v3508 = vpop.permute.xlu0 %3507
      %3509 = vrot.lane.b32.xlu0 %v2614, 56
      %v3510 = vpop.permute.xlu0 %3509
      %3575 = vrot.lane.b32.xlu0 %v2615, 64
      %v3576 = vpop.permute.xlu0 %3575
      %3577 = vrot.lane.b32.xlu0 %v2616, 64
      %v3578 = vpop.permute.xlu0 %3577
      %3579 = vrot.lane.b32.xlu0 %v2617, 64
      %v3580 = vpop.permute.xlu0 %3579
      %3581 = vrot.lane.b32.xlu0 %v2618, 64
      %v3582 = vpop.permute.xlu0 %3581
      %3583 = vrot.lane.b32.xlu0 %v2619, 64
      %v3584 = vpop.permute.xlu0 %3583
      %3585 = vrot.lane.b32.xlu0 %v2620, 64
      %v3586 = vpop.permute.xlu0 %3585
      %3587 = vrot.lane.b32.xlu0 %v2621, 64
      %v3588 = vpop.permute.xlu0 %3587
      %3589 = vrot.lane.b32.xlu0 %v2622, 64
      %v3590 = vpop.permute.xlu0 %3589
      %3591 = vrot.lane.b32.xlu0 %v2623, 64
      %v3592 = vpop.permute.xlu0 %3591
      %3593 = vrot.lane.b32.xlu0 %v2624, 64
      %v3594 = vpop.permute.xlu0 %3593
      %3595 = vrot.lane.b32.xlu0 %v2625, 64
      %v3596 = vpop.permute.xlu0 %3595
      %3597 = vrot.lane.b32.xlu0 %v2626, 64
      %v3598 = vpop.permute.xlu0 %3597
      %3599 = vrot.lane.b32.xlu0 %v2627, 64
      %v3600 = vpop.permute.xlu0 %3599
      %3601 = vrot.lane.b32.xlu0 %v2628, 64
      %v3602 = vpop.permute.xlu0 %3601
      %3603 = vrot.lane.b32.xlu0 %v2629, 64
      %v3604 = vpop.permute.xlu0 %3603
      %3605 = vrot.lane.b32.xlu0 %v2630, 64
      %v3606 = vpop.permute.xlu0 %3605
      %3607 = vrot.lane.b32.xlu0 %v2631, 64
      %v3608 = vpop.permute.xlu0 %3607
      %3609 = vrot.lane.b32.xlu0 %v2632, 64
      %v3610 = vpop.permute.xlu0 %3609
      %3611 = vrot.lane.b32.xlu0 %v2633, 64
      %v3612 = vpop.permute.xlu0 %3611
      %3613 = vrot.lane.b32.xlu0 %v2634, 64
      %v3614 = vpop.permute.xlu0 %3613
      %3615 = vrot.lane.b32.xlu0 %v2635, 64
      %v3616 = vpop.permute.xlu0 %3615
      %3617 = vrot.lane.b32.xlu0 %v2636, 64
      %v3618 = vpop.permute.xlu0 %3617
      %3619 = vrot.lane.b32.xlu0 %v2637, 64
      %v3620 = vpop.permute.xlu0 %3619
      %3621 = vrot.lane.b32.xlu0 %v2638, 64
      %v3622 = vpop.permute.xlu0 %3621
      %3623 = vrot.lane.b32.xlu0 %v2639, 64
      %v3624 = vpop.permute.xlu0 %3623
      %3625 = vrot.lane.b32.xlu0 %v2640, 64
      %v3626 = vpop.permute.xlu0 %3625
      %3627 = vrot.lane.b32.xlu0 %v2641, 64
      %v3628 = vpop.permute.xlu0 %3627
      %3629 = vrot.lane.b32.xlu0 %v2642, 64
      %v3630 = vpop.permute.xlu0 %3629
      %3631 = vrot.lane.b32.xlu0 %v2643, 64
      %v3632 = vpop.permute.xlu0 %3631
      %3633 = vrot.lane.b32.xlu0 %v2644, 64
      %v3634 = vpop.permute.xlu0 %3633
      %3635 = vrot.lane.b32.xlu0 %v2645, 64
      %v3636 = vpop.permute.xlu0 %3635
      %3637 = vrot.lane.b32.xlu0 %v2646, 64
      %v3638 = vpop.permute.xlu0 %3637
      %v3671 = vsel %vm225, %v2358, %v2680
      %v3672 = vsel %vm225, %v2359, %v2682
      %v3673 = vsel %vm225, %v2360, %v2684
      %v3674 = vsel %vm225, %v2361, %v2686
      %v3675 = vsel %vm225, %v2362, %v2688
      %v3676 = vsel %vm225, %v2363, %v2690
      %v3677 = vsel %vm225, %v2364, %v2692
      %v3678 = vsel %vm225, %v2365, %v2694
      %v3679 = vsel %vm225, %v2366, %v2696
      %v3680 = vsel %vm225, %v2367, %v2698
      %v3681 = vsel %vm225, %v2368, %v2700
      %v3682 = vsel %vm225, %v2369, %v2702
      %v3683 = vsel %vm225, %v2370, %v2704
      %v3684 = vsel %vm225, %v2371, %v2706
      %v3685 = vsel %vm225, %v2372, %v2708
      %v3686 = vsel %vm225, %v2373, %v2710
      %v3687 = vsel %vm225, %v2374, %v2712
      %v3688 = vsel %vm225, %v2375, %v2714
      %v3689 = vsel %vm225, %v2376, %v2716
      %v3690 = vsel %vm225, %v2377, %v2718
      %v3691 = vsel %vm225, %v2378, %v2720
      %v3692 = vsel %vm225, %v2379, %v2722
      %v3693 = vsel %vm225, %v2380, %v2724
      %v3694 = vsel %vm225, %v2381, %v2726
      %v3695 = vsel %vm225, %v2382, %v2728
      %v3696 = vsel %vm225, %v2383, %v2730
      %v3697 = vsel %vm225, %v2384, %v2732
      %v3698 = vsel %vm225, %v2385, %v2734
      %v3699 = vsel %vm225, %v2386, %v2736
      %v3700 = vsel %vm225, %v2387, %v2738
      %v3701 = vsel %vm225, %v2388, %v2740
      %v3702 = vsel %vm225, %v2389, %v2742
      %v3703 = vsel %vm1724, %v3671, %v2808
      %v3704 = vsel %vm1724, %v3672, %v2810
      %v3705 = vsel %vm1724, %v3673, %v2812
      %v3706 = vsel %vm1724, %v3674, %v2814
      %v3707 = vsel %vm1724, %v3675, %v2816
      %v3708 = vsel %vm1724, %v3676, %v2818
      %v3709 = vsel %vm1724, %v3677, %v2820
      %v3710 = vsel %vm1724, %v3678, %v2822
      %v3711 = vsel %vm1724, %v3679, %v2824
      %v3712 = vsel %vm1724, %v3680, %v2826
      %v3713 = vsel %vm1724, %v3681, %v2828
      %v3714 = vsel %vm1724, %v3682, %v2830
      %v3715 = vsel %vm1724, %v3683, %v2832
      %v3716 = vsel %vm1724, %v3684, %v2834
      %v3717 = vsel %vm1724, %v3685, %v2836
      %v3718 = vsel %vm1724, %v3686, %v2838
      %v3719 = vsel %vm1724, %v3687, %v2840
      %v3720 = vsel %vm1724, %v3688, %v2842
      %v3721 = vsel %vm1724, %v3689, %v2844
      %v3722 = vsel %vm1724, %v3690, %v2846
      %v3723 = vsel %vm1724, %v3691, %v2848
      %v3724 = vsel %vm1724, %v3692, %v2850
      %v3725 = vsel %vm1724, %v3693, %v2852
      %v3726 = vsel %vm1724, %v3694, %v2854
      %v3727 = vsel %vm1724, %v3695, %v2856
      %v3728 = vsel %vm1724, %v3696, %v2858
      %v3729 = vsel %vm1724, %v3697, %v2860
      %v3730 = vsel %vm1724, %v3698, %v2862
      %v3731 = vsel %vm1724, %v3699, %v2864
      %v3732 = vsel %vm1724, %v3700, %v2866
      %v3733 = vsel %vm1724, %v3701, %v2868
      %v3734 = vsel %vm1724, %v3702, %v2870
      %v3735 = vsel %vm1757, %v3703, %v2936
      %v3736 = vsel %vm1757, %v3704, %v2938
      %v3737 = vsel %vm1757, %v3705, %v2940
      %v3738 = vsel %vm1757, %v3706, %v2942
      %v3739 = vsel %vm1757, %v3707, %v2944
      %v3740 = vsel %vm1757, %v3708, %v2946
      %v3741 = vsel %vm1757, %v3709, %v2948
      %v3742 = vsel %vm1757, %v3710, %v2950
      %v3743 = vsel %vm1757, %v3711, %v2952
      %v3744 = vsel %vm1757, %v3712, %v2954
      %v3745 = vsel %vm1757, %v3713, %v2956
      %v3746 = vsel %vm1757, %v3714, %v2958
      %v3747 = vsel %vm1757, %v3715, %v2960
      %v3748 = vsel %vm1757, %v3716, %v2962
      %v3749 = vsel %vm1757, %v3717, %v2964
      %v3750 = vsel %vm1757, %v3718, %v2966
      %v3751 = vsel %vm1757, %v3719, %v2968
      %v3752 = vsel %vm1757, %v3720, %v2970
      %v3753 = vsel %vm1757, %v3721, %v2972
      %v3754 = vsel %vm1757, %v3722, %v2974
      %v3755 = vsel %vm1757, %v3723, %v2976
      %v3756 = vsel %vm1757, %v3724, %v2978
      %v3757 = vsel %vm1757, %v3725, %v2980
      %v3758 = vsel %vm1757, %v3726, %v2982
      %v3759 = vsel %vm1757, %v3727, %v2984
      %v3760 = vsel %vm1757, %v3728, %v2986
      %v3761 = vsel %vm1757, %v3729, %v2988
      %v3762 = vsel %vm1757, %v3730, %v2990
      %v3763 = vsel %vm1757, %v3731, %v2992
      %v3764 = vsel %vm1757, %v3732, %v2994
      %v3765 = vsel %vm1757, %v3733, %v2996
      %v3766 = vsel %vm1757, %v3734, %v2998
      %v3767 = vsel %vm1790, %v3735, %v3064
      %v3768 = vsel %vm1790, %v3736, %v3066
      %v3769 = vsel %vm1790, %v3737, %v3068
      %v3770 = vsel %vm1790, %v3738, %v3070
      %v3771 = vsel %vm1790, %v3739, %v3072
      %v3772 = vsel %vm1790, %v3740, %v3074
      %v3773 = vsel %vm1790, %v3741, %v3076
      %v3774 = vsel %vm1790, %v3742, %v3078
      %v3775 = vsel %vm1790, %v3743, %v3080
      %v3776 = vsel %vm1790, %v3744, %v3082
      %v3777 = vsel %vm1790, %v3745, %v3084
      %v3778 = vsel %vm1790, %v3746, %v3086
      %v3779 = vsel %vm1790, %v3747, %v3088
      %v3780 = vsel %vm1790, %v3748, %v3090
      %v3781 = vsel %vm1790, %v3749, %v3092
      %v3782 = vsel %vm1790, %v3750, %v3094
      %v3783 = vsel %vm1790, %v3751, %v3096
      %v3784 = vsel %vm1790, %v3752, %v3098
      %v3785 = vsel %vm1790, %v3753, %v3100
      %v3786 = vsel %vm1790, %v3754, %v3102
      %v3787 = vsel %vm1790, %v3755, %v3104
      %v3788 = vsel %vm1790, %v3756, %v3106
      %v3789 = vsel %vm1790, %v3757, %v3108
      %v3790 = vsel %vm1790, %v3758, %v3110
      %v3791 = vsel %vm1790, %v3759, %v3112
      %v3792 = vsel %vm1790, %v3760, %v3114
      %v3793 = vsel %vm1790, %v3761, %v3116
      %v3794 = vsel %vm1790, %v3762, %v3118
      %v3795 = vsel %vm1790, %v3763, %v3120
      %v3796 = vsel %vm1790, %v3764, %v3122
      %v3797 = vsel %vm1790, %v3765, %v3124
      %v3798 = vsel %vm1790, %v3766, %v3126
      %v3799 = vsel %vm1823, %v3767, %v3192
      %v3800 = vsel %vm1823, %v3768, %v3194
      %v3801 = vsel %vm1823, %v3769, %v3196
      %v3802 = vsel %vm1823, %v3770, %v3198
      %v3803 = vsel %vm1823, %v3771, %v3200
      %v3804 = vsel %vm1823, %v3772, %v3202
      %v3805 = vsel %vm1823, %v3773, %v3204
      %v3806 = vsel %vm1823, %v3774, %v3206
      %v3807 = vsel %vm1823, %v3775, %v3208
      %v3808 = vsel %vm1823, %v3776, %v3210
      %v3809 = vsel %vm1823, %v3777, %v3212
      %v3810 = vsel %vm1823, %v3778, %v3214
      %v3811 = vsel %vm1823, %v3779, %v3216
      %v3812 = vsel %vm1823, %v3780, %v3218
      %v3813 = vsel %vm1823, %v3781, %v3220
      %v3814 = vsel %vm1823, %v3782, %v3222
      %v3815 = vsel %vm1823, %v3783, %v3224
      %v3816 = vsel %vm1823, %v3784, %v3226
      %v3817 = vsel %vm1823, %v3785, %v3228
      %v3818 = vsel %vm1823, %v3786, %v3230
      %v3819 = vsel %vm1823, %v3787, %v3232
      %v3820 = vsel %vm1823, %v3788, %v3234
      %v3821 = vsel %vm1823, %v3789, %v3236
      %v3822 = vsel %vm1823, %v3790, %v3238
      %v3823 = vsel %vm1823, %v3791, %v3240
      %v3824 = vsel %vm1823, %v3792, %v3242
      %v3825 = vsel %vm1823, %v3793, %v3244
      %v3826 = vsel %vm1823, %v3794, %v3246
      %v3827 = vsel %vm1823, %v3795, %v3248
      %v3828 = vsel %vm1823, %v3796, %v3250
      %v3829 = vsel %vm1823, %v3797, %v3252
      %v3830 = vsel %vm1823, %v3798, %v3254
      %v3831 = vsel %vm1856, %v3799, %v3320
      %v3832 = vsel %vm1856, %v3800, %v3322
      %v3833 = vsel %vm1856, %v3801, %v3324
      %v3834 = vsel %vm1856, %v3802, %v3326
      %v3835 = vsel %vm1856, %v3803, %v3328
      %v3836 = vsel %vm1856, %v3804, %v3330
      %v3837 = vsel %vm1856, %v3805, %v3332
      %v3838 = vsel %vm1856, %v3806, %v3334
      %v3839 = vsel %vm1856, %v3807, %v3336
      %v3840 = vsel %vm1856, %v3808, %v3338
      %v3841 = vsel %vm1856, %v3809, %v3340
      %v3842 = vsel %vm1856, %v3810, %v3342
      %v3843 = vsel %vm1856, %v3811, %v3344
      %v3844 = vsel %vm1856, %v3812, %v3346
      %v3845 = vsel %vm1856, %v3813, %v3348
      %v3846 = vsel %vm1856, %v3814, %v3350
      %v3847 = vsel %vm1856, %v3815, %v3352
      %v3848 = vsel %vm1856, %v3816, %v3354
      %v3849 = vsel %vm1856, %v3817, %v3356
      %v3850 = vsel %vm1856, %v3818, %v3358
      %v3851 = vsel %vm1856, %v3819, %v3360
      %v3852 = vsel %vm1856, %v3820, %v3362
      %v3853 = vsel %vm1856, %v3821, %v3364
      %v3854 = vsel %vm1856, %v3822, %v3366
      %v3855 = vsel %vm1856, %v3823, %v3368
      %v3856 = vsel %vm1856, %v3824, %v3370
      %v3857 = vsel %vm1856, %v3825, %v3372
      %v3858 = vsel %vm1856, %v3826, %v3374
      %v3859 = vsel %vm1856, %v3827, %v3376
      %v3860 = vsel %vm1856, %v3828, %v3378
      %v3861 = vsel %vm1856, %v3829, %v3380
      %v3862 = vsel %vm1856, %v3830, %v3382
      %v3863 = vsel %vm1889, %v3831, %v3448
      %v3864 = vsel %vm1889, %v3832, %v3450
      %v3865 = vsel %vm1889, %v3833, %v3452
      %v3866 = vsel %vm1889, %v3834, %v3454
      %v3867 = vsel %vm1889, %v3835, %v3456
      %v3868 = vsel %vm1889, %v3836, %v3458
      %v3869 = vsel %vm1889, %v3837, %v3460
      %v3870 = vsel %vm1889, %v3838, %v3462
      %v3871 = vsel %vm1889, %v3839, %v3464
      %v3872 = vsel %vm1889, %v3840, %v3466
      %v3873 = vsel %vm1889, %v3841, %v3468
      %v3874 = vsel %vm1889, %v3842, %v3470
      %v3875 = vsel %vm1889, %v3843, %v3472
      %v3876 = vsel %vm1889, %v3844, %v3474
      %v3877 = vsel %vm1889, %v3845, %v3476
      %v3878 = vsel %vm1889, %v3846, %v3478
      %v3879 = vsel %vm1889, %v3847, %v3480
      %v3880 = vsel %vm1889, %v3848, %v3482
      %v3881 = vsel %vm1889, %v3849, %v3484
      %v3882 = vsel %vm1889, %v3850, %v3486
      %v3883 = vsel %vm1889, %v3851, %v3488
      %v3884 = vsel %vm1889, %v3852, %v3490
      %v3885 = vsel %vm1889, %v3853, %v3492
      %v3886 = vsel %vm1889, %v3854, %v3494
      %v3887 = vsel %vm1889, %v3855, %v3496
      %v3888 = vsel %vm1889, %v3856, %v3498
      %v3889 = vsel %vm1889, %v3857, %v3500
      %v3890 = vsel %vm1889, %v3858, %v3502
      %v3891 = vsel %vm1889, %v3859, %v3504
      %v3892 = vsel %vm1889, %v3860, %v3506
      %v3893 = vsel %vm1889, %v3861, %v3508
      %v3894 = vsel %vm1889, %v3862, %v3510
      %v3895 = vsel %vm1922, %v3863, %v3576
      %v3896 = vsel %vm1922, %v3864, %v3578
      %v3897 = vsel %vm1922, %v3865, %v3580
      %v3898 = vsel %vm1922, %v3866, %v3582
      %v3899 = vsel %vm1922, %v3867, %v3584
      %v3900 = vsel %vm1922, %v3868, %v3586
      %v3901 = vsel %vm1922, %v3869, %v3588
      %v3902 = vsel %vm1922, %v3870, %v3590
      %v3903 = vsel %vm1922, %v3871, %v3592
      %v3904 = vsel %vm1922, %v3872, %v3594
      %v3905 = vsel %vm1922, %v3873, %v3596
      %v3906 = vsel %vm1922, %v3874, %v3598
      %v3907 = vsel %vm1922, %v3875, %v3600
      %v3908 = vsel %vm1922, %v3876, %v3602
      %v3909 = vsel %vm1922, %v3877, %v3604
      %v3910 = vsel %vm1922, %v3878, %v3606
      %v3911 = vsel %vm1922, %v3879, %v3608
      %v3912 = vsel %vm1922, %v3880, %v3610
      %v3913 = vsel %vm1922, %v3881, %v3612
      %v3914 = vsel %vm1922, %v3882, %v3614
      %v3915 = vsel %vm1922, %v3883, %v3616
      %v3916 = vsel %vm1922, %v3884, %v3618
      %v3917 = vsel %vm1922, %v3885, %v3620
      %v3918 = vsel %vm1922, %v3886, %v3622
      %v3919 = vsel %vm1922, %v3887, %v3624
      %v3920 = vsel %vm1922, %v3888, %v3626
      %v3921 = vsel %vm1922, %v3889, %v3628
      %v3922 = vsel %vm1922, %v3890, %v3630
      %v3923 = vsel %vm1922, %v3891, %v3632
      %v3924 = vsel %vm1922, %v3892, %v3634
      %v3925 = vsel %vm1922, %v3893, %v3636
      %v3926 = vsel %vm1922, %v3894, %v3638
      %v3927 = vld [vmem:[%s3] sm:$0xff]
      %v3928 = vld [vmem:[%s3 + $0x8] sm:$0xff]
      %v3929 = vld [vmem:[%s3 + $0x10] sm:$0xff]
      %v3930 = vld [vmem:[%s3 + $0x18] sm:$0xff]
      %v3931 = vld [vmem:[%s3 + $0x20] sm:$0xff]
      %v3932 = vld [vmem:[%s3 + $0x28] sm:$0xff]
      %v3933 = vld [vmem:[%s3 + $0x30] sm:$0xff]
      %v3934 = vld [vmem:[%s3 + $0x38] sm:$0xff]
      %v3935 = vld [vmem:[%s3 + $0x40] sm:$0xff]
      %v3936 = vld [vmem:[%s4] sm:$0x1]
      %v3938 = vlaneseq
      %v3939 = vshrl.u32 %v3938, 7
      %v3940 = vsub.s32 0, %v3939
      %v3941 = vrot.slane %v3936, %v3940
      %v3944 = vsel %vm1971, %v3895, 0
      %v3947 = vsel %vm1971, %v3896, 0
      %v3950 = vsel %vm1971, %v3897, 0
      %v3953 = vsel %vm1971, %v3898, 0
      %v3956 = vsel %vm1971, %v3899, 0
      %v3959 = vsel %vm1971, %v3900, 0
      %v3962 = vsel %vm1971, %v3901, 0
      %v3965 = vsel %vm1971, %v3902, 0
      %v3968 = vsel %vm1971, %v3903, 0
      %v3971 = vsel %vm1971, %v3904, 0
      %v3974 = vsel %vm1971, %v3905, 0
      %v3977 = vsel %vm1971, %v3906, 0
      %v3980 = vsel %vm1971, %v3907, 0
      %v3983 = vsel %vm1971, %v3908, 0
      %v3986 = vsel %vm1971, %v3909, 0
      %v3989 = vsel %vm1971, %v3910, 0
      %v3992 = vsel %vm1971, %v3911, 0
      %v3995 = vsel %vm1971, %v3912, 0
      %v3998 = vsel %vm1971, %v3913, 0
      %v4001 = vsel %vm1971, %v3914, 0
      %v4004 = vsel %vm1971, %v3915, 0
      %v4007 = vsel %vm1971, %v3916, 0
      %v4010 = vsel %vm1971, %v3917, 0
      %v4013 = vsel %vm1971, %v3918, 0
      %v4016 = vsel %vm1971, %v3919, 0
      %v4019 = vsel %vm1971, %v3920, 0
      %v4022 = vsel %vm1971, %v3921, 0
      %v4025 = vsel %vm1971, %v3922, 0
      %v4028 = vsel %vm1971, %v3923, 0
      %v4031 = vsel %vm1971, %v3924, 0
      %v4034 = vsel %vm1971, %v3925, 0
      %v4037 = vsel %vm1971, %v3926, 0
      %4039 = vmatprep.subr.mxu0 0.0
      %4040 = vmatpush1.msra.mxu0 %v3927
      %4041 = vmatprep.subr.mxu0 0.0
      %4042 = vmatpush1.msra.mxu0 %v3928
      %4043 = vmatprep.subr.mxu0 0.0
      %4044 = vmatpush1.msra.mxu0 %v3929
      %4045 = vmatprep.subr.mxu0 0.0
      %4046 = vmatpush1.msra.mxu0 %v3930
      %4047 = vmatprep.subr.mxu0 0.0
      %4048 = vmatpush1.msra.mxu0 %v3931
      %4049 = vmatprep.subr.mxu0 0.0
      %4050 = vmatpush1.msra.mxu0 %v3932
      %4051 = vmatprep.subr.mxu0 0.0
      %4052 = vmatpush1.msra.mxu0 %v3933
      %4053 = vmatprep.subr.mxu0 0.0
      %4054 = vmatpush1.msra.mxu0 %v3934
      %4055 = vmatprep.subr.mxu0 0.0
      %4056 = vmatpush1.msra.mxu0 %v3935
      %4057 = vmatprep.subr.mxu0 0.0
      %4058 = vmatpush1.msra.mxu0 0.0
      %4059 = vmatprep.subr.mxu0 0.0
      %4060 = vmatpush1.msra.mxu0 0.0
      %4061 = vmatprep.subr.mxu0 0.0
      %4062 = vmatpush1.msra.mxu0 0.0
      %4063 = vmatprep.subr.mxu0 0.0
      %4064 = vmatpush1.msra.mxu0 0.0
      %4065 = vmatprep.subr.mxu0 0.0
      %4066 = vmatpush1.msra.mxu0 0.0
      %4067 = vmatprep.subr.mxu0 0.0
      %4068 = vmatpush1.msra.mxu0 0.0
      %4069 = vmatprep.subr.mxu0 0.0
      %4070 = vmatpush1.msra.mxu0 0.0
      %4071 = vmatprep.subr.mxu0 0.0
      %4072 = vmatpush1.msra.mxu0 0.0
      %4073 = vmatprep.subr.mxu0 0.0
      %4074 = vmatpush1.msra.mxu0 0.0
      %4075 = vmatprep.subr.mxu0 0.0
      %4076 = vmatpush1.msra.mxu0 0.0
      %4077 = vmatprep.subr.mxu0 0.0
      %4078 = vmatpush1.msra.mxu0 0.0
      %4079 = vmatprep.subr.mxu0 0.0
      %4080 = vmatpush1.msra.mxu0 0.0
      %4081 = vmatprep.subr.mxu0 0.0
      %4082 = vmatpush1.msra.mxu0 0.0
      %4083 = vmatprep.subr.mxu0 0.0
      %4084 = vmatpush1.msra.mxu0 0.0
      %4085 = vmatprep.subr.mxu0 0.0
      %4086 = vmatpush1.msra.mxu0 0.0
      %4087 = vmatprep.subr.mxu0 0.0
      %4088 = vmatpush1.msra.mxu0 0.0
      %4089 = vmatprep.subr.mxu0 0.0
      %4090 = vmatpush1.msra.mxu0 0.0
      %4091 = vmatprep.subr.mxu0 0.0
      %4092 = vmatpush1.msra.mxu0 0.0
      %4093 = vmatprep.subr.mxu0 0.0
      %4094 = vmatpush1.msra.mxu0 0.0
      %4095 = vmatprep.subr.mxu0 0.0
      %4096 = vmatpush1.msra.mxu0 0.0
      %4097 = vmatprep.subr.mxu0 0.0
      %4098 = vmatpush1.msra.mxu0 0.0
      %4099 = vmatprep.subr.mxu0 0.0
      %4100 = vmatpush1.msra.mxu0 0.0
      %4101 = vmatprep.subr.mxu0 0.0
      %4102 = vmatpush1.msra.mxu0 0.0
      %4103 = vmatprep.mubr.f32.mxu0 0.0
      %4104 = vmatmul.mubr.f32.gmra.mrb[0].mxu0 %v3944
      %v4105 = vpop.f32.mrb[0].mxu0
      %v4106 = vadd.f32 %v3941, %v4105
      %v4107 = vpop.f32.mrb[0].mxu0
      %4108 = vmatprep.mubr.f32.mxu0 0.0
      %4109 = vmatmul.mubr.f32.gmra.mrb[0].mxu0 %v3947
      %v4110 = vpop.f32.mrb[0].mxu0
      %v4111 = vadd.f32 %v3941, %v4110
      %v4112 = vpop.f32.mrb[0].mxu0
      %4113 = vmatprep.mubr.f32.mxu0 0.0
      %4114 = vmatmul.mubr.f32.gmra.mrb[0].mxu0 %v3950
      %v4115 = vpop.f32.mrb[0].mxu0
      %v4116 = vadd.f32 %v3941, %v4115
      %v4117 = vpop.f32.mrb[0].mxu0
      %4118 = vmatprep.mubr.f32.mxu0 0.0
      %4119 = vmatmul.mubr.f32.gmra.mrb[0].mxu0 %v3953
      %v4120 = vpop.f32.mrb[0].mxu0
      %v4121 = vadd.f32 %v3941, %v4120
      %v4122 = vpop.f32.mrb[0].mxu0
      %4123 = vmatprep.mubr.f32.mxu0 0.0
      %4124 = vmatmul.mubr.f32.gmra.mrb[0].mxu0 %v3956
      %v4125 = vpop.f32.mrb[0].mxu0
      %v4126 = vadd.f32 %v3941, %v4125
      %v4127 = vpop.f32.mrb[0].mxu0
      %4128 = vmatprep.mubr.f32.mxu0 0.0
      %4129 = vmatmul.mubr.f32.gmra.mrb[0].mxu0 %v3959
      %v4130 = vpop.f32.mrb[0].mxu0
      %v4131 = vadd.f32 %v3941, %v4130
      %v4132 = vpop.f32.mrb[0].mxu0
      %4133 = vmatprep.mubr.f32.mxu0 0.0
      %4134 = vmatmul.mubr.f32.gmra.mrb[0].mxu0 %v3962
      %v4135 = vpop.f32.mrb[0].mxu0
      %v4136 = vadd.f32 %v3941, %v4135
      %v4137 = vpop.f32.mrb[0].mxu0
      %4138 = vmatprep.mubr.f32.mxu0 0.0
      %4139 = vmatmul.mubr.f32.gmra.mrb[0].mxu0 %v3965
      %v4140 = vpop.f32.mrb[0].mxu0
      %v4141 = vadd.f32 %v3941, %v4140
      %v4142 = vpop.f32.mrb[0].mxu0
      %4143 = vmatprep.mubr.f32.mxu0 0.0
      %4144 = vmatmul.mubr.f32.gmra.mrb[0].mxu0 %v3968
      %v4145 = vpop.f32.mrb[0].mxu0
      %v4146 = vadd.f32 %v3941, %v4145
      %v4147 = vpop.f32.mrb[0].mxu0
      %4148 = vmatprep.mubr.f32.mxu0 0.0
      %4149 = vmatmul.mubr.f32.gmra.mrb[0].mxu0 %v3971
      %v4150 = vpop.f32.mrb[0].mxu0
      %v4151 = vadd.f32 %v3941, %v4150
      %v4152 = vpop.f32.mrb[0].mxu0
      %4153 = vmatprep.mubr.f32.mxu0 0.0
      %4154 = vmatmul.mubr.f32.gmra.mrb[0].mxu0 %v3974
      %v4155 = vpop.f32.mrb[0].mxu0
      %v4156 = vadd.f32 %v3941, %v4155
      %v4157 = vpop.f32.mrb[0].mxu0
      %4158 = vmatprep.mubr.f32.mxu0 0.0
      %4159 = vmatmul.mubr.f32.gmra.mrb[0].mxu0 %v3977
      %v4160 = vpop.f32.mrb[0].mxu0
      %v4161 = vadd.f32 %v3941, %v4160
      %v4162 = vpop.f32.mrb[0].mxu0
      %4163 = vmatprep.mubr.f32.mxu0 0.0
      %4164 = vmatmul.mubr.f32.gmra.mrb[0].mxu0 %v3980
      %v4165 = vpop.f32.mrb[0].mxu0
      %v4166 = vadd.f32 %v3941, %v4165
      %v4167 = vpop.f32.mrb[0].mxu0
      %4168 = vmatprep.mubr.f32.mxu0 0.0
      %4169 = vmatmul.mubr.f32.gmra.mrb[0].mxu0 %v3983
      %v4170 = vpop.f32.mrb[0].mxu0
      %v4171 = vadd.f32 %v3941, %v4170
      %v4172 = vpop.f32.mrb[0].mxu0
      %4173 = vmatprep.mubr.f32.mxu0 0.0
      %4174 = vmatmul.mubr.f32.gmra.mrb[0].mxu0 %v3986
      %v4175 = vpop.f32.mrb[0].mxu0
      %v4176 = vadd.f32 %v3941, %v4175
      %v4177 = vpop.f32.mrb[0].mxu0
      %4178 = vmatprep.mubr.f32.mxu0 0.0
      %4179 = vmatmul.mubr.f32.gmra.mrb[0].mxu0 %v3989
      %v4180 = vpop.f32.mrb[0].mxu0
      %v4181 = vadd.f32 %v3941, %v4180
      %v4182 = vpop.f32.mrb[0].mxu0
      %4183 = vmatprep.mubr.f32.mxu0 0.0
      %4184 = vmatmul.mubr.f32.gmra.mrb[0].mxu0 %v3992
      %v4185 = vpop.f32.mrb[0].mxu0
      %v4186 = vadd.f32 %v3941, %v4185
      %v4187 = vpop.f32.mrb[0].mxu0
      %4188 = vmatprep.mubr.f32.mxu0 0.0
      %4189 = vmatmul.mubr.f32.gmra.mrb[0].mxu0 %v3995
      %v4190 = vpop.f32.mrb[0].mxu0
      %v4191 = vadd.f32 %v3941, %v4190
      %v4192 = vpop.f32.mrb[0].mxu0
      %4193 = vmatprep.mubr.f32.mxu0 0.0
      %4194 = vmatmul.mubr.f32.gmra.mrb[0].mxu0 %v3998
      %v4195 = vpop.f32.mrb[0].mxu0
      %v4196 = vadd.f32 %v3941, %v4195
      %v4197 = vpop.f32.mrb[0].mxu0
      %4198 = vmatprep.mubr.f32.mxu0 0.0
      %4199 = vmatmul.mubr.f32.gmra.mrb[0].mxu0 %v4001
      %v4200 = vpop.f32.mrb[0].mxu0
      %v4201 = vadd.f32 %v3941, %v4200
      %v4202 = vpop.f32.mrb[0].mxu0
      %4203 = vmatprep.mubr.f32.mxu0 0.0
      %4204 = vmatmul.mubr.f32.gmra.mrb[0].mxu0 %v4004
      %v4205 = vpop.f32.mrb[0].mxu0
      %v4206 = vadd.f32 %v3941, %v4205
      %v4207 = vpop.f32.mrb[0].mxu0
      %4208 = vmatprep.mubr.f32.mxu0 0.0
      %4209 = vmatmul.mubr.f32.gmra.mrb[0].mxu0 %v4007
      %v4210 = vpop.f32.mrb[0].mxu0
      %v4211 = vadd.f32 %v3941, %v4210
      %v4212 = vpop.f32.mrb[0].mxu0
      %4213 = vmatprep.mubr.f32.mxu0 0.0
      %4214 = vmatmul.mubr.f32.gmra.mrb[0].mxu0 %v4010
      %v4215 = vpop.f32.mrb[0].mxu0
      %v4216 = vadd.f32 %v3941, %v4215
      %v4217 = vpop.f32.mrb[0].mxu0
      %4218 = vmatprep.mubr.f32.mxu0 0.0
      %4219 = vmatmul.mubr.f32.gmra.mrb[0].mxu0 %v4013
      %v4220 = vpop.f32.mrb[0].mxu0
      %v4221 = vadd.f32 %v3941, %v4220
      %v4222 = vpop.f32.mrb[0].mxu0
      %4223 = vmatprep.mubr.f32.mxu0 0.0
      %4224 = vmatmul.mubr.f32.gmra.mrb[0].mxu0 %v4016
      %v4225 = vpop.f32.mrb[0].mxu0
      %v4226 = vadd.f32 %v3941, %v4225
      %v4227 = vpop.f32.mrb[0].mxu0
      %4228 = vmatprep.mubr.f32.mxu0 0.0
      %4229 = vmatmul.mubr.f32.gmra.mrb[0].mxu0 %v4019
      %v4230 = vpop.f32.mrb[0].mxu0
      %v4231 = vadd.f32 %v3941, %v4230
      %v4232 = vpop.f32.mrb[0].mxu0
      %4233 = vmatprep.mubr.f32.mxu0 0.0
      %4234 = vmatmul.mubr.f32.gmra.mrb[0].mxu0 %v4022
      %v4235 = vpop.f32.mrb[0].mxu0
      %v4236 = vadd.f32 %v3941, %v4235
      %v4237 = vpop.f32.mrb[0].mxu0
      %4238 = vmatprep.mubr.f32.mxu0 0.0
      %4239 = vmatmul.mubr.f32.gmra.mrb[0].mxu0 %v4025
      %v4240 = vpop.f32.mrb[0].mxu0
      %v4241 = vadd.f32 %v3941, %v4240
      %v4242 = vpop.f32.mrb[0].mxu0
      %4243 = vmatprep.mubr.f32.mxu0 0.0
      %4244 = vmatmul.mubr.f32.gmra.mrb[0].mxu0 %v4028
      %v4245 = vpop.f32.mrb[0].mxu0
      %v4246 = vadd.f32 %v3941, %v4245
      %v4247 = vpop.f32.mrb[0].mxu0
      %4248 = vmatprep.mubr.f32.mxu0 0.0
      %4249 = vmatmul.mubr.f32.gmra.mrb[0].mxu0 %v4031
      %v4250 = vpop.f32.mrb[0].mxu0
      %v4251 = vadd.f32 %v3941, %v4250
      %v4252 = vpop.f32.mrb[0].mxu0
      %4253 = vmatprep.mubr.f32.mxu0 0.0
      %4254 = vmatmul.mubr.f32.gmra.mrb[0].mxu0 %v4034
      %v4255 = vpop.f32.mrb[0].mxu0
      %v4256 = vadd.f32 %v3941, %v4255
      %v4257 = vpop.f32.mrb[0].mxu0
      %4258 = vmatprep.mubr.f32.mxu0 0.0
      %4259 = vmatmul.mubr.f32.gmra.mrb[0].mxu0 %v4037
      %v4260 = vpop.f32.mrb[0].mxu0
      %v4261 = vadd.f32 %v3941, %v4260
      %v4262 = vpop.f32.mrb[0].mxu0
      %4263 = vdwg.mxu0
      %v4264 = vld [vmem:[%s346 + $0x1] sm:$0xff]
      %v4265 = vld [vmem:[%s346 + $0x9] sm:$0xff]
      %v4266 = vld [vmem:[%s346 + $0x19] sm:$0xff]
      %v4267 = vld [vmem:[%s346 + $0x21] sm:$0xff]
      %v4268 = vld [vmem:[%s346 + $0x31] sm:$0xff]
      %v4269 = vld [vmem:[%s346 + $0x39] sm:$0xff]
      %v4270 = vld [vmem:[%s346 + $0x49] sm:$0xff]
      %v4271 = vld [vmem:[%s346 + $0x51] sm:$0xff]
      %v4272 = vld [vmem:[%s346 + $0x61] sm:$0xff]
      %v4273 = vld [vmem:[%s346 + $0x69] sm:$0xff]
      %v4274 = vld [vmem:[%s346 + $0x79] sm:$0xff]
      %v4275 = vld [vmem:[%s346 + $0x81] sm:$0xff]
      %v4276 = vld [vmem:[%s346 + $0x91] sm:$0xff]
      %v4277 = vld [vmem:[%s346 + $0x99] sm:$0xff]
      %v4278 = vld [vmem:[%s346 + $0xa9] sm:$0xff]
      %v4279 = vld [vmem:[%s346 + $0xb1] sm:$0xff]
      %v4280 = vld [vmem:[%s346 + $0xc1] sm:$0xff]
      %v4281 = vld [vmem:[%s346 + $0xc9] sm:$0xff]
      %v4282 = vld [vmem:[%s346 + $0xd9] sm:$0xff]
      %v4283 = vld [vmem:[%s346 + $0xe1] sm:$0xff]
      %v4284 = vld [vmem:[%s346 + $0xf1] sm:$0xff]
      %v4285 = vld [vmem:[%s346 + $0xf9] sm:$0xff]
      %v4286 = vld [vmem:[%s346 + $0x109] sm:$0xff]
      %v4287 = vld [vmem:[%s346 + $0x111] sm:$0xff]
      %v4288 = vld [vmem:[%s346 + $0x121] sm:$0xff]
      %v4289 = vld [vmem:[%s346 + $0x129] sm:$0xff]
      %v4290 = vld [vmem:[%s346 + $0x139] sm:$0xff]
      %v4291 = vld [vmem:[%s346 + $0x141] sm:$0xff]
      %v4292 = vld [vmem:[%s346 + $0x151] sm:$0xff]
      %v4293 = vld [vmem:[%s346 + $0x159] sm:$0xff]
      %v4294 = vld [vmem:[%s346 + $0x169] sm:$0xff]
      %v4295 = vld [vmem:[%s346 + $0x171] sm:$0xff]
      %v4296 = vadd.f32 %v4264, %v4106
      %v4297 = vadd.f32 %v4265, %v4111
      %v4298 = vadd.f32 %v4266, %v4116
      %v4299 = vadd.f32 %v4267, %v4121
      %v4300 = vadd.f32 %v4268, %v4126
      %v4301 = vadd.f32 %v4269, %v4131
      %v4302 = vadd.f32 %v4270, %v4136
      %v4303 = vadd.f32 %v4271, %v4141
      %v4304 = vadd.f32 %v4272, %v4146
      %v4305 = vadd.f32 %v4273, %v4151
      %v4306 = vadd.f32 %v4274, %v4156
      %v4307 = vadd.f32 %v4275, %v4161
      %v4308 = vadd.f32 %v4276, %v4166
      %v4309 = vadd.f32 %v4277, %v4171
      %v4310 = vadd.f32 %v4278, %v4176
      %v4311 = vadd.f32 %v4279, %v4181
      %v4312 = vadd.f32 %v4280, %v4186
      %v4313 = vadd.f32 %v4281, %v4191
      %v4314 = vadd.f32 %v4282, %v4196
      %v4315 = vadd.f32 %v4283, %v4201
      %v4316 = vadd.f32 %v4284, %v4206
      %v4317 = vadd.f32 %v4285, %v4211
      %v4318 = vadd.f32 %v4286, %v4216
      %v4319 = vadd.f32 %v4287, %v4221
      %v4320 = vadd.f32 %v4288, %v4226
      %v4321 = vadd.f32 %v4289, %v4231
      %v4322 = vadd.f32 %v4290, %v4236
      %v4323 = vadd.f32 %v4291, %v4241
      %v4324 = vadd.f32 %v4292, %v4246
      %v4325 = vadd.f32 %v4293, %v4251
      %v4326 = vadd.f32 %v4294, %v4256
      %v4327 = vadd.f32 %v4295, %v4261
      %4328 = vst.msk [vmem:[%s224] sm:$0xff] %vm225, %v4296
      %4329 = vst.msk [vmem:[%s224 + $0x8] sm:$0xff] %vm225, %v4297
      %4330 = vst.msk [vmem:[%s224 + $0x10] sm:$0xff] %vm225, %v4298
      %4331 = vst.msk [vmem:[%s224 + $0x18] sm:$0xff] %vm225, %v4299
      %4332 = vst.msk [vmem:[%s224 + $0x20] sm:$0xff] %vm225, %v4300
      %4333 = vst.msk [vmem:[%s224 + $0x28] sm:$0xff] %vm225, %v4301
      %4334 = vst.msk [vmem:[%s224 + $0x30] sm:$0xff] %vm225, %v4302
      %4335 = vst.msk [vmem:[%s224 + $0x38] sm:$0xff] %vm225, %v4303
      %4336 = vst.msk [vmem:[%s224 + $0x40] sm:$0xff] %vm225, %v4304
      %4337 = vst.msk [vmem:[%s224 + $0x48] sm:$0xff] %vm225, %v4305
      %4338 = vst.msk [vmem:[%s224 + $0x50] sm:$0xff] %vm225, %v4306
      %4339 = vst.msk [vmem:[%s224 + $0x58] sm:$0xff] %vm225, %v4307
      %4340 = vst.msk [vmem:[%s224 + $0x60] sm:$0xff] %vm225, %v4308
      %4341 = vst.msk [vmem:[%s224 + $0x68] sm:$0xff] %vm225, %v4309
      %4342 = vst.msk [vmem:[%s224 + $0x70] sm:$0xff] %vm225, %v4310
      %4343 = vst.msk [vmem:[%s224 + $0x78] sm:$0xff] %vm225, %v4311
      %4344 = vst.msk [vmem:[%s224 + $0x80] sm:$0xff] %vm225, %v4312
      %4345 = vst.msk [vmem:[%s224 + $0x88] sm:$0xff] %vm225, %v4313
      %4346 = vst.msk [vmem:[%s224 + $0x90] sm:$0xff] %vm225, %v4314
      %4347 = vst.msk [vmem:[%s224 + $0x98] sm:$0xff] %vm225, %v4315
      %4348 = vst.msk [vmem:[%s224 + $0xa0] sm:$0xff] %vm225, %v4316
      %4349 = vst.msk [vmem:[%s224 + $0xa8] sm:$0xff] %vm225, %v4317
      %4350 = vst.msk [vmem:[%s224 + $0xb0] sm:$0xff] %vm225, %v4318
      %4351 = vst.msk [vmem:[%s224 + $0xb8] sm:$0xff] %vm225, %v4319
      %4352 = vst.msk [vmem:[%s224 + $0xc0] sm:$0xff] %vm225, %v4320
      %4353 = vst.msk [vmem:[%s224 + $0xc8] sm:$0xff] %vm225, %v4321
      %4354 = vst.msk [vmem:[%s224 + $0xd0] sm:$0xff] %vm225, %v4322
      %4355 = vst.msk [vmem:[%s224 + $0xd8] sm:$0xff] %vm225, %v4323
      %4356 = vst.msk [vmem:[%s224 + $0xe0] sm:$0xff] %vm225, %v4324
      %4357 = vst.msk [vmem:[%s224 + $0xe8] sm:$0xff] %vm225, %v4325
      %4358 = vst.msk [vmem:[%s224 + $0xf0] sm:$0xff] %vm225, %v4326
      %4359 = vst.msk [vmem:[%s224 + $0xf8] sm:$0xff] %vm225, %v4327
      %p4360 = scmp.lt.s32.totalorder %s16, 1
      %s4361 = scalar_select %p4360, %s16, 1
      %s4362 = smul.addr %s4361, 32
      %s4363 = smul.addr %s4362, 8
      %s4364 = scalar_lea.vmem %s5, %s4363
      // Predicated region
      $region41: #{tpu_custom_call.1} parent=39 // pred_check
        %p4365 = pneg %p144
      $region42: #{tpu_custom_call.1} parent=39 // pred_check_branch
        %4367 = sbr.rel (%p4365) target = $region44
      $region43: #{tpu_custom_call.1} parent=39 // pred_region
        _
      $region44: #{tpu_custom_call.1} parent=39 // pred_fallthru
        _
    $region40: #{tpu_custom_call.1} parent=5 // pred_fallthru
      _
    %p4368 = scmp.le.s32.totalorder 2, %s11
    // Predicated region
    $region45: #{tpu_custom_call.1} parent=5 // pred_check
      %p4369 = pneg %p4368
    $region46: #{tpu_custom_call.1} parent=5 // pred_check_branch
      %4371 = sbr.rel (%p4369) target = $region48
    $region47: #{tpu_custom_call.1} parent=5 // pred_region
      %s4372 = ssub.s32 %s11, 2
      // Predicated region
      $region49: #{tpu_custom_call.1} parent=47 // pred_check
        %p4373 = pneg %p150
      $region50: #{tpu_custom_call.1} parent=47 // pred_check_branch
        %4375 = sbr.rel (%p4373) target = $region52
      $region51: #{tpu_custom_call.1} parent=47 // pred_region
        %p4376 = scmp.lt.s32.totalorder %s17, 1
        %s4377 = scalar_select %p4376, %s17, 1
        %s4378 = smul.addr %s4377, 32
        %s4379 = smul.addr %s4378, 8
        %s4380 = scalar_lea.vmem %s5, %s4379
      $region52: #{tpu_custom_call.1} parent=47 // pred_fallthru
        _
    $region48: #{tpu_custom_call.1} parent=5 // pred_fallthru
      _
  $region6: #{tpu_custom_call.1} parent=0 // loop_footer
    %s15 = sadd.s32 1, %s11
  $region7: #{tpu_custom_call.1} parent=0 // loop_footer_branch
    %10 = sbr.rel target = $region3
  $region8: #{tpu_custom_call.1} parent=0 // loop_exit
    _

</llo_original>
